<compile_context>
chip_gen: v6e
topology: v6e:2x2x1
jax: 0.10.0
libtpu: 0.0.40
codegen_flags: <defaults>
</compile_context>

<pallas_src>
import functools

import jax
import jax.numpy as jnp
from jax.experimental import pallas as pl
from jax.experimental.pallas import tpu as pltpu

EPS = 1e-5          # torch.nn.BatchNorm1d default eps
MOMENTUM = 0.99     # BYOL target-network EMA momentum


def _vmem_spec():
    # Whole-array block resident in VMEM (all operands here are small).
    return pl.BlockSpec(memory_space=pltpu.MemorySpace.VMEM)


# --------------------------- in-kernel helpers ------------------------------ #

def _linear(x, w, b):
    # y = x @ W + b   (W stored (in, out), equivalent to torch's x @ W.T)
    return jnp.dot(x, w, preferred_element_type=jnp.float32) + b


def _bn_relu_per_view(h, gamma, beta, *, rows_per_view, n_views):
    # BatchNorm1d (training-mode batch stats) + ReLU.  Statistics are computed
    # independently for each view segment of the concatenated batch so results
    # match two separate MLP calls in the PyTorch forward.
    outs = []
    for v in range(n_views):
        hv = h[v * rows_per_view:(v + 1) * rows_per_view]        # static, tile-aligned
        mean = jnp.mean(hv, axis=0, keepdims=True)
        msq = jnp.mean(hv * hv, axis=0, keepdims=True)
        var = jnp.maximum(msq - mean * mean, 0.0)                 # single-pass variance
        hn = (hv - mean) * jax.lax.rsqrt(var + EPS)
        outs.append(jnp.maximum(hn * gamma + beta, 0.0))
    return outs[0] if n_views == 1 else jnp.concatenate(outs, axis=0)


# ------------------------------- kernels ------------------------------------ #

def online_branch_kernel(x_ref,
                         ew_ref, eb_ref,
                         pw1_ref, pb1_ref, pg_ref, pbt_ref, pw2_ref, pb2_ref,
                         qw1_ref, qb1_ref, qg_ref, qbt_ref, qw2_ref, qb2_ref,
                         p_ref, *, rows_per_view, n_views):
    # encoder (linear backbone stand-in)
    y = _linear(x_ref[...], ew_ref[...], eb_ref[...])
    # projector MLP: Linear -> BN -> ReLU -> Linear
    h = _linear(y, pw1_ref[...], pb1_ref[...])
    h = _bn_relu_per_view(h, pg_ref[...], pbt_ref[...],
                          rows_per_view=rows_per_view, n_views=n_views)
    z = _linear(h, pw2_ref[...], pb2_ref[...])
    # predictor MLP: Linear -> BN -> ReLU -> Linear
    h2 = _linear(z, qw1_ref[...], qb1_ref[...])
    h2 = _bn_relu_per_view(h2, qg_ref[...], qbt_ref[...],
                           rows_per_view=rows_per_view, n_views=n_views)
    p_ref[...] = _linear(h2, qw2_ref[...], qb2_ref[...])


def target_branch_kernel(x_ref,
                         oew_ref, oeb_ref,
                         opw1_ref, opb1_ref, opg_ref, opbt_ref, opw2_ref, opb2_ref,
                         tew_ref, teb_ref,
                         tpw1_ref, tpb1_ref, tpg_ref, tpbt_ref, tpw2_ref, tpb2_ref,
                         z_ref,
                         new_ew_ref, new_eb_ref,
                         new_pw1_ref, new_pb1_ref, new_pg_ref, new_pbt_ref,
                         new_pw2_ref, new_pb2_ref,
                         *, rows_per_view, n_views, momentum):
    # EMA momentum update fused on the VPU; updated target params are written
    # out and also used for this step's target forward (matches PyTorch:
    # _update_target_network() runs before the target encoder/projector).
    def blend(t_ref, o_ref, out_ref):
        v = t_ref[...] * momentum + o_ref[...] * (1.0 - momentum)
        out_ref[...] = v
        return v

    ew = blend(tew_ref, oew_ref, new_ew_ref)
    eb = blend(teb_ref, oeb_ref, new_eb_ref)
    pw1 = blend(tpw1_ref, opw1_ref, new_pw1_ref)
    pb1 = blend(tpb1_ref, opb1_ref, new_pb1_ref)
    pg = blend(tpg_ref, opg_ref, new_pg_ref)
    pbt = blend(tpbt_ref, opbt_ref, new_pbt_ref)
    pw2 = blend(tpw2_ref, opw2_ref, new_pw2_ref)
    pb2 = blend(tpb2_ref, opb2_ref, new_pb2_ref)

    # target encoder + projector, all intermediates in VMEM
    y = _linear(x_ref[...], ew, eb)
    h = _linear(y, pw1, pb1)
    h = _bn_relu_per_view(h, pg, pbt, rows_per_view=rows_per_view, n_views=n_views)
    z_ref[...] = _linear(h, pw2, pb2)


# ------------------------------- wrappers ------------------------------------ #

def pallas_online_branch(xf, enc, proj, pred, *, rows_per_view):
    n_views = xf.shape[0] // rows_per_view
    P = pred["w2"].shape[1]
    kernel = functools.partial(online_branch_kernel,
                               rows_per_view=rows_per_view, n_views=n_views)
    return pl.pallas_call(
        kernel,
        out_shape=jax.ShapeDtypeStruct((xf.shape[0], P), jnp.float32),
        in_specs=[_vmem_spec()] * 15,
        out_specs=_vmem_spec(),
    )(xf, enc["w"], enc["b"],
      proj["w1"], proj["b1"], proj["gamma"], proj["beta"], proj["w2"], proj["b2"],
      pred["w1"], pred["b1"], pred["gamma"], pred["beta"], pred["w2"], pred["b2"])


def pallas_target_branch(xf, online_enc, online_proj, target_enc, target_proj,
                         *, momentum, rows_per_view):
    n_views = xf.shape[0] // rows_per_view
    Z = online_proj["w2"].shape[1]
    kernel = functools.partial(target_branch_kernel,
                               rows_per_view=rows_per_view, n_views=n_views,
                               momentum=float(momentum))
    out_shape = (
        jax.ShapeDtypeStruct((xf.shape[0], Z), jnp.float32),        # target z
        jax.ShapeDtypeStruct(target_enc["w"].shape, jnp.float32),   # new target params
        jax.ShapeDtypeStruct(target_enc["b"].shape, jnp.float32),
        jax.ShapeDtypeStruct(target_proj["w1"].shape, jnp.float32),
        jax.ShapeDtypeStruct(target_proj["b1"].shape, jnp.float32),
        jax.ShapeDtypeStruct(target_proj["gamma"].shape, jnp.float32),
        jax.ShapeDtypeStruct(target_proj["beta"].shape, jnp.float32),
        jax.ShapeDtypeStruct(target_proj["w2"].shape, jnp.float32),
        jax.ShapeDtypeStruct(target_proj["b2"].shape, jnp.float32),
    )
    outs = pl.pallas_call(
        kernel,
        out_shape=out_shape,
        in_specs=[_vmem_spec()] * 17,
        out_specs=tuple(_vmem_spec() for _ in out_shape),
    )(xf,
      online_enc["w"], online_enc["b"],
      online_proj["w1"], online_proj["b1"], online_proj["gamma"],
      online_proj["beta"], online_proj["w2"], online_proj["b2"],
      target_enc["w"], target_enc["b"],
      target_proj["w1"], target_proj["b1"], target_proj["gamma"],
      target_proj["beta"], target_proj["w2"], target_proj["b2"])
    z = outs[0]
    new_enc = {"w": outs[1], "b": outs[2]}
    new_proj = {"w1": outs[3], "b1": outs[4], "gamma": outs[5], "beta": outs[6],
                "w2": outs[7], "b2": outs[8]}
    return z, new_enc, new_proj


# ------------------------------- params -------------------------------------- #

def init_linear(key, din, dout, scale=0.02):
    kw, kb = jax.random.split(key)
    return {
        "w": jax.random.normal(kw, (din, dout), jnp.float32) * scale,
        "b": jax.random.normal(kb, (1, dout), jnp.float32) * scale,
    }


def init_mlp(key, din, dh, dout):
    k1, k2 = jax.random.split(key)
    l1 = init_linear(k1, din, dh)
    l2 = init_linear(k2, dh, dout)
    return {
        "w1": l1["w"], "b1": l1["b"],
        "gamma": jnp.ones((1, dh), jnp.float32),     # BN default affine init
        "beta": jnp.zeros((1, dh), jnp.float32),
        "w2": l2["w"], "b2": l2["b"],
    }


# ----------------------------- BYOL forward ----------------------------------- #

def byol_forward(params, x1, x2, momentum=MOMENTUM):
    B = x1.shape[0]
    # Concatenate the two views into one batch: one launch per branch, weights
    # loaded once, double MXU row occupancy.  BN stats stay per-view in-kernel.
    xf = jnp.concatenate([x1.reshape(B, -1), x2.reshape(B, -1)], axis=0)   # (2B, Din)

    # ---- online branch: encoder -> projector -> predictor, one kernel ----
    p = pallas_online_branch(xf, params["online_enc"], params["online_proj"],
                             params["online_pred"], rows_per_view=B)
    online_p1, online_p2 = p[:B], p[B:]

    # ---- target branch: fused EMA update + encoder -> projector, one kernel ----
    z, new_target_enc, new_target_proj = pallas_target_branch(
        xf, params["online_enc"], params["online_proj"],
        params["target_enc"], params["target_proj"],
        momentum=momentum, rows_per_view=B)
    target_z1 = jax.lax.stop_gradient(z[:B])
    target_z2 = jax.lax.stop_gradient(z[B:])

    # return the updated target network so the momentum update is not discarded
    new_params = dict(params)
    new_params["target_enc"] = jax.tree_util.tree_map(jax.lax.stop_gradient, new_target_enc)
    new_params["target_proj"] = jax.tree_util.tree_map(jax.lax.stop_gradient, new_target_proj)

    return (online_p1, online_p2), (target_z1, target_z2), new_params


# --------------------------------- main ---------------------------------------- #

if __name__ == "__main__":
    key = jax.random.PRNGKey(0)
    B, C, H, W = 8, 4, 16, 16                 # small NCHW inputs, Din = 1024
    backbone_in_features = 128                # multiples of 128 -> lane-dense outputs
    projection_hidden, projection_size = 128, 128
    prediction_hidden, prediction_size = 128, 128

    k_enc, k_proj, k_pred, kx1, kx2 = jax.random.split(key, 5)

    online_enc = init_linear(k_enc, C * H * W, backbone_in_features)
    online_proj = init_mlp(k_proj, backbone_in_features, projection_hidden, projection_size)
    online_pred = init_mlp(k_pred, projection_size, prediction_hidden, prediction_size)

    params = {
        "online_enc": online_enc,
        "online_proj": online_proj,
        "online_pred": online_pred,
        # deepcopy of the online nets, as in BYOL.__init__
        "target_enc": jax.tree_util.tree_map(jnp.copy, online_enc),
        "target_proj": jax.tree_util.tree_map(jnp.copy, online_proj),
    }

    x1 = jax.random.normal(kx1, (B, C, H, W), jnp.float32)
    x2 = jax.random.normal(kx2, (B, C, H, W), jnp.float32)

    fwd = jax.jit(byol_forward)
    (p1, p2), (tz1, tz2), new_params = fwd(params, x1, x2)
    jax.block_until_ready((p1, p2, tz1, tz2, new_params))

    assert p1.shape == (B, prediction_size) and p2.shape == (B, prediction_size)
    assert tz1.shape == (B, projection_size) and tz2.shape == (B, projection_size)
    assert new_params["target_enc"]["w"].shape == online_enc["w"].shape
    assert jnp.all(jnp.isfinite(p1)) and jnp.all(jnp.isfinite(p2))
    assert jnp.all(jnp.isfinite(tz1)) and jnp.all(jnp.isfinite(tz2))
    assert jnp.all(jnp.isfinite(new_params["target_proj"]["w1"]))
    print("KERNEL_OK")
</pallas_src>

<mosaic_0001>
module attributes {stable_mosaic.version = 11 : i64} {
  func.func @target_branch_kernel(%arg0: memref<16x1024xf32, #tpu.memory_space<vmem>>, %arg1: memref<1024x128xf32, #tpu.memory_space<vmem>>, %arg2: memref<1x128xf32, #tpu.memory_space<vmem>>, %arg3: memref<128x128xf32, #tpu.memory_space<vmem>>, %arg4: memref<1x128xf32, #tpu.memory_space<vmem>>, %arg5: memref<1x128xf32, #tpu.memory_space<vmem>>, %arg6: memref<1x128xf32, #tpu.memory_space<vmem>>, %arg7: memref<128x128xf32, #tpu.memory_space<vmem>>, %arg8: memref<1x128xf32, #tpu.memory_space<vmem>>, %arg9: memref<1024x128xf32, #tpu.memory_space<vmem>>, %arg10: memref<1x128xf32, #tpu.memory_space<vmem>>, %arg11: memref<128x128xf32, #tpu.memory_space<vmem>>, %arg12: memref<1x128xf32, #tpu.memory_space<vmem>>, %arg13: memref<1x128xf32, #tpu.memory_space<vmem>>, %arg14: memref<1x128xf32, #tpu.memory_space<vmem>>, %arg15: memref<128x128xf32, #tpu.memory_space<vmem>>, %arg16: memref<1x128xf32, #tpu.memory_space<vmem>>, %arg17: memref<16x128xf32, #tpu.memory_space<vmem>>, %arg18: memref<1024x128xf32, #tpu.memory_space<vmem>>, %arg19: memref<1x128xf32, #tpu.memory_space<vmem>>, %arg20: memref<128x128xf32, #tpu.memory_space<vmem>>, %arg21: memref<1x128xf32, #tpu.memory_space<vmem>>, %arg22: memref<1x128xf32, #tpu.memory_space<vmem>>, %arg23: memref<1x128xf32, #tpu.memory_space<vmem>>, %arg24: memref<128x128xf32, #tpu.memory_space<vmem>>, %arg25: memref<1x128xf32, #tpu.memory_space<vmem>>) attributes {dimension_semantics = [], scalar_prefetch = 0 : i64, scratch_operands = 0 : i64, tpu.core_type = #tpu.core_type<tc>} {
    %c0 = arith.constant 0 : index
    %c0_0 = arith.constant 0 : index
    %0 = vector.load %arg9[%c0, %c0_0] : memref<1024x128xf32, #tpu.memory_space<vmem>>, vector<1024x128xf32>
    %cst = arith.constant 9.900000e-01 : f32
    %1 = vector.broadcast %cst : f32 to vector<1024x128xf32>
    %2 = arith.mulf %0, %1 : vector<1024x128xf32>
    %c0_1 = arith.constant 0 : index
    %c0_2 = arith.constant 0 : index
    %3 = vector.load %arg1[%c0_1, %c0_2] : memref<1024x128xf32, #tpu.memory_space<vmem>>, vector<1024x128xf32>
    %cst_3 = arith.constant 0.00999999977 : f32
    %4 = vector.broadcast %cst_3 : f32 to vector<1024x128xf32>
    %5 = arith.mulf %3, %4 : vector<1024x128xf32>
    %6 = arith.addf %2, %5 : vector<1024x128xf32>
    %c0_4 = arith.constant 0 : index
    %c0_5 = arith.constant 0 : index
    %7 = vector.load %arg18[%c0_4, %c0_5] : memref<1024x128xf32, #tpu.memory_space<vmem>>, vector<1024x128xf32>
    tpu.vector_store %arg18[%c0_4, %c0_5], %6 {strides = array<i32>} : memref<1024x128xf32, #tpu.memory_space<vmem>>, vector<1024x128xf32>,
    %c0_6 = arith.constant 0 : index
    %c0_7 = arith.constant 0 : index
    %8 = vector.load %arg10[%c0_6, %c0_7] : memref<1x128xf32, #tpu.memory_space<vmem>>, vector<1x128xf32>
    %cst_8 = arith.constant 9.900000e-01 : f32
    %9 = vector.broadcast %cst_8 : f32 to vector<1x128xf32>
    %10 = arith.mulf %8, %9 : vector<1x128xf32>
    %c0_9 = arith.constant 0 : index
    %c0_10 = arith.constant 0 : index
    %11 = vector.load %arg2[%c0_9, %c0_10] : memref<1x128xf32, #tpu.memory_space<vmem>>, vector<1x128xf32>
    %cst_11 = arith.constant 0.00999999977 : f32
    %12 = vector.broadcast %cst_11 : f32 to vector<1x128xf32>
    %13 = arith.mulf %11, %12 : vector<1x128xf32>
    %14 = arith.addf %10, %13 : vector<1x128xf32>
    %c0_12 = arith.constant 0 : index
    %c0_13 = arith.constant 0 : index
    %15 = vector.load %arg19[%c0_12, %c0_13] : memref<1x128xf32, #tpu.memory_space<vmem>>, vector<1x128xf32>
    tpu.vector_store %arg19[%c0_12, %c0_13], %14 {strides = array<i32>} : memref<1x128xf32, #tpu.memory_space<vmem>>, vector<1x128xf32>,
    %c0_14 = arith.constant 0 : index
    %c0_15 = arith.constant 0 : index
    %16 = vector.load %arg11[%c0_14, %c0_15] : memref<128x128xf32, #tpu.memory_space<vmem>>, vector<128x128xf32>
    %cst_16 = arith.constant 9.900000e-01 : f32
    %17 = vector.broadcast %cst_16 : f32 to vector<128x128xf32>
    %18 = arith.mulf %16, %17 : vector<128x128xf32>
    %c0_17 = arith.constant 0 : index
    %c0_18 = arith.constant 0 : index
    %19 = vector.load %arg3[%c0_17, %c0_18] : memref<128x128xf32, #tpu.memory_space<vmem>>, vector<128x128xf32>
    %cst_19 = arith.constant 0.00999999977 : f32
    %20 = vector.broadcast %cst_19 : f32 to vector<128x128xf32>
    %21 = arith.mulf %19, %20 : vector<128x128xf32>
    %22 = arith.addf %18, %21 : vector<128x128xf32>
    %c0_20 = arith.constant 0 : index
    %c0_21 = arith.constant 0 : index
    %23 = vector.load %arg20[%c0_20, %c0_21] : memref<128x128xf32, #tpu.memory_space<vmem>>, vector<128x128xf32>
    tpu.vector_store %arg20[%c0_20, %c0_21], %22 {strides = array<i32>} : memref<128x128xf32, #tpu.memory_space<vmem>>, vector<128x128xf32>,
    %c0_22 = arith.constant 0 : index
    %c0_23 = arith.constant 0 : index
    %24 = vector.load %arg12[%c0_22, %c0_23] : memref<1x128xf32, #tpu.memory_space<vmem>>, vector<1x128xf32>
    %cst_24 = arith.constant 9.900000e-01 : f32
    %25 = vector.broadcast %cst_24 : f32 to vector<1x128xf32>
    %26 = arith.mulf %24, %25 : vector<1x128xf32>
    %c0_25 = arith.constant 0 : index
    %c0_26 = arith.constant 0 : index
    %27 = vector.load %arg4[%c0_25, %c0_26] : memref<1x128xf32, #tpu.memory_space<vmem>>, vector<1x128xf32>
    %cst_27 = arith.constant 0.00999999977 : f32
    %28 = vector.broadcast %cst_27 : f32 to vector<1x128xf32>
    %29 = arith.mulf %27, %28 : vector<1x128xf32>
    %30 = arith.addf %26, %29 : vector<1x128xf32>
    %c0_28 = arith.constant 0 : index
    %c0_29 = arith.constant 0 : index
    %31 = vector.load %arg21[%c0_28, %c0_29] : memref<1x128xf32, #tpu.memory_space<vmem>>, vector<1x128xf32>
    tpu.vector_store %arg21[%c0_28, %c0_29], %30 {strides = array<i32>} : memref<1x128xf32, #tpu.memory_space<vmem>>, vector<1x128xf32>,
    %c0_30 = arith.constant 0 : index
    %c0_31 = arith.constant 0 : index
    %32 = vector.load %arg13[%c0_30, %c0_31] : memref<1x128xf32, #tpu.memory_space<vmem>>, vector<1x128xf32>
    %cst_32 = arith.constant 9.900000e-01 : f32
    %33 = vector.broadcast %cst_32 : f32 to vector<1x128xf32>
    %34 = arith.mulf %32, %33 : vector<1x128xf32>
    %c0_33 = arith.constant 0 : index
    %c0_34 = arith.constant 0 : index
    %35 = vector.load %arg5[%c0_33, %c0_34] : memref<1x128xf32, #tpu.memory_space<vmem>>, vector<1x128xf32>
    %cst_35 = arith.constant 0.00999999977 : f32
    %36 = vector.broadcast %cst_35 : f32 to vector<1x128xf32>
    %37 = arith.mulf %35, %36 : vector<1x128xf32>
    %38 = arith.addf %34, %37 : vector<1x128xf32>
    %c0_36 = arith.constant 0 : index
    %c0_37 = arith.constant 0 : index
    %39 = vector.load %arg22[%c0_36, %c0_37] : memref<1x128xf32, #tpu.memory_space<vmem>>, vector<1x128xf32>
    tpu.vector_store %arg22[%c0_36, %c0_37], %38 {strides = array<i32>} : memref<1x128xf32, #tpu.memory_space<vmem>>, vector<1x128xf32>,
    %c0_38 = arith.constant 0 : index
    %c0_39 = arith.constant 0 : index
    %40 = vector.load %arg14[%c0_38, %c0_39] : memref<1x128xf32, #tpu.memory_space<vmem>>, vector<1x128xf32>
    %cst_40 = arith.constant 9.900000e-01 : f32
    %41 = vector.broadcast %cst_40 : f32 to vector<1x128xf32>
    %42 = arith.mulf %40, %41 : vector<1x128xf32>
    %c0_41 = arith.constant 0 : index
    %c0_42 = arith.constant 0 : index
    %43 = vector.load %arg6[%c0_41, %c0_42] : memref<1x128xf32, #tpu.memory_space<vmem>>, vector<1x128xf32>
    %cst_43 = arith.constant 0.00999999977 : f32
    %44 = vector.broadcast %cst_43 : f32 to vector<1x128xf32>
    %45 = arith.mulf %43, %44 : vector<1x128xf32>
    %46 = arith.addf %42, %45 : vector<1x128xf32>
    %c0_44 = arith.constant 0 : index
    %c0_45 = arith.constant 0 : index
    %47 = vector.load %arg23[%c0_44, %c0_45] : memref<1x128xf32, #tpu.memory_space<vmem>>, vector<1x128xf32>
    tpu.vector_store %arg23[%c0_44, %c0_45], %46 {strides = array<i32>} : memref<1x128xf32, #tpu.memory_space<vmem>>, vector<1x128xf32>,
    %c0_46 = arith.constant 0 : index
    %c0_47 = arith.constant 0 : index
    %48 = vector.load %arg15[%c0_46, %c0_47] : memref<128x128xf32, #tpu.memory_space<vmem>>, vector<128x128xf32>
    %cst_48 = arith.constant 9.900000e-01 : f32
    %49 = vector.broadcast %cst_48 : f32 to vector<128x128xf32>
    %50 = arith.mulf %48, %49 : vector<128x128xf32>
    %c0_49 = arith.constant 0 : index
    %c0_50 = arith.constant 0 : index
    %51 = vector.load %arg7[%c0_49, %c0_50] : memref<128x128xf32, #tpu.memory_space<vmem>>, vector<128x128xf32>
    %cst_51 = arith.constant 0.00999999977 : f32
    %52 = vector.broadcast %cst_51 : f32 to vector<128x128xf32>
    %53 = arith.mulf %51, %52 : vector<128x128xf32>
    %54 = arith.addf %50, %53 : vector<128x128xf32>
    %c0_52 = arith.constant 0 : index
    %c0_53 = arith.constant 0 : index
    %55 = vector.load %arg24[%c0_52, %c0_53] : memref<128x128xf32, #tpu.memory_space<vmem>>, vector<128x128xf32>
    tpu.vector_store %arg24[%c0_52, %c0_53], %54 {strides = array<i32>} : memref<128x128xf32, #tpu.memory_space<vmem>>, vector<128x128xf32>,
    %c0_54 = arith.constant 0 : index
    %c0_55 = arith.constant 0 : index
    %56 = vector.load %arg16[%c0_54, %c0_55] : memref<1x128xf32, #tpu.memory_space<vmem>>, vector<1x128xf32>
    %cst_56 = arith.constant 9.900000e-01 : f32
    %57 = vector.broadcast %cst_56 : f32 to vector<1x128xf32>
    %58 = arith.mulf %56, %57 : vector<1x128xf32>
    %c0_57 = arith.constant 0 : index
    %c0_58 = arith.constant 0 : index
    %59 = vector.load %arg8[%c0_57, %c0_58] : memref<1x128xf32, #tpu.memory_space<vmem>>, vector<1x128xf32>
    %cst_59 = arith.constant 0.00999999977 : f32
    %60 = vector.broadcast %cst_59 : f32 to vector<1x128xf32>
    %61 = arith.mulf %59, %60 : vector<1x128xf32>
    %62 = arith.addf %58, %61 : vector<1x128xf32>
    %c0_60 = arith.constant 0 : index
    %c0_61 = arith.constant 0 : index
    %63 = vector.load %arg25[%c0_60, %c0_61] : memref<1x128xf32, #tpu.memory_space<vmem>>, vector<1x128xf32>
    tpu.vector_store %arg25[%c0_60, %c0_61], %62 {strides = array<i32>} : memref<1x128xf32, #tpu.memory_space<vmem>>, vector<1x128xf32>,
    %c0_62 = arith.constant 0 : index
    %c0_63 = arith.constant 0 : index
    %64 = vector.load %arg0[%c0_62, %c0_63] : memref<16x1024xf32, #tpu.memory_space<vmem>>, vector<16x1024xf32>
    %cst_64 = arith.constant dense<0.000000e+00> : vector<16x128xf32>
    %65 = tpu.matmul %64, %6, %cst_64 {dimension_numbers = #tpu.dot_dimension_numbers<[1], [0], [0], [1], [0, 0, 1, 1], [], []>} : vector<16x1024xf32>, vector<1024x128xf32>, vector<16x128xf32> -> vector<16x128xf32>
    %66 = vector.broadcast %14 : vector<1x128xf32> to vector<16x128xf32>
    %67 = arith.addf %65, %66 : vector<16x128xf32>
    %cst_65 = arith.constant dense<0.000000e+00> : vector<16x128xf32>
    %68 = tpu.matmul %67, %22, %cst_65 {dimension_numbers = #tpu.dot_dimension_numbers<[1], [0], [0], [1], [0, 0, 1, 1], [], []>} : vector<16x128xf32>, vector<128x128xf32>, vector<16x128xf32> -> vector<16x128xf32>
    %69 = vector.broadcast %30 : vector<1x128xf32> to vector<16x128xf32>
    %70 = arith.addf %68, %69 : vector<16x128xf32>
    %71 = vector.extract_strided_slice %70 {offsets = [0, 0], sizes = [8, 128], strides = [1, 1]} : vector<16x128xf32> to vector<8x128xf32>
    %cst_66 = arith.constant dense<0.000000e+00> : vector<128xf32>
    %72 = vector.multi_reduction <add>, %71, %cst_66 [0] : vector<8x128xf32> to vector<128xf32>
    %73 = vector.shape_cast %72 : vector<128xf32> to vector<1x128xf32>
    %cst_67 = arith.constant 8.000000e+00 : f32
    %74 = vector.broadcast %cst_67 : f32 to vector<1x128xf32>
    %75 = arith.divf %73, %74 : vector<1x128xf32>
    %76 = arith.mulf %71, %71 : vector<8x128xf32>
    %cst_68 = arith.constant dense<0.000000e+00> : vector<128xf32>
    %77 = vector.multi_reduction <add>, %76, %cst_68 [0] : vector<8x128xf32> to vector<128xf32>
    %78 = vector.shape_cast %77 : vector<128xf32> to vector<1x128xf32>
    %cst_69 = arith.constant 8.000000e+00 : f32
    %79 = vector.broadcast %cst_69 : f32 to vector<1x128xf32>
    %80 = arith.divf %78, %79 : vector<1x128xf32>
    %81 = arith.mulf %75, %75 : vector<1x128xf32>
    %82 = arith.subf %80, %81 : vector<1x128xf32>
    %cst_70 = arith.constant 0.000000e+00 : f32
    %83 = vector.broadcast %cst_70 : f32 to vector<1x128xf32>
    %84 = arith.maximumf %82, %83 : vector<1x128xf32>
    %85 = vector.broadcast %75 : vector<1x128xf32> to vector<8x128xf32>
    %86 = arith.subf %71, %85 : vector<8x128xf32>
    %cst_71 = arith.constant 9.99999974E-6 : f32
    %87 = vector.broadcast %cst_71 : f32 to vector<1x128xf32>
    %88 = arith.addf %84, %87 : vector<1x128xf32>
    %89 = math.rsqrt %88 : vector<1x128xf32>
    %90 = vector.broadcast %89 : vector<1x128xf32> to vector<8x128xf32>
    %91 = arith.mulf %86, %90 : vector<8x128xf32>
    %92 = vector.broadcast %38 : vector<1x128xf32> to vector<8x128xf32>
    %93 = arith.mulf %91, %92 : vector<8x128xf32>
    %94 = vector.broadcast %46 : vector<1x128xf32> to vector<8x128xf32>
    %95 = arith.addf %93, %94 : vector<8x128xf32>
    %cst_72 = arith.constant 0.000000e+00 : f32
    %96 = vector.broadcast %cst_72 : f32 to vector<8x128xf32>
    %97 = arith.maximumf %95, %96 : vector<8x128xf32>
    %98 = vector.extract_strided_slice %70 {offsets = [8, 0], sizes = [8, 128], strides = [1, 1]} : vector<16x128xf32> to vector<8x128xf32>
    %cst_73 = arith.constant dense<0.000000e+00> : vector<128xf32>
    %99 = vector.multi_reduction <add>, %98, %cst_73 [0] : vector<8x128xf32> to vector<128xf32>
    %100 = vector.shape_cast %99 : vector<128xf32> to vector<1x128xf32>
    %cst_74 = arith.constant 8.000000e+00 : f32
    %101 = vector.broadcast %cst_74 : f32 to vector<1x128xf32>
    %102 = arith.divf %100, %101 : vector<1x128xf32>
    %103 = arith.mulf %98, %98 : vector<8x128xf32>
    %cst_75 = arith.constant dense<0.000000e+00> : vector<128xf32>
    %104 = vector.multi_reduction <add>, %103, %cst_75 [0] : vector<8x128xf32> to vector<128xf32>
    %105 = vector.shape_cast %104 : vector<128xf32> to vector<1x128xf32>
    %cst_76 = arith.constant 8.000000e+00 : f32
    %106 = vector.broadcast %cst_76 : f32 to vector<1x128xf32>
    %107 = arith.divf %105, %106 : vector<1x128xf32>
    %108 = arith.mulf %102, %102 : vector<1x128xf32>
    %109 = arith.subf %107, %108 : vector<1x128xf32>
    %cst_77 = arith.constant 0.000000e+00 : f32
    %110 = vector.broadcast %cst_77 : f32 to vector<1x128xf32>
    %111 = arith.maximumf %109, %110 : vector<1x128xf32>
    %112 = vector.broadcast %102 : vector<1x128xf32> to vector<8x128xf32>
    %113 = arith.subf %98, %112 : vector<8x128xf32>
    %cst_78 = arith.constant 9.99999974E-6 : f32
    %114 = vector.broadcast %cst_78 : f32 to vector<1x128xf32>
    %115 = arith.addf %111, %114 : vector<1x128xf32>
    %116 = math.rsqrt %115 : vector<1x128xf32>
    %117 = vector.broadcast %116 : vector<1x128xf32> to vector<8x128xf32>
    %118 = arith.mulf %113, %117 : vector<8x128xf32>
    %119 = vector.broadcast %38 : vector<1x128xf32> to vector<8x128xf32>
    %120 = arith.mulf %118, %119 : vector<8x128xf32>
    %121 = vector.broadcast %46 : vector<1x128xf32> to vector<8x128xf32>
    %122 = arith.addf %120, %121 : vector<8x128xf32>
    %cst_79 = arith.constant 0.000000e+00 : f32
    %123 = vector.broadcast %cst_79 : f32 to vector<8x128xf32>
    %124 = arith.maximumf %122, %123 : vector<8x128xf32>
    %125 = tpu.concatenate %97, %124 in 0 : vector<8x128xf32>, vector<8x128xf32> -> vector<16x128xf32>
    %cst_80 = arith.constant dense<0.000000e+00> : vector<16x128xf32>
    %126 = tpu.matmul %125, %54, %cst_80 {dimension_numbers = #tpu.dot_dimension_numbers<[1], [0], [0], [1], [0, 0, 1, 1], [], []>} : vector<16x128xf32>, vector<128x128xf32>, vector<16x128xf32> -> vector<16x128xf32>
    %127 = vector.broadcast %62 : vector<1x128xf32> to vector<16x128xf32>
    %128 = arith.addf %126, %127 : vector<16x128xf32>
    %c0_81 = arith.constant 0 : index
    %c0_82 = arith.constant 0 : index
    %129 = vector.load %arg17[%c0_81, %c0_82] : memref<16x128xf32, #tpu.memory_space<vmem>>, vector<16x128xf32>
    tpu.vector_store %arg17[%c0_81, %c0_82], %128 {strides = array<i32>} : memref<16x128xf32, #tpu.memory_space<vmem>>, vector<16x128xf32>,
    return
  }
}

module attributes {stable_mosaic.version = 11 : i64} {
  func.func @online_branch_kernel(%arg0: memref<16x1024xf32, #tpu.memory_space<vmem>>, %arg1: memref<1024x128xf32, #tpu.memory_space<vmem>>, %arg2: memref<1x128xf32, #tpu.memory_space<vmem>>, %arg3: memref<128x128xf32, #tpu.memory_space<vmem>>, %arg4: memref<1x128xf32, #tpu.memory_space<vmem>>, %arg5: memref<1x128xf32, #tpu.memory_space<vmem>>, %arg6: memref<1x128xf32, #tpu.memory_space<vmem>>, %arg7: memref<128x128xf32, #tpu.memory_space<vmem>>, %arg8: memref<1x128xf32, #tpu.memory_space<vmem>>, %arg9: memref<128x128xf32, #tpu.memory_space<vmem>>, %arg10: memref<1x128xf32, #tpu.memory_space<vmem>>, %arg11: memref<1x128xf32, #tpu.memory_space<vmem>>, %arg12: memref<1x128xf32, #tpu.memory_space<vmem>>, %arg13: memref<128x128xf32, #tpu.memory_space<vmem>>, %arg14: memref<1x128xf32, #tpu.memory_space<vmem>>, %arg15: memref<16x128xf32, #tpu.memory_space<vmem>>) attributes {dimension_semantics = [], scalar_prefetch = 0 : i64, scratch_operands = 0 : i64, tpu.core_type = #tpu.core_type<tc>} {
    %c0 = arith.constant 0 : index
    %c0_0 = arith.constant 0 : index
    %0 = vector.load %arg0[%c0, %c0_0] : memref<16x1024xf32, #tpu.memory_space<vmem>>, vector<16x1024xf32>
    %c0_1 = arith.constant 0 : index
    %c0_2 = arith.constant 0 : index
    %1 = vector.load %arg1[%c0_1, %c0_2] : memref<1024x128xf32, #tpu.memory_space<vmem>>, vector<1024x128xf32>
    %c0_3 = arith.constant 0 : index
    %c0_4 = arith.constant 0 : index
    %2 = vector.load %arg2[%c0_3, %c0_4] : memref<1x128xf32, #tpu.memory_space<vmem>>, vector<1x128xf32>
    %cst = arith.constant dense<0.000000e+00> : vector<16x128xf32>
    %3 = tpu.matmul %0, %1, %cst {dimension_numbers = #tpu.dot_dimension_numbers<[1], [0], [0], [1], [0, 0, 1, 1], [], []>} : vector<16x1024xf32>, vector<1024x128xf32>, vector<16x128xf32> -> vector<16x128xf32>
    %4 = vector.broadcast %2 : vector<1x128xf32> to vector<16x128xf32>
    %5 = arith.addf %3, %4 : vector<16x128xf32>
    %c0_5 = arith.constant 0 : index
    %c0_6 = arith.constant 0 : index
    %6 = vector.load %arg3[%c0_5, %c0_6] : memref<128x128xf32, #tpu.memory_space<vmem>>, vector<128x128xf32>
    %c0_7 = arith.constant 0 : index
    %c0_8 = arith.constant 0 : index
    %7 = vector.load %arg4[%c0_7, %c0_8] : memref<1x128xf32, #tpu.memory_space<vmem>>, vector<1x128xf32>
    %cst_9 = arith.constant dense<0.000000e+00> : vector<16x128xf32>
    %8 = tpu.matmul %5, %6, %cst_9 {dimension_numbers = #tpu.dot_dimension_numbers<[1], [0], [0], [1], [0, 0, 1, 1], [], []>} : vector<16x128xf32>, vector<128x128xf32>, vector<16x128xf32> -> vector<16x128xf32>
    %9 = vector.broadcast %7 : vector<1x128xf32> to vector<16x128xf32>
    %10 = arith.addf %8, %9 : vector<16x128xf32>
    %c0_10 = arith.constant 0 : index
    %c0_11 = arith.constant 0 : index
    %11 = vector.load %arg5[%c0_10, %c0_11] : memref<1x128xf32, #tpu.memory_space<vmem>>, vector<1x128xf32>
    %c0_12 = arith.constant 0 : index
    %c0_13 = arith.constant 0 : index
    %12 = vector.load %arg6[%c0_12, %c0_13] : memref<1x128xf32, #tpu.memory_space<vmem>>, vector<1x128xf32>
    %13 = vector.extract_strided_slice %10 {offsets = [0, 0], sizes = [8, 128], strides = [1, 1]} : vector<16x128xf32> to vector<8x128xf32>
    %cst_14 = arith.constant dense<0.000000e+00> : vector<128xf32>
    %14 = vector.multi_reduction <add>, %13, %cst_14 [0] : vector<8x128xf32> to vector<128xf32>
    %15 = vector.shape_cast %14 : vector<128xf32> to vector<1x128xf32>
    %cst_15 = arith.constant 8.000000e+00 : f32
    %16 = vector.broadcast %cst_15 : f32 to vector<1x128xf32>
    %17 = arith.divf %15, %16 : vector<1x128xf32>
    %18 = arith.mulf %13, %13 : vector<8x128xf32>
    %cst_16 = arith.constant dense<0.000000e+00> : vector<128xf32>
    %19 = vector.multi_reduction <add>, %18, %cst_16 [0] : vector<8x128xf32> to vector<128xf32>
    %20 = vector.shape_cast %19 : vector<128xf32> to vector<1x128xf32>
    %cst_17 = arith.constant 8.000000e+00 : f32
    %21 = vector.broadcast %cst_17 : f32 to vector<1x128xf32>
    %22 = arith.divf %20, %21 : vector<1x128xf32>
    %23 = arith.mulf %17, %17 : vector<1x128xf32>
    %24 = arith.subf %22, %23 : vector<1x128xf32>
    %cst_18 = arith.constant 0.000000e+00 : f32
    %25 = vector.broadcast %cst_18 : f32 to vector<1x128xf32>
    %26 = arith.maximumf %24, %25 : vector<1x128xf32>
    %27 = vector.broadcast %17 : vector<1x128xf32> to vector<8x128xf32>
    %28 = arith.subf %13, %27 : vector<8x128xf32>
    %cst_19 = arith.constant 9.99999974E-6 : f32
    %29 = vector.broadcast %cst_19 : f32 to vector<1x128xf32>
    %30 = arith.addf %26, %29 : vector<1x128xf32>
    %31 = math.rsqrt %30 : vector<1x128xf32>
    %32 = vector.broadcast %31 : vector<1x128xf32> to vector<8x128xf32>
    %33 = arith.mulf %28, %32 : vector<8x128xf32>
    %34 = vector.broadcast %11 : vector<1x128xf32> to vector<8x128xf32>
    %35 = arith.mulf %33, %34 : vector<8x128xf32>
    %36 = vector.broadcast %12 : vector<1x128xf32> to vector<8x128xf32>
    %37 = arith.addf %35, %36 : vector<8x128xf32>
    %cst_20 = arith.constant 0.000000e+00 : f32
    %38 = vector.broadcast %cst_20 : f32 to vector<8x128xf32>
    %39 = arith.maximumf %37, %38 : vector<8x128xf32>
    %40 = vector.extract_strided_slice %10 {offsets = [8, 0], sizes = [8, 128], strides = [1, 1]} : vector<16x128xf32> to vector<8x128xf32>
    %cst_21 = arith.constant dense<0.000000e+00> : vector<128xf32>
    %41 = vector.multi_reduction <add>, %40, %cst_21 [0] : vector<8x128xf32> to vector<128xf32>
    %42 = vector.shape_cast %41 : vector<128xf32> to vector<1x128xf32>
    %cst_22 = arith.constant 8.000000e+00 : f32
    %43 = vector.broadcast %cst_22 : f32 to vector<1x128xf32>
    %44 = arith.divf %42, %43 : vector<1x128xf32>
    %45 = arith.mulf %40, %40 : vector<8x128xf32>
    %cst_23 = arith.constant dense<0.000000e+00> : vector<128xf32>
    %46 = vector.multi_reduction <add>, %45, %cst_23 [0] : vector<8x128xf32> to vector<128xf32>
    %47 = vector.shape_cast %46 : vector<128xf32> to vector<1x128xf32>
    %cst_24 = arith.constant 8.000000e+00 : f32
    %48 = vector.broadcast %cst_24 : f32 to vector<1x128xf32>
    %49 = arith.divf %47, %48 : vector<1x128xf32>
    %50 = arith.mulf %44, %44 : vector<1x128xf32>
    %51 = arith.subf %49, %50 : vector<1x128xf32>
    %cst_25 = arith.constant 0.000000e+00 : f32
    %52 = vector.broadcast %cst_25 : f32 to vector<1x128xf32>
    %53 = arith.maximumf %51, %52 : vector<1x128xf32>
    %54 = vector.broadcast %44 : vector<1x128xf32> to vector<8x128xf32>
    %55 = arith.subf %40, %54 : vector<8x128xf32>
    %cst_26 = arith.constant 9.99999974E-6 : f32
    %56 = vector.broadcast %cst_26 : f32 to vector<1x128xf32>
    %57 = arith.addf %53, %56 : vector<1x128xf32>
    %58 = math.rsqrt %57 : vector<1x128xf32>
    %59 = vector.broadcast %58 : vector<1x128xf32> to vector<8x128xf32>
    %60 = arith.mulf %55, %59 : vector<8x128xf32>
    %61 = vector.broadcast %11 : vector<1x128xf32> to vector<8x128xf32>
    %62 = arith.mulf %60, %61 : vector<8x128xf32>
    %63 = vector.broadcast %12 : vector<1x128xf32> to vector<8x128xf32>
    %64 = arith.addf %62, %63 : vector<8x128xf32>
    %cst_27 = arith.constant 0.000000e+00 : f32
    %65 = vector.broadcast %cst_27 : f32 to vector<8x128xf32>
    %66 = arith.maximumf %64, %65 : vector<8x128xf32>
    %67 = tpu.concatenate %39, %66 in 0 : vector<8x128xf32>, vector<8x128xf32> -> vector<16x128xf32>
    %c0_28 = arith.constant 0 : index
    %c0_29 = arith.constant 0 : index
    %68 = vector.load %arg7[%c0_28, %c0_29] : memref<128x128xf32, #tpu.memory_space<vmem>>, vector<128x128xf32>
    %c0_30 = arith.constant 0 : index
    %c0_31 = arith.constant 0 : index
    %69 = vector.load %arg8[%c0_30, %c0_31] : memref<1x128xf32, #tpu.memory_space<vmem>>, vector<1x128xf32>
    %cst_32 = arith.constant dense<0.000000e+00> : vector<16x128xf32>
    %70 = tpu.matmul %67, %68, %cst_32 {dimension_numbers = #tpu.dot_dimension_numbers<[1], [0], [0], [1], [0, 0, 1, 1], [], []>} : vector<16x128xf32>, vector<128x128xf32>, vector<16x128xf32> -> vector<16x128xf32>
    %71 = vector.broadcast %69 : vector<1x128xf32> to vector<16x128xf32>
    %72 = arith.addf %70, %71 : vector<16x128xf32>
    %c0_33 = arith.constant 0 : index
    %c0_34 = arith.constant 0 : index
    %73 = vector.load %arg9[%c0_33, %c0_34] : memref<128x128xf32, #tpu.memory_space<vmem>>, vector<128x128xf32>
    %c0_35 = arith.constant 0 : index
    %c0_36 = arith.constant 0 : index
    %74 = vector.load %arg10[%c0_35, %c0_36] : memref<1x128xf32, #tpu.memory_space<vmem>>, vector<1x128xf32>
    %cst_37 = arith.constant dense<0.000000e+00> : vector<16x128xf32>
    %75 = tpu.matmul %72, %73, %cst_37 {dimension_numbers = #tpu.dot_dimension_numbers<[1], [0], [0], [1], [0, 0, 1, 1], [], []>} : vector<16x128xf32>, vector<128x128xf32>, vector<16x128xf32> -> vector<16x128xf32>
    %76 = vector.broadcast %74 : vector<1x128xf32> to vector<16x128xf32>
    %77 = arith.addf %75, %76 : vector<16x128xf32>
    %c0_38 = arith.constant 0 : index
    %c0_39 = arith.constant 0 : index
    %78 = vector.load %arg11[%c0_38, %c0_39] : memref<1x128xf32, #tpu.memory_space<vmem>>, vector<1x128xf32>
    %c0_40 = arith.constant 0 : index
    %c0_41 = arith.constant 0 : index
    %79 = vector.load %arg12[%c0_40, %c0_41] : memref<1x128xf32, #tpu.memory_space<vmem>>, vector<1x128xf32>
    %80 = vector.extract_strided_slice %77 {offsets = [0, 0], sizes = [8, 128], strides = [1, 1]} : vector<16x128xf32> to vector<8x128xf32>
    %cst_42 = arith.constant dense<0.000000e+00> : vector<128xf32>
    %81 = vector.multi_reduction <add>, %80, %cst_42 [0] : vector<8x128xf32> to vector<128xf32>
    %82 = vector.shape_cast %81 : vector<128xf32> to vector<1x128xf32>
    %cst_43 = arith.constant 8.000000e+00 : f32
    %83 = vector.broadcast %cst_43 : f32 to vector<1x128xf32>
    %84 = arith.divf %82, %83 : vector<1x128xf32>
    %85 = arith.mulf %80, %80 : vector<8x128xf32>
    %cst_44 = arith.constant dense<0.000000e+00> : vector<128xf32>
    %86 = vector.multi_reduction <add>, %85, %cst_44 [0] : vector<8x128xf32> to vector<128xf32>
    %87 = vector.shape_cast %86 : vector<128xf32> to vector<1x128xf32>
    %cst_45 = arith.constant 8.000000e+00 : f32
    %88 = vector.broadcast %cst_45 : f32 to vector<1x128xf32>
    %89 = arith.divf %87, %88 : vector<1x128xf32>
    %90 = arith.mulf %84, %84 : vector<1x128xf32>
    %91 = arith.subf %89, %90 : vector<1x128xf32>
    %cst_46 = arith.constant 0.000000e+00 : f32
    %92 = vector.broadcast %cst_46 : f32 to vector<1x128xf32>
    %93 = arith.maximumf %91, %92 : vector<1x128xf32>
    %94 = vector.broadcast %84 : vector<1x128xf32> to vector<8x128xf32>
    %95 = arith.subf %80, %94 : vector<8x128xf32>
    %cst_47 = arith.constant 9.99999974E-6 : f32
    %96 = vector.broadcast %cst_47 : f32 to vector<1x128xf32>
    %97 = arith.addf %93, %96 : vector<1x128xf32>
    %98 = math.rsqrt %97 : vector<1x128xf32>
    %99 = vector.broadcast %98 : vector<1x128xf32> to vector<8x128xf32>
    %100 = arith.mulf %95, %99 : vector<8x128xf32>
    %101 = vector.broadcast %78 : vector<1x128xf32> to vector<8x128xf32>
    %102 = arith.mulf %100, %101 : vector<8x128xf32>
    %103 = vector.broadcast %79 : vector<1x128xf32> to vector<8x128xf32>
    %104 = arith.addf %102, %103 : vector<8x128xf32>
    %cst_48 = arith.constant 0.000000e+00 : f32
    %105 = vector.broadcast %cst_48 : f32 to vector<8x128xf32>
    %106 = arith.maximumf %104, %105 : vector<8x128xf32>
    %107 = vector.extract_strided_slice %77 {offsets = [8, 0], sizes = [8, 128], strides = [1, 1]} : vector<16x128xf32> to vector<8x128xf32>
    %cst_49 = arith.constant dense<0.000000e+00> : vector<128xf32>
    %108 = vector.multi_reduction <add>, %107, %cst_49 [0] : vector<8x128xf32> to vector<128xf32>
    %109 = vector.shape_cast %108 : vector<128xf32> to vector<1x128xf32>
    %cst_50 = arith.constant 8.000000e+00 : f32
    %110 = vector.broadcast %cst_50 : f32 to vector<1x128xf32>
    %111 = arith.divf %109, %110 : vector<1x128xf32>
    %112 = arith.mulf %107, %107 : vector<8x128xf32>
    %cst_51 = arith.constant dense<0.000000e+00> : vector<128xf32>
    %113 = vector.multi_reduction <add>, %112, %cst_51 [0] : vector<8x128xf32> to vector<128xf32>
    %114 = vector.shape_cast %113 : vector<128xf32> to vector<1x128xf32>
    %cst_52 = arith.constant 8.000000e+00 : f32
    %115 = vector.broadcast %cst_52 : f32 to vector<1x128xf32>
    %116 = arith.divf %114, %115 : vector<1x128xf32>
    %117 = arith.mulf %111, %111 : vector<1x128xf32>
    %118 = arith.subf %116, %117 : vector<1x128xf32>
    %cst_53 = arith.constant 0.000000e+00 : f32
    %119 = vector.broadcast %cst_53 : f32 to vector<1x128xf32>
    %120 = arith.maximumf %118, %119 : vector<1x128xf32>
    %121 = vector.broadcast %111 : vector<1x128xf32> to vector<8x128xf32>
    %122 = arith.subf %107, %121 : vector<8x128xf32>
    %cst_54 = arith.constant 9.99999974E-6 : f32
    %123 = vector.broadcast %cst_54 : f32 to vector<1x128xf32>
    %124 = arith.addf %120, %123 : vector<1x128xf32>
    %125 = math.rsqrt %124 : vector<1x128xf32>
    %126 = vector.broadcast %125 : vector<1x128xf32> to vector<8x128xf32>
    %127 = arith.mulf %122, %126 : vector<8x128xf32>
    %128 = vector.broadcast %78 : vector<1x128xf32> to vector<8x128xf32>
    %129 = arith.mulf %127, %128 : vector<8x128xf32>
    %130 = vector.broadcast %79 : vector<1x128xf32> to vector<8x128xf32>
    %131 = arith.addf %129, %130 : vector<8x128xf32>
    %cst_55 = arith.constant 0.000000e+00 : f32
    %132 = vector.broadcast %cst_55 : f32 to vector<8x128xf32>
    %133 = arith.maximumf %131, %132 : vector<8x128xf32>
    %134 = tpu.concatenate %106, %133 in 0 : vector<8x128xf32>, vector<8x128xf32> -> vector<16x128xf32>
    %c0_56 = arith.constant 0 : index
    %c0_57 = arith.constant 0 : index
    %135 = vector.load %arg13[%c0_56, %c0_57] : memref<128x128xf32, #tpu.memory_space<vmem>>, vector<128x128xf32>
    %c0_58 = arith.constant 0 : index
    %c0_59 = arith.constant 0 : index
    %136 = vector.load %arg14[%c0_58, %c0_59] : memref<1x128xf32, #tpu.memory_space<vmem>>, vector<1x128xf32>
    %cst_60 = arith.constant dense<0.000000e+00> : vector<16x128xf32>
    %137 = tpu.matmul %134, %135, %cst_60 {dimension_numbers = #tpu.dot_dimension_numbers<[1], [0], [0], [1], [0, 0, 1, 1], [], []>} : vector<16x128xf32>, vector<128x128xf32>, vector<16x128xf32> -> vector<16x128xf32>
    %138 = vector.broadcast %136 : vector<1x128xf32> to vector<16x128xf32>
    %139 = arith.addf %137, %138 : vector<16x128xf32>
    %c0_61 = arith.constant 0 : index
    %c0_62 = arith.constant 0 : index
    %140 = vector.load %arg15[%c0_61, %c0_62] : memref<16x128xf32, #tpu.memory_space<vmem>>, vector<16x128xf32>
    tpu.vector_store %arg15[%c0_61, %c0_62], %139 {strides = array<i32>} : memref<16x128xf32, #tpu.memory_space<vmem>>, vector<16x128xf32>,
    return
  }
}

</mosaic_0001>

<llo_original>
// kernel: byol_forward.2
$region0: #{byol_forward.2}
  #allocation0 [shape = 'u32[]', space=smem, size = 0x4, offset = 0x4, fixed_abs, tag = 'smem constant byte address 0x4 - core index']
  #allocation1 [shape = 'u32[144,128]{1,0:T(1,128)}', space=vmem, size = 0x12000, scoped, tag = 'internal scratch']
  %s0 = inlined_call_operand.vmem [shape: f32[16,1024], index: 0, kind: input, shape index: {}]
  %s1 = inlined_call_operand.vmem [shape: f32[1024,128], index: 1, kind: input, shape index: {}]
  %s2 = inlined_call_operand.vmem [shape: f32[1,128], index: 2, kind: input, shape index: {}]
  %s3 = inlined_call_operand.vmem [shape: f32[128,128], index: 3, kind: input, shape index: {}]
  %s4 = inlined_call_operand.vmem [shape: f32[1,128], index: 4, kind: input, shape index: {}]
  %s5 = inlined_call_operand.vmem [shape: f32[1,128], index: 5, kind: input, shape index: {}]
  %s6 = inlined_call_operand.vmem [shape: f32[1,128], index: 6, kind: input, shape index: {}]
  %s7 = inlined_call_operand.vmem [shape: f32[128,128], index: 7, kind: input, shape index: {}]
  %s8 = inlined_call_operand.vmem [shape: f32[1,128], index: 8, kind: input, shape index: {}]
  %s9 = inlined_call_operand.vmem [shape: f32[128,128], index: 9, kind: input, shape index: {}]
  %s10 = inlined_call_operand.vmem [shape: f32[1,128], index: 10, kind: input, shape index: {}]
  %s11 = inlined_call_operand.vmem [shape: f32[1,128], index: 11, kind: input, shape index: {}]
  %s12 = inlined_call_operand.vmem [shape: f32[1,128], index: 12, kind: input, shape index: {}]
  %s13 = inlined_call_operand.vmem [shape: f32[128,128], index: 13, kind: input, shape index: {}]
  %s14 = inlined_call_operand.vmem [shape: f32[1,128], index: 14, kind: input, shape index: {}]
  %s15 = inlined_call_operand.vmem [shape: f32[16,128], index: 15, kind: output, shape index: {}]
  %s16 = sld [smem:[#allocation0]]
  $region70: #{byol_forward.2} parent=0
    _
  %s18 = ssub.s32 1, %s16
  %s19 = scalar_select 0, %s18, %s16
  // Predicated region
  $region2: #{byol_forward.2} parent=0 // pred_check
    _
  $region3: #{byol_forward.2} parent=0 // pred_check_branch
    %21 = sbr.rel (0) target = $region5
  $region4: #{byol_forward.2} parent=0 // pred_region
    _
  $region5: #{byol_forward.2} parent=0 // pred_fallthru
    _
  // Predicated region
  $region6: #{byol_forward.2} parent=0 // pred_check
    _
  $region7: #{byol_forward.2} parent=0 // pred_check_branch
    %23 = sbr.rel (0) target = $region9
  $region8: #{byol_forward.2} parent=0 // pred_region
    _
  $region9: #{byol_forward.2} parent=0 // pred_fallthru
    _
  // Predicated region
  $region10: #{byol_forward.2} parent=0 // pred_check
    _
  $region11: #{byol_forward.2} parent=0 // pred_check_branch
    %25 = sbr.rel (0) target = $region13
  $region12: #{byol_forward.2} parent=0 // pred_region
    _
  $region13: #{byol_forward.2} parent=0 // pred_fallthru
    _
  // Predicated region
  $region14: #{byol_forward.2} parent=0 // pred_check
    _
  $region15: #{byol_forward.2} parent=0 // pred_check_branch
    %27 = sbr.rel (0) target = $region17
  $region16: #{byol_forward.2} parent=0 // pred_region
    _
  $region17: #{byol_forward.2} parent=0 // pred_fallthru
    _
  // Predicated region
  $region18: #{byol_forward.2} parent=0 // pred_check
    _
  $region19: #{byol_forward.2} parent=0 // pred_check_branch
    %29 = sbr.rel (0) target = $region21
  $region20: #{byol_forward.2} parent=0 // pred_region
    _
  $region21: #{byol_forward.2} parent=0 // pred_fallthru
    _
  // Predicated region
  $region22: #{byol_forward.2} parent=0 // pred_check
    _
  $region23: #{byol_forward.2} parent=0 // pred_check_branch
    %31 = sbr.rel (0) target = $region25
  $region24: #{byol_forward.2} parent=0 // pred_region
    _
  $region25: #{byol_forward.2} parent=0 // pred_fallthru
    _
  // Predicated region
  $region26: #{byol_forward.2} parent=0 // pred_check
    _
  $region27: #{byol_forward.2} parent=0 // pred_check_branch
    %33 = sbr.rel (0) target = $region29
  $region28: #{byol_forward.2} parent=0 // pred_region
    _
  $region29: #{byol_forward.2} parent=0 // pred_fallthru
    _
  // Predicated region
  $region30: #{byol_forward.2} parent=0 // pred_check
    _
  $region31: #{byol_forward.2} parent=0 // pred_check_branch
    %35 = sbr.rel (0) target = $region33
  $region32: #{byol_forward.2} parent=0 // pred_region
    _
  $region33: #{byol_forward.2} parent=0 // pred_fallthru
    _
  // Predicated region
  $region34: #{byol_forward.2} parent=0 // pred_check
    _
  $region35: #{byol_forward.2} parent=0 // pred_check_branch
    %37 = sbr.rel (0) target = $region37
  $region36: #{byol_forward.2} parent=0 // pred_region
    _
  $region37: #{byol_forward.2} parent=0 // pred_fallthru
    _
  // Predicated region
  $region38: #{byol_forward.2} parent=0 // pred_check
    _
  $region39: #{byol_forward.2} parent=0 // pred_check_branch
    %39 = sbr.rel (0) target = $region41
  $region40: #{byol_forward.2} parent=0 // pred_region
    _
  $region41: #{byol_forward.2} parent=0 // pred_fallthru
    _
  // Predicated region
  $region42: #{byol_forward.2} parent=0 // pred_check
    _
  $region43: #{byol_forward.2} parent=0 // pred_check_branch
    %41 = sbr.rel (0) target = $region45
  $region44: #{byol_forward.2} parent=0 // pred_region
    _
  $region45: #{byol_forward.2} parent=0 // pred_fallthru
    _
  // Predicated region
  $region46: #{byol_forward.2} parent=0 // pred_check
    _
  $region47: #{byol_forward.2} parent=0 // pred_check_branch
    %43 = sbr.rel (0) target = $region49
  $region48: #{byol_forward.2} parent=0 // pred_region
    _
  $region49: #{byol_forward.2} parent=0 // pred_fallthru
    _
  // Predicated region
  $region50: #{byol_forward.2} parent=0 // pred_check
    _
  $region51: #{byol_forward.2} parent=0 // pred_check_branch
    %45 = sbr.rel (0) target = $region53
  $region52: #{byol_forward.2} parent=0 // pred_region
    _
  $region53: #{byol_forward.2} parent=0 // pred_fallthru
    _
  // Predicated region
  $region54: #{byol_forward.2} parent=0 // pred_check
    _
  $region55: #{byol_forward.2} parent=0 // pred_check_branch
    %47 = sbr.rel (0) target = $region57
  $region56: #{byol_forward.2} parent=0 // pred_region
    _
  $region57: #{byol_forward.2} parent=0 // pred_fallthru
    _
  // Predicated region
  $region58: #{byol_forward.2} parent=0 // pred_check
    _
  $region59: #{byol_forward.2} parent=0 // pred_check_branch
    %49 = sbr.rel (0) target = $region61
  $region60: #{byol_forward.2} parent=0 // pred_region
    _
  $region61: #{byol_forward.2} parent=0 // pred_fallthru
    _
  %v50 = vld [vmem:[%s0] sm:$0xff]
  %v51 = vld [vmem:[%s0 + $0x8] sm:$0xff]
  %v52 = vld [vmem:[%s0 + $0x10] sm:$0xff]
  %v53 = vld [vmem:[%s0 + $0x18] sm:$0xff]
  %v54 = vld [vmem:[%s0 + $0x20] sm:$0xff]
  %v55 = vld [vmem:[%s0 + $0x28] sm:$0xff]
  %v56 = vld [vmem:[%s0 + $0x30] sm:$0xff]
  %v57 = vld [vmem:[%s0 + $0x38] sm:$0xff]
  %v58 = vld [vmem:[%s0 + $0x40] sm:$0xff]
  %v59 = vld [vmem:[%s0 + $0x48] sm:$0xff]
  %v60 = vld [vmem:[%s0 + $0x50] sm:$0xff]
  %v61 = vld [vmem:[%s0 + $0x58] sm:$0xff]
  %v62 = vld [vmem:[%s0 + $0x60] sm:$0xff]
  %v63 = vld [vmem:[%s0 + $0x68] sm:$0xff]
  %v64 = vld [vmem:[%s0 + $0x70] sm:$0xff]
  %v65 = vld [vmem:[%s0 + $0x78] sm:$0xff]
  %v66 = vld [vmem:[%s1] sm:$0xff]
  %v67 = vld [vmem:[%s1 + $0x8] sm:$0xff]
  %v68 = vld [vmem:[%s1 + $0x10] sm:$0xff]
  %v69 = vld [vmem:[%s1 + $0x18] sm:$0xff]
  %v70 = vld [vmem:[%s1 + $0x20] sm:$0xff]
  %v71 = vld [vmem:[%s1 + $0x28] sm:$0xff]
  %v72 = vld [vmem:[%s1 + $0x30] sm:$0xff]
  %v73 = vld [vmem:[%s1 + $0x38] sm:$0xff]
  %v74 = vld [vmem:[%s1 + $0x40] sm:$0xff]
  %v75 = vld [vmem:[%s1 + $0x48] sm:$0xff]
  %v76 = vld [vmem:[%s1 + $0x50] sm:$0xff]
  %v77 = vld [vmem:[%s1 + $0x58] sm:$0xff]
  %v78 = vld [vmem:[%s1 + $0x60] sm:$0xff]
  %v79 = vld [vmem:[%s1 + $0x68] sm:$0xff]
  %v80 = vld [vmem:[%s1 + $0x70] sm:$0xff]
  %v81 = vld [vmem:[%s1 + $0x78] sm:$0xff]
  %v82 = vld [vmem:[%s1 + $0x80] sm:$0xff]
  %v83 = vld [vmem:[%s1 + $0x88] sm:$0xff]
  %v84 = vld [vmem:[%s1 + $0x90] sm:$0xff]
  %v85 = vld [vmem:[%s1 + $0x98] sm:$0xff]
  %v86 = vld [vmem:[%s1 + $0xa0] sm:$0xff]
  %v87 = vld [vmem:[%s1 + $0xa8] sm:$0xff]
  %v88 = vld [vmem:[%s1 + $0xb0] sm:$0xff]
  %v89 = vld [vmem:[%s1 + $0xb8] sm:$0xff]
  %v90 = vld [vmem:[%s1 + $0xc0] sm:$0xff]
  %v91 = vld [vmem:[%s1 + $0xc8] sm:$0xff]
  %v92 = vld [vmem:[%s1 + $0xd0] sm:$0xff]
  %v93 = vld [vmem:[%s1 + $0xd8] sm:$0xff]
  %v94 = vld [vmem:[%s1 + $0xe0] sm:$0xff]
  %v95 = vld [vmem:[%s1 + $0xe8] sm:$0xff]
  %v96 = vld [vmem:[%s1 + $0xf0] sm:$0xff]
  %v97 = vld [vmem:[%s1 + $0xf8] sm:$0xff]
  %v98 = vld [vmem:[%s1 + $0x100] sm:$0xff]
  %v99 = vld [vmem:[%s1 + $0x108] sm:$0xff]
  %v100 = vld [vmem:[%s1 + $0x110] sm:$0xff]
  %v101 = vld [vmem:[%s1 + $0x118] sm:$0xff]
  %v102 = vld [vmem:[%s1 + $0x120] sm:$0xff]
  %v103 = vld [vmem:[%s1 + $0x128] sm:$0xff]
  %v104 = vld [vmem:[%s1 + $0x130] sm:$0xff]
  %v105 = vld [vmem:[%s1 + $0x138] sm:$0xff]
  %v106 = vld [vmem:[%s1 + $0x140] sm:$0xff]
  %v107 = vld [vmem:[%s1 + $0x148] sm:$0xff]
  %v108 = vld [vmem:[%s1 + $0x150] sm:$0xff]
  %v109 = vld [vmem:[%s1 + $0x158] sm:$0xff]
  %v110 = vld [vmem:[%s1 + $0x160] sm:$0xff]
  %v111 = vld [vmem:[%s1 + $0x168] sm:$0xff]
  %v112 = vld [vmem:[%s1 + $0x170] sm:$0xff]
  %v113 = vld [vmem:[%s1 + $0x178] sm:$0xff]
  %v114 = vld [vmem:[%s1 + $0x180] sm:$0xff]
  %v115 = vld [vmem:[%s1 + $0x188] sm:$0xff]
  %v116 = vld [vmem:[%s1 + $0x190] sm:$0xff]
  %v117 = vld [vmem:[%s1 + $0x198] sm:$0xff]
  %v118 = vld [vmem:[%s1 + $0x1a0] sm:$0xff]
  %v119 = vld [vmem:[%s1 + $0x1a8] sm:$0xff]
  %v120 = vld [vmem:[%s1 + $0x1b0] sm:$0xff]
  %v121 = vld [vmem:[%s1 + $0x1b8] sm:$0xff]
  %v122 = vld [vmem:[%s1 + $0x1c0] sm:$0xff]
  %v123 = vld [vmem:[%s1 + $0x1c8] sm:$0xff]
  %v124 = vld [vmem:[%s1 + $0x1d0] sm:$0xff]
  %v125 = vld [vmem:[%s1 + $0x1d8] sm:$0xff]
  %v126 = vld [vmem:[%s1 + $0x1e0] sm:$0xff]
  %v127 = vld [vmem:[%s1 + $0x1e8] sm:$0xff]
  %v128 = vld [vmem:[%s1 + $0x1f0] sm:$0xff]
  %v129 = vld [vmem:[%s1 + $0x1f8] sm:$0xff]
  %v130 = vld [vmem:[%s1 + $0x200] sm:$0xff]
  %v131 = vld [vmem:[%s1 + $0x208] sm:$0xff]
  %v132 = vld [vmem:[%s1 + $0x210] sm:$0xff]
  %v133 = vld [vmem:[%s1 + $0x218] sm:$0xff]
  %v134 = vld [vmem:[%s1 + $0x220] sm:$0xff]
  %v135 = vld [vmem:[%s1 + $0x228] sm:$0xff]
  %v136 = vld [vmem:[%s1 + $0x230] sm:$0xff]
  %v137 = vld [vmem:[%s1 + $0x238] sm:$0xff]
  %v138 = vld [vmem:[%s1 + $0x240] sm:$0xff]
  %v139 = vld [vmem:[%s1 + $0x248] sm:$0xff]
  %v140 = vld [vmem:[%s1 + $0x250] sm:$0xff]
  %v141 = vld [vmem:[%s1 + $0x258] sm:$0xff]
  %v142 = vld [vmem:[%s1 + $0x260] sm:$0xff]
  %v143 = vld [vmem:[%s1 + $0x268] sm:$0xff]
  %v144 = vld [vmem:[%s1 + $0x270] sm:$0xff]
  %v145 = vld [vmem:[%s1 + $0x278] sm:$0xff]
  %v146 = vld [vmem:[%s1 + $0x280] sm:$0xff]
  %v147 = vld [vmem:[%s1 + $0x288] sm:$0xff]
  %v148 = vld [vmem:[%s1 + $0x290] sm:$0xff]
  %v149 = vld [vmem:[%s1 + $0x298] sm:$0xff]
  %v150 = vld [vmem:[%s1 + $0x2a0] sm:$0xff]
  %v151 = vld [vmem:[%s1 + $0x2a8] sm:$0xff]
  %v152 = vld [vmem:[%s1 + $0x2b0] sm:$0xff]
  %v153 = vld [vmem:[%s1 + $0x2b8] sm:$0xff]
  %v154 = vld [vmem:[%s1 + $0x2c0] sm:$0xff]
  %v155 = vld [vmem:[%s1 + $0x2c8] sm:$0xff]
  %v156 = vld [vmem:[%s1 + $0x2d0] sm:$0xff]
  %v157 = vld [vmem:[%s1 + $0x2d8] sm:$0xff]
  %v158 = vld [vmem:[%s1 + $0x2e0] sm:$0xff]
  %v159 = vld [vmem:[%s1 + $0x2e8] sm:$0xff]
  %v160 = vld [vmem:[%s1 + $0x2f0] sm:$0xff]
  %v161 = vld [vmem:[%s1 + $0x2f8] sm:$0xff]
  %v162 = vld [vmem:[%s1 + $0x300] sm:$0xff]
  %v163 = vld [vmem:[%s1 + $0x308] sm:$0xff]
  %v164 = vld [vmem:[%s1 + $0x310] sm:$0xff]
  %v165 = vld [vmem:[%s1 + $0x318] sm:$0xff]
  %v166 = vld [vmem:[%s1 + $0x320] sm:$0xff]
  %v167 = vld [vmem:[%s1 + $0x328] sm:$0xff]
  %v168 = vld [vmem:[%s1 + $0x330] sm:$0xff]
  %v169 = vld [vmem:[%s1 + $0x338] sm:$0xff]
  %v170 = vld [vmem:[%s1 + $0x340] sm:$0xff]
  %v171 = vld [vmem:[%s1 + $0x348] sm:$0xff]
  %v172 = vld [vmem:[%s1 + $0x350] sm:$0xff]
  %v173 = vld [vmem:[%s1 + $0x358] sm:$0xff]
  %v174 = vld [vmem:[%s1 + $0x360] sm:$0xff]
  %v175 = vld [vmem:[%s1 + $0x368] sm:$0xff]
  %v176 = vld [vmem:[%s1 + $0x370] sm:$0xff]
  %v177 = vld [vmem:[%s1 + $0x378] sm:$0xff]
  %v178 = vld [vmem:[%s1 + $0x380] sm:$0xff]
  %v179 = vld [vmem:[%s1 + $0x388] sm:$0xff]
  %v180 = vld [vmem:[%s1 + $0x390] sm:$0xff]
  %v181 = vld [vmem:[%s1 + $0x398] sm:$0xff]
  %v182 = vld [vmem:[%s1 + $0x3a0] sm:$0xff]
  %v183 = vld [vmem:[%s1 + $0x3a8] sm:$0xff]
  %v184 = vld [vmem:[%s1 + $0x3b0] sm:$0xff]
  %v185 = vld [vmem:[%s1 + $0x3b8] sm:$0xff]
  %v186 = vld [vmem:[%s1 + $0x3c0] sm:$0xff]
  %v187 = vld [vmem:[%s1 + $0x3c8] sm:$0xff]
  %v188 = vld [vmem:[%s1 + $0x3d0] sm:$0xff]
  %v189 = vld [vmem:[%s1 + $0x3d8] sm:$0xff]
  %v190 = vld [vmem:[%s1 + $0x3e0] sm:$0xff]
  %v191 = vld [vmem:[%s1 + $0x3e8] sm:$0xff]
  %v192 = vld [vmem:[%s1 + $0x3f0] sm:$0xff]
  %v193 = vld [vmem:[%s1 + $0x3f8] sm:$0xff]
  %v194 = vld [vmem:[%s2] sm:$0x1]
  %v196 = vlaneseq
  %v197 = vshrl.u32 %v196, 7
  %v198 = vsub.s32 0, %v197
  %v199 = vrot.slane %v194, %v198
  %201 = vmatprep.subr.mxu0 0.0
  %202 = vmatpush1.msra.mxu0 %v81
  %203 = vmatprep.subr.mxu0 0.0
  %204 = vmatpush1.msra.mxu0 %v80
  %205 = vmatprep.subr.mxu0 0.0
  %206 = vmatpush1.msra.mxu0 %v79
  %207 = vmatprep.subr.mxu0 0.0
  %208 = vmatpush1.msra.mxu0 %v78
  %209 = vmatprep.subr.mxu0 0.0
  %210 = vmatpush1.msra.mxu0 %v77
  %211 = vmatprep.subr.mxu0 0.0
  %212 = vmatpush1.msra.mxu0 %v76
  %213 = vmatprep.subr.mxu0 0.0
  %214 = vmatpush1.msra.mxu0 %v75
  %215 = vmatprep.subr.mxu0 0.0
  %216 = vmatpush1.msra.mxu0 %v74
  %217 = vmatprep.subr.mxu0 0.0
  %218 = vmatpush1.msra.mxu0 %v73
  %219 = vmatprep.subr.mxu0 0.0
  %220 = vmatpush1.msra.mxu0 %v72
  %221 = vmatprep.subr.mxu0 0.0
  %222 = vmatpush1.msra.mxu0 %v71
  %223 = vmatprep.subr.mxu0 0.0
  %224 = vmatpush1.msra.mxu0 %v70
  %225 = vmatprep.subr.mxu0 0.0
  %226 = vmatpush1.msra.mxu0 %v69
  %227 = vmatprep.subr.mxu0 0.0
  %228 = vmatpush1.msra.mxu0 %v68
  %229 = vmatprep.subr.mxu0 0.0
  %230 = vmatpush1.msra.mxu0 %v67
  %231 = vmatprep.subr.mxu0 0.0
  %232 = vmatpush1.msra.mxu0 %v66
  %233 = vmatprep.subr.mxu0 0.0
  %234 = vmatpush2.msra.mxu0 %v97
  %235 = vmatprep.subr.mxu0 0.0
  %236 = vmatpush2.msra.mxu0 %v96
  %237 = vmatprep.subr.mxu0 0.0
  %238 = vmatpush2.msra.mxu0 %v95
  %239 = vmatprep.subr.mxu0 0.0
  %240 = vmatpush2.msra.mxu0 %v94
  %241 = vmatprep.subr.mxu0 0.0
  %242 = vmatpush2.msra.mxu0 %v93
  %243 = vmatprep.subr.mxu0 0.0
  %244 = vmatpush2.msra.mxu0 %v92
  %245 = vmatprep.subr.mxu0 0.0
  %246 = vmatpush2.msra.mxu0 %v91
  %247 = vmatprep.subr.mxu0 0.0
  %248 = vmatpush2.msra.mxu0 %v90
  %249 = vmatprep.subr.mxu0 0.0
  %250 = vmatpush2.msra.mxu0 %v89
  %251 = vmatprep.subr.mxu0 0.0
  %252 = vmatpush2.msra.mxu0 %v88
  %253 = vmatprep.subr.mxu0 0.0
  %254 = vmatpush2.msra.mxu0 %v87
  %255 = vmatprep.subr.mxu0 0.0
  %256 = vmatpush2.msra.mxu0 %v86
  %257 = vmatprep.subr.mxu0 0.0
  %258 = vmatpush2.msra.mxu0 %v85
  %259 = vmatprep.subr.mxu0 0.0
  %260 = vmatpush2.msra.mxu0 %v84
  %261 = vmatprep.subr.mxu0 0.0
  %262 = vmatpush2.msra.mxu0 %v83
  %263 = vmatprep.subr.mxu0 0.0
  %264 = vmatpush2.msra.mxu0 %v82
  %265 = vmatprep.mubr.f32.mxu0 %v51
  %266 = vmatmul.mubr.f32.gmra.mxu0 %v50
  %v267 = vpop.f32.mrf.mxu0
  %v268 = vadd.f32 %v199, %v267
  %v269 = vpop.f32.mrf.mxu0
  %270 = vmatprep.mubr.f32.mxu0 %v59
  %271 = vmatmul.mubr.f32.gmra.mxu0 %v58
  %v272 = vpop.f32.mrf.mxu0
  %v273 = vadd.f32 %v199, %v272
  %v274 = vpop.f32.mrf.mxu0
  %275 = vdwg.mxu0
  %276 = vmatprep.subr.mxu0 0.0
  %277 = vmatpush1.msra.mxu0 %v113
  %278 = vmatprep.subr.mxu0 0.0
  %279 = vmatpush1.msra.mxu0 %v112
  %280 = vmatprep.subr.mxu0 0.0
  %281 = vmatpush1.msra.mxu0 %v111
  %282 = vmatprep.subr.mxu0 0.0
  %283 = vmatpush1.msra.mxu0 %v110
  %284 = vmatprep.subr.mxu0 0.0
  %285 = vmatpush1.msra.mxu0 %v109
  %286 = vmatprep.subr.mxu0 0.0
  %287 = vmatpush1.msra.mxu0 %v108
  %288 = vmatprep.subr.mxu0 0.0
  %289 = vmatpush1.msra.mxu0 %v107
  %290 = vmatprep.subr.mxu0 0.0
  %291 = vmatpush1.msra.mxu0 %v106
  %292 = vmatprep.subr.mxu0 0.0
  %293 = vmatpush1.msra.mxu0 %v105
  %294 = vmatprep.subr.mxu0 0.0
  %295 = vmatpush1.msra.mxu0 %v104
  %296 = vmatprep.subr.mxu0 0.0
  %297 = vmatpush1.msra.mxu0 %v103
  %298 = vmatprep.subr.mxu0 0.0
  %299 = vmatpush1.msra.mxu0 %v102
  %300 = vmatprep.subr.mxu0 0.0
  %301 = vmatpush1.msra.mxu0 %v101
  %302 = vmatprep.subr.mxu0 0.0
  %303 = vmatpush1.msra.mxu0 %v100
  %304 = vmatprep.subr.mxu0 0.0
  %305 = vmatpush1.msra.mxu0 %v99
  %306 = vmatprep.subr.mxu0 0.0
  %307 = vmatpush1.msra.mxu0 %v98
  %308 = vmatprep.subr.mxu0 0.0
  %309 = vmatpush2.msra.mxu0 %v129
  %310 = vmatprep.subr.mxu0 0.0
  %311 = vmatpush2.msra.mxu0 %v128
  %312 = vmatprep.subr.mxu0 0.0
  %313 = vmatpush2.msra.mxu0 %v127
  %314 = vmatprep.subr.mxu0 0.0
  %315 = vmatpush2.msra.mxu0 %v126
  %316 = vmatprep.subr.mxu0 0.0
  %317 = vmatpush2.msra.mxu0 %v125
  %318 = vmatprep.subr.mxu0 0.0
  %319 = vmatpush2.msra.mxu0 %v124
  %320 = vmatprep.subr.mxu0 0.0
  %321 = vmatpush2.msra.mxu0 %v123
  %322 = vmatprep.subr.mxu0 0.0
  %323 = vmatpush2.msra.mxu0 %v122
  %324 = vmatprep.subr.mxu0 0.0
  %325 = vmatpush2.msra.mxu0 %v121
  %326 = vmatprep.subr.mxu0 0.0
  %327 = vmatpush2.msra.mxu0 %v120
  %328 = vmatprep.subr.mxu0 0.0
  %329 = vmatpush2.msra.mxu0 %v119
  %330 = vmatprep.subr.mxu0 0.0
  %331 = vmatpush2.msra.mxu0 %v118
  %332 = vmatprep.subr.mxu0 0.0
  %333 = vmatpush2.msra.mxu0 %v117
  %334 = vmatprep.subr.mxu0 0.0
  %335 = vmatpush2.msra.mxu0 %v116
  %336 = vmatprep.subr.mxu0 0.0
  %337 = vmatpush2.msra.mxu0 %v115
  %338 = vmatprep.subr.mxu0 0.0
  %339 = vmatpush2.msra.mxu0 %v114
  %340 = vmatprep.mubr.f32.mxu0 %v53
  %341 = vmatmul.mubr.f32.gmra.mxu0 %v52
  %v342 = vpop.f32.mrf.mxu0
  %v343 = vadd.f32 %v268, %v342
  %v344 = vpop.f32.mrf.mxu0
  %345 = vmatprep.mubr.f32.mxu0 %v61
  %346 = vmatmul.mubr.f32.gmra.mxu0 %v60
  %v347 = vpop.f32.mrf.mxu0
  %v348 = vadd.f32 %v273, %v347
  %v349 = vpop.f32.mrf.mxu0
  %350 = vdwg.mxu0
  %351 = vmatprep.subr.mxu0 0.0
  %352 = vmatpush1.msra.mxu0 %v145
  %353 = vmatprep.subr.mxu0 0.0
  %354 = vmatpush1.msra.mxu0 %v144
  %355 = vmatprep.subr.mxu0 0.0
  %356 = vmatpush1.msra.mxu0 %v143
  %357 = vmatprep.subr.mxu0 0.0
  %358 = vmatpush1.msra.mxu0 %v142
  %359 = vmatprep.subr.mxu0 0.0
  %360 = vmatpush1.msra.mxu0 %v141
  %361 = vmatprep.subr.mxu0 0.0
  %362 = vmatpush1.msra.mxu0 %v140
  %363 = vmatprep.subr.mxu0 0.0
  %364 = vmatpush1.msra.mxu0 %v139
  %365 = vmatprep.subr.mxu0 0.0
  %366 = vmatpush1.msra.mxu0 %v138
  %367 = vmatprep.subr.mxu0 0.0
  %368 = vmatpush1.msra.mxu0 %v137
  %369 = vmatprep.subr.mxu0 0.0
  %370 = vmatpush1.msra.mxu0 %v136
  %371 = vmatprep.subr.mxu0 0.0
  %372 = vmatpush1.msra.mxu0 %v135
  %373 = vmatprep.subr.mxu0 0.0
  %374 = vmatpush1.msra.mxu0 %v134
  %375 = vmatprep.subr.mxu0 0.0
  %376 = vmatpush1.msra.mxu0 %v133
  %377 = vmatprep.subr.mxu0 0.0
  %378 = vmatpush1.msra.mxu0 %v132
  %379 = vmatprep.subr.mxu0 0.0
  %380 = vmatpush1.msra.mxu0 %v131
  %381 = vmatprep.subr.mxu0 0.0
  %382 = vmatpush1.msra.mxu0 %v130
  %383 = vmatprep.subr.mxu0 0.0
  %384 = vmatpush2.msra.mxu0 %v161
  %385 = vmatprep.subr.mxu0 0.0
  %386 = vmatpush2.msra.mxu0 %v160
  %387 = vmatprep.subr.mxu0 0.0
  %388 = vmatpush2.msra.mxu0 %v159
  %389 = vmatprep.subr.mxu0 0.0
  %390 = vmatpush2.msra.mxu0 %v158
  %391 = vmatprep.subr.mxu0 0.0
  %392 = vmatpush2.msra.mxu0 %v157
  %393 = vmatprep.subr.mxu0 0.0
  %394 = vmatpush2.msra.mxu0 %v156
  %395 = vmatprep.subr.mxu0 0.0
  %396 = vmatpush2.msra.mxu0 %v155
  %397 = vmatprep.subr.mxu0 0.0
  %398 = vmatpush2.msra.mxu0 %v154
  %399 = vmatprep.subr.mxu0 0.0
  %400 = vmatpush2.msra.mxu0 %v153
  %401 = vmatprep.subr.mxu0 0.0
  %402 = vmatpush2.msra.mxu0 %v152
  %403 = vmatprep.subr.mxu0 0.0
  %404 = vmatpush2.msra.mxu0 %v151
  %405 = vmatprep.subr.mxu0 0.0
  %406 = vmatpush2.msra.mxu0 %v150
  %407 = vmatprep.subr.mxu0 0.0
  %408 = vmatpush2.msra.mxu0 %v149
  %409 = vmatprep.subr.mxu0 0.0
  %410 = vmatpush2.msra.mxu0 %v148
  %411 = vmatprep.subr.mxu0 0.0
  %412 = vmatpush2.msra.mxu0 %v147
  %413 = vmatprep.subr.mxu0 0.0
  %414 = vmatpush2.msra.mxu0 %v146
  %415 = vmatprep.mubr.f32.mxu0 %v55
  %416 = vmatmul.mubr.f32.gmra.mxu0 %v54
  %v417 = vpop.f32.mrf.mxu0
  %v418 = vadd.f32 %v343, %v417
  %v419 = vpop.f32.mrf.mxu0
  %420 = vmatprep.mubr.f32.mxu0 %v63
  %421 = vmatmul.mubr.f32.gmra.mxu0 %v62
  %v422 = vpop.f32.mrf.mxu0
  %v423 = vadd.f32 %v348, %v422
  %v424 = vpop.f32.mrf.mxu0
  %425 = vdwg.mxu0
  %426 = vmatprep.subr.mxu0 0.0
  %427 = vmatpush1.msra.mxu0 %v177
  %428 = vmatprep.subr.mxu0 0.0
  %429 = vmatpush1.msra.mxu0 %v176
  %430 = vmatprep.subr.mxu0 0.0
  %431 = vmatpush1.msra.mxu0 %v175
  %432 = vmatprep.subr.mxu0 0.0
  %433 = vmatpush1.msra.mxu0 %v174
  %434 = vmatprep.subr.mxu0 0.0
  %435 = vmatpush1.msra.mxu0 %v173
  %436 = vmatprep.subr.mxu0 0.0
  %437 = vmatpush1.msra.mxu0 %v172
  %438 = vmatprep.subr.mxu0 0.0
  %439 = vmatpush1.msra.mxu0 %v171
  %440 = vmatprep.subr.mxu0 0.0
  %441 = vmatpush1.msra.mxu0 %v170
  %442 = vmatprep.subr.mxu0 0.0
  %443 = vmatpush1.msra.mxu0 %v169
  %444 = vmatprep.subr.mxu0 0.0
  %445 = vmatpush1.msra.mxu0 %v168
  %446 = vmatprep.subr.mxu0 0.0
  %447 = vmatpush1.msra.mxu0 %v167
  %448 = vmatprep.subr.mxu0 0.0
  %449 = vmatpush1.msra.mxu0 %v166
  %450 = vmatprep.subr.mxu0 0.0
  %451 = vmatpush1.msra.mxu0 %v165
  %452 = vmatprep.subr.mxu0 0.0
  %453 = vmatpush1.msra.mxu0 %v164
  %454 = vmatprep.subr.mxu0 0.0
  %455 = vmatpush1.msra.mxu0 %v163
  %456 = vmatprep.subr.mxu0 0.0
  %457 = vmatpush1.msra.mxu0 %v162
  %458 = vmatprep.subr.mxu0 0.0
  %459 = vmatpush2.msra.mxu0 %v193
  %460 = vmatprep.subr.mxu0 0.0
  %461 = vmatpush2.msra.mxu0 %v192
  %462 = vmatprep.subr.mxu0 0.0
  %463 = vmatpush2.msra.mxu0 %v191
  %464 = vmatprep.subr.mxu0 0.0
  %465 = vmatpush2.msra.mxu0 %v190
  %466 = vmatprep.subr.mxu0 0.0
  %467 = vmatpush2.msra.mxu0 %v189
  %468 = vmatprep.subr.mxu0 0.0
  %469 = vmatpush2.msra.mxu0 %v188
  %470 = vmatprep.subr.mxu0 0.0
  %471 = vmatpush2.msra.mxu0 %v187
  %472 = vmatprep.subr.mxu0 0.0
  %473 = vmatpush2.msra.mxu0 %v186
  %474 = vmatprep.subr.mxu0 0.0
  %475 = vmatpush2.msra.mxu0 %v185
  %476 = vmatprep.subr.mxu0 0.0
  %477 = vmatpush2.msra.mxu0 %v184
  %478 = vmatprep.subr.mxu0 0.0
  %479 = vmatpush2.msra.mxu0 %v183
  %480 = vmatprep.subr.mxu0 0.0
  %481 = vmatpush2.msra.mxu0 %v182
  %482 = vmatprep.subr.mxu0 0.0
  %483 = vmatpush2.msra.mxu0 %v181
  %484 = vmatprep.subr.mxu0 0.0
  %485 = vmatpush2.msra.mxu0 %v180
  %486 = vmatprep.subr.mxu0 0.0
  %487 = vmatpush2.msra.mxu0 %v179
  %488 = vmatprep.subr.mxu0 0.0
  %489 = vmatpush2.msra.mxu0 %v178
  %490 = vmatprep.mubr.f32.mxu0 %v57
  %491 = vmatmul.mubr.f32.gmra.mxu0 %v56
  %v492 = vpop.f32.mrf.mxu0
  %v493 = vadd.f32 %v418, %v492
  %v494 = vpop.f32.mrf.mxu0
  %495 = vmatprep.mubr.f32.mxu0 %v65
  %496 = vmatmul.mubr.f32.gmra.mxu0 %v64
  %v497 = vpop.f32.mrf.mxu0
  %v498 = vadd.f32 %v423, %v497
  %v499 = vpop.f32.mrf.mxu0
  %500 = vdwg.mxu0
  %v501 = vld [vmem:[%s3] sm:$0xff]
  %v502 = vld [vmem:[%s3 + $0x8] sm:$0xff]
  %v503 = vld [vmem:[%s3 + $0x10] sm:$0xff]
  %v504 = vld [vmem:[%s3 + $0x18] sm:$0xff]
  %v505 = vld [vmem:[%s3 + $0x20] sm:$0xff]
  %v506 = vld [vmem:[%s3 + $0x28] sm:$0xff]
  %v507 = vld [vmem:[%s3 + $0x30] sm:$0xff]
  %v508 = vld [vmem:[%s3 + $0x38] sm:$0xff]
  %v509 = vld [vmem:[%s3 + $0x40] sm:$0xff]
  %v510 = vld [vmem:[%s3 + $0x48] sm:$0xff]
  %v511 = vld [vmem:[%s3 + $0x50] sm:$0xff]
  %v512 = vld [vmem:[%s3 + $0x58] sm:$0xff]
  %v513 = vld [vmem:[%s3 + $0x60] sm:$0xff]
  %v514 = vld [vmem:[%s3 + $0x68] sm:$0xff]
  %v515 = vld [vmem:[%s3 + $0x70] sm:$0xff]
  %v516 = vld [vmem:[%s3 + $0x78] sm:$0xff]
  %v517 = vld [vmem:[%s4] sm:$0x1]
  %v519 = vlaneseq
  %v520 = vshrl.u32 %v519, 7
  %v521 = vsub.s32 0, %v520
  %v522 = vrot.slane %v517, %v521
  %524 = vmatprep.subr.mxu0 0.0
  %525 = vmatpush1.msra.mxu0 %v516
  %526 = vmatprep.subr.mxu0 0.0
  %527 = vmatpush1.msra.mxu0 %v515
  %528 = vmatprep.subr.mxu0 0.0
  %529 = vmatpush1.msra.mxu0 %v514
  %530 = vmatprep.subr.mxu0 0.0
  %531 = vmatpush1.msra.mxu0 %v513
  %532 = vmatprep.subr.mxu0 0.0
  %533 = vmatpush1.msra.mxu0 %v512
  %534 = vmatprep.subr.mxu0 0.0
  %535 = vmatpush1.msra.mxu0 %v511
  %536 = vmatprep.subr.mxu0 0.0
  %537 = vmatpush1.msra.mxu0 %v510
  %538 = vmatprep.subr.mxu0 0.0
  %539 = vmatpush1.msra.mxu0 %v509
  %540 = vmatprep.subr.mxu0 0.0
  %541 = vmatpush1.msra.mxu0 %v508
  %542 = vmatprep.subr.mxu0 0.0
  %543 = vmatpush1.msra.mxu0 %v507
  %544 = vmatprep.subr.mxu0 0.0
  %545 = vmatpush1.msra.mxu0 %v506
  %546 = vmatprep.subr.mxu0 0.0
  %547 = vmatpush1.msra.mxu0 %v505
  %548 = vmatprep.subr.mxu0 0.0
  %549 = vmatpush1.msra.mxu0 %v504
  %550 = vmatprep.subr.mxu0 0.0
  %551 = vmatpush1.msra.mxu0 %v503
  %552 = vmatprep.subr.mxu0 0.0
  %553 = vmatpush1.msra.mxu0 %v502
  %554 = vmatprep.subr.mxu0 0.0
  %555 = vmatpush1.msra.mxu0 %v501
  %556 = vmatprep.subr.mxu0 0.0
  %557 = vmatpush2.msra.mxu0 0.0
  %558 = vmatprep.subr.mxu0 0.0
  %559 = vmatpush2.msra.mxu0 0.0
  %560 = vmatprep.subr.mxu0 0.0
  %561 = vmatpush2.msra.mxu0 0.0
  %562 = vmatprep.subr.mxu0 0.0
  %563 = vmatpush2.msra.mxu0 0.0
  %564 = vmatprep.subr.mxu0 0.0
  %565 = vmatpush2.msra.mxu0 0.0
  %566 = vmatprep.subr.mxu0 0.0
  %567 = vmatpush2.msra.mxu0 0.0
  %568 = vmatprep.subr.mxu0 0.0
  %569 = vmatpush2.msra.mxu0 0.0
  %570 = vmatprep.subr.mxu0 0.0
  %571 = vmatpush2.msra.mxu0 0.0
  %572 = vmatprep.subr.mxu0 0.0
  %573 = vmatpush2.msra.mxu0 0.0
  %574 = vmatprep.subr.mxu0 0.0
  %575 = vmatpush2.msra.mxu0 0.0
  %576 = vmatprep.subr.mxu0 0.0
  %577 = vmatpush2.msra.mxu0 0.0
  %578 = vmatprep.subr.mxu0 0.0
  %579 = vmatpush2.msra.mxu0 0.0
  %580 = vmatprep.subr.mxu0 0.0
  %581 = vmatpush2.msra.mxu0 0.0
  %582 = vmatprep.subr.mxu0 0.0
  %583 = vmatpush2.msra.mxu0 0.0
  %584 = vmatprep.subr.mxu0 0.0
  %585 = vmatpush2.msra.mxu0 0.0
  %586 = vmatprep.subr.mxu0 0.0
  %587 = vmatpush2.msra.mxu0 0.0
  %588 = vmatprep.mubr.f32.mxu0 0.0
  %589 = vmatmul.mubr.f32.gmra.mxu0 %v493
  %v590 = vpop.f32.mrf.mxu0
  %v591 = vadd.f32 %v522, %v590
  %v592 = vpop.f32.mrf.mxu0
  %593 = vmatprep.mubr.f32.mxu0 0.0
  %594 = vmatmul.mubr.f32.gmra.mxu0 %v498
  %v595 = vpop.f32.mrf.mxu0
  %v596 = vadd.f32 %v522, %v595
  %v597 = vpop.f32.mrf.mxu0
  %598 = vdwg.mxu0
  %v599 = vld [vmem:[%s5] sm:$0x1]
  %v600 = vld [vmem:[%s6] sm:$0x1]
  %v601 = vrot.slane %v591, 4
  %v602 = vadd.f32 %v591, %v601
  %v603 = vrot.slane %v602, 2
  %v604 = vadd.f32 %v602, %v603
  %v605 = vrot.slane %v604, 1
  %v606 = vadd.f32 %v604, %v605
  %v607 = vrcp.pop 8.0
  %v608 = vmul.f32 %v606, %v607
  %v609 = vmul.f32 %v591, %v591
  %v610 = vrot.slane %v609, 4
  %v611 = vadd.f32 %v609, %v610
  %v612 = vrot.slane %v611, 2
  %v613 = vadd.f32 %v611, %v612
  %v614 = vrot.slane %v613, 1
  %v615 = vadd.f32 %v613, %v614
  %v616 = vmul.f32 %v615, %v607
  %v617 = vmul.f32 %v608, %v608
  %v618 = vsub.f32 %v616, %v617
  %v619 = vmax.f32 %v618, 0.0
  %v620 = vsub.f32 %v591, %v608
  %v621 = vadd.f32 %v619, 1e-05
  %v622 = vrsqrt.pop %v621
  %v623 = vmul.f32 %v620, %v622
  %v625 = vlaneseq
  %v626 = vshrl.u32 %v625, 7
  %v627 = vsub.s32 0, %v626
  %v628 = vrot.slane %v599, %v627
  %v630 = vmul.f32 %v623, %v628
  %v632 = vlaneseq
  %v633 = vshrl.u32 %v632, 7
  %v634 = vsub.s32 0, %v633
  %v635 = vrot.slane %v600, %v634
  %v637 = vadd.f32 %v630, %v635
  %v638 = vmax.f32 %v637, 0.0
  %v639 = vrot.slane %v596, 4
  %v640 = vadd.f32 %v596, %v639
  %v641 = vrot.slane %v640, 2
  %v642 = vadd.f32 %v640, %v641
  %v643 = vrot.slane %v642, 1
  %v644 = vadd.f32 %v642, %v643
  %v645 = vmul.f32 %v644, %v607
  %v646 = vmul.f32 %v596, %v596
  %v647 = vrot.slane %v646, 4
  %v648 = vadd.f32 %v646, %v647
  %v649 = vrot.slane %v648, 2
  %v650 = vadd.f32 %v648, %v649
  %v651 = vrot.slane %v650, 1
  %v652 = vadd.f32 %v650, %v651
  %v653 = vmul.f32 %v652, %v607
  %v654 = vmul.f32 %v645, %v645
  %v655 = vsub.f32 %v653, %v654
  %v656 = vmax.f32 %v655, 0.0
  %v657 = vsub.f32 %v596, %v645
  %v658 = vadd.f32 %v656, 1e-05
  %v659 = vrsqrt.pop %v658
  %v660 = vmul.f32 %v657, %v659
  %v661 = vmul.f32 %v660, %v628
  %v662 = vadd.f32 %v661, %v635
  %v663 = vmax.f32 %v662, 0.0
  %v664 = vld [vmem:[%s7] sm:$0xff]
  %v665 = vld [vmem:[%s7 + $0x8] sm:$0xff]
  %v666 = vld [vmem:[%s7 + $0x10] sm:$0xff]
  %v667 = vld [vmem:[%s7 + $0x18] sm:$0xff]
  %v668 = vld [vmem:[%s7 + $0x20] sm:$0xff]
  %v669 = vld [vmem:[%s7 + $0x28] sm:$0xff]
  %v670 = vld [vmem:[%s7 + $0x30] sm:$0xff]
  %v671 = vld [vmem:[%s7 + $0x38] sm:$0xff]
  %v672 = vld [vmem:[%s7 + $0x40] sm:$0xff]
  %v673 = vld [vmem:[%s7 + $0x48] sm:$0xff]
  %v674 = vld [vmem:[%s7 + $0x50] sm:$0xff]
  %v675 = vld [vmem:[%s7 + $0x58] sm:$0xff]
  %v676 = vld [vmem:[%s7 + $0x60] sm:$0xff]
  %v677 = vld [vmem:[%s7 + $0x68] sm:$0xff]
  %v678 = vld [vmem:[%s7 + $0x70] sm:$0xff]
  %v679 = vld [vmem:[%s7 + $0x78] sm:$0xff]
  %v680 = vld [vmem:[%s8] sm:$0x1]
  %v682 = vlaneseq
  %v683 = vshrl.u32 %v682, 7
  %v684 = vsub.s32 0, %v683
  %v685 = vrot.slane %v680, %v684
  %687 = vmatprep.subr.mxu0 0.0
  %688 = vmatpush1.msra.mxu0 %v679
  %689 = vmatprep.subr.mxu0 0.0
  %690 = vmatpush1.msra.mxu0 %v678
  %691 = vmatprep.subr.mxu0 0.0
  %692 = vmatpush1.msra.mxu0 %v677
  %693 = vmatprep.subr.mxu0 0.0
  %694 = vmatpush1.msra.mxu0 %v676
  %695 = vmatprep.subr.mxu0 0.0
  %696 = vmatpush1.msra.mxu0 %v675
  %697 = vmatprep.subr.mxu0 0.0
  %698 = vmatpush1.msra.mxu0 %v674
  %699 = vmatprep.subr.mxu0 0.0
  %700 = vmatpush1.msra.mxu0 %v673
  %701 = vmatprep.subr.mxu0 0.0
  %702 = vmatpush1.msra.mxu0 %v672
  %703 = vmatprep.subr.mxu0 0.0
  %704 = vmatpush1.msra.mxu0 %v671
  %705 = vmatprep.subr.mxu0 0.0
  %706 = vmatpush1.msra.mxu0 %v670
  %707 = vmatprep.subr.mxu0 0.0
  %708 = vmatpush1.msra.mxu0 %v669
  %709 = vmatprep.subr.mxu0 0.0
  %710 = vmatpush1.msra.mxu0 %v668
  %711 = vmatprep.subr.mxu0 0.0
  %712 = vmatpush1.msra.mxu0 %v667
  %713 = vmatprep.subr.mxu0 0.0
  %714 = vmatpush1.msra.mxu0 %v666
  %715 = vmatprep.subr.mxu0 0.0
  %716 = vmatpush1.msra.mxu0 %v665
  %717 = vmatprep.subr.mxu0 0.0
  %718 = vmatpush1.msra.mxu0 %v664
  %719 = vmatprep.subr.mxu0 0.0
  %720 = vmatpush2.msra.mxu0 0.0
  %721 = vmatprep.subr.mxu0 0.0
  %722 = vmatpush2.msra.mxu0 0.0
  %723 = vmatprep.subr.mxu0 0.0
  %724 = vmatpush2.msra.mxu0 0.0
  %725 = vmatprep.subr.mxu0 0.0
  %726 = vmatpush2.msra.mxu0 0.0
  %727 = vmatprep.subr.mxu0 0.0
  %728 = vmatpush2.msra.mxu0 0.0
  %729 = vmatprep.subr.mxu0 0.0
  %730 = vmatpush2.msra.mxu0 0.0
  %731 = vmatprep.subr.mxu0 0.0
  %732 = vmatpush2.msra.mxu0 0.0
  %733 = vmatprep.subr.mxu0 0.0
  %734 = vmatpush2.msra.mxu0 0.0
  %735 = vmatprep.subr.mxu0 0.0
  %736 = vmatpush2.msra.mxu0 0.0
  %737 = vmatprep.subr.mxu0 0.0
  %738 = vmatpush2.msra.mxu0 0.0
  %739 = vmatprep.subr.mxu0 0.0
  %740 = vmatpush2.msra.mxu0 0.0
  %741 = vmatprep.subr.mxu0 0.0
  %742 = vmatpush2.msra.mxu0 0.0
  %743 = vmatprep.subr.mxu0 0.0
  %744 = vmatpush2.msra.mxu0 0.0
  %745 = vmatprep.subr.mxu0 0.0
  %746 = vmatpush2.msra.mxu0 0.0
  %747 = vmatprep.subr.mxu0 0.0
  %748 = vmatpush2.msra.mxu0 0.0
  %749 = vmatprep.subr.mxu0 0.0
  %750 = vmatpush2.msra.mxu0 0.0
  %751 = vmatprep.mubr.f32.mxu0 0.0
  %752 = vmatmul.mubr.f32.gmra.mxu0 %v638
  %v753 = vpop.f32.mrf.mxu0
  %v754 = vadd.f32 %v685, %v753
  %v755 = vpop.f32.mrf.mxu0
  %756 = vmatprep.mubr.f32.mxu0 0.0
  %757 = vmatmul.mubr.f32.gmra.mxu0 %v663
  %v758 = vpop.f32.mrf.mxu0
  %v759 = vadd.f32 %v685, %v758
  %v760 = vpop.f32.mrf.mxu0
  %761 = vdwg.mxu0
  %v762 = vld [vmem:[%s9] sm:$0xff]
  %v763 = vld [vmem:[%s9 + $0x8] sm:$0xff]
  %v764 = vld [vmem:[%s9 + $0x10] sm:$0xff]
  %v765 = vld [vmem:[%s9 + $0x18] sm:$0xff]
  %v766 = vld [vmem:[%s9 + $0x20] sm:$0xff]
  %v767 = vld [vmem:[%s9 + $0x28] sm:$0xff]
  %v768 = vld [vmem:[%s9 + $0x30] sm:$0xff]
  %v769 = vld [vmem:[%s9 + $0x38] sm:$0xff]
  %v770 = vld [vmem:[%s9 + $0x40] sm:$0xff]
  %v771 = vld [vmem:[%s9 + $0x48] sm:$0xff]
  %v772 = vld [vmem:[%s9 + $0x50] sm:$0xff]
  %v773 = vld [vmem:[%s9 + $0x58] sm:$0xff]
  %v774 = vld [vmem:[%s9 + $0x60] sm:$0xff]
  %v775 = vld [vmem:[%s9 + $0x68] sm:$0xff]
  %v776 = vld [vmem:[%s9 + $0x70] sm:$0xff]
  %v777 = vld [vmem:[%s9 + $0x78] sm:$0xff]
  %v778 = vld [vmem:[%s10] sm:$0x1]
  %v780 = vlaneseq
  %v781 = vshrl.u32 %v780, 7
  %v782 = vsub.s32 0, %v781
  %v783 = vrot.slane %v778, %v782
  %785 = vmatprep.subr.mxu0 0.0
  %786 = vmatpush1.msra.mxu0 %v777
  %787 = vmatprep.subr.mxu0 0.0
  %788 = vmatpush1.msra.mxu0 %v776
  %789 = vmatprep.subr.mxu0 0.0
  %790 = vmatpush1.msra.mxu0 %v775
  %791 = vmatprep.subr.mxu0 0.0
  %792 = vmatpush1.msra.mxu0 %v774
  %793 = vmatprep.subr.mxu0 0.0
  %794 = vmatpush1.msra.mxu0 %v773
  %795 = vmatprep.subr.mxu0 0.0
  %796 = vmatpush1.msra.mxu0 %v772
  %797 = vmatprep.subr.mxu0 0.0
  %798 = vmatpush1.msra.mxu0 %v771
  %799 = vmatprep.subr.mxu0 0.0
  %800 = vmatpush1.msra.mxu0 %v770
  %801 = vmatprep.subr.mxu0 0.0
  %802 = vmatpush1.msra.mxu0 %v769
  %803 = vmatprep.subr.mxu0 0.0
  %804 = vmatpush1.msra.mxu0 %v768
  %805 = vmatprep.subr.mxu0 0.0
  %806 = vmatpush1.msra.mxu0 %v767
  %807 = vmatprep.subr.mxu0 0.0
  %808 = vmatpush1.msra.mxu0 %v766
  %809 = vmatprep.subr.mxu0 0.0
  %810 = vmatpush1.msra.mxu0 %v765
  %811 = vmatprep.subr.mxu0 0.0
  %812 = vmatpush1.msra.mxu0 %v764
  %813 = vmatprep.subr.mxu0 0.0
  %814 = vmatpush1.msra.mxu0 %v763
  %815 = vmatprep.subr.mxu0 0.0
  %816 = vmatpush1.msra.mxu0 %v762
  %817 = vmatprep.subr.mxu0 0.0
  %818 = vmatpush2.msra.mxu0 0.0
  %819 = vmatprep.subr.mxu0 0.0
  %820 = vmatpush2.msra.mxu0 0.0
  %821 = vmatprep.subr.mxu0 0.0
  %822 = vmatpush2.msra.mxu0 0.0
  %823 = vmatprep.subr.mxu0 0.0
  %824 = vmatpush2.msra.mxu0 0.0
  %825 = vmatprep.subr.mxu0 0.0
  %826 = vmatpush2.msra.mxu0 0.0
  %827 = vmatprep.subr.mxu0 0.0
  %828 = vmatpush2.msra.mxu0 0.0
  %829 = vmatprep.subr.mxu0 0.0
  %830 = vmatpush2.msra.mxu0 0.0
  %831 = vmatprep.subr.mxu0 0.0
  %832 = vmatpush2.msra.mxu0 0.0
  %833 = vmatprep.subr.mxu0 0.0
  %834 = vmatpush2.msra.mxu0 0.0
  %835 = vmatprep.subr.mxu0 0.0
  %836 = vmatpush2.msra.mxu0 0.0
  %837 = vmatprep.subr.mxu0 0.0
  %838 = vmatpush2.msra.mxu0 0.0
  %839 = vmatprep.subr.mxu0 0.0
  %840 = vmatpush2.msra.mxu0 0.0
  %841 = vmatprep.subr.mxu0 0.0
  %842 = vmatpush2.msra.mxu0 0.0
  %843 = vmatprep.subr.mxu0 0.0
  %844 = vmatpush2.msra.mxu0 0.0
  %845 = vmatprep.subr.mxu0 0.0
  %846 = vmatpush2.msra.mxu0 0.0
  %847 = vmatprep.subr.mxu0 0.0
  %848 = vmatpush2.msra.mxu0 0.0
  %849 = vmatprep.mubr.f32.mxu0 0.0
  %850 = vmatmul.mubr.f32.gmra.mxu0 %v754
  %v851 = vpop.f32.mrf.mxu0
  %v852 = vadd.f32 %v783, %v851
  %v853 = vpop.f32.mrf.mxu0
  %854 = vmatprep.mubr.f32.mxu0 0.0
  %855 = vmatmul.mubr.f32.gmra.mxu0 %v759
  %v856 = vpop.f32.mrf.mxu0
  %v857 = vadd.f32 %v783, %v856
  %v858 = vpop.f32.mrf.mxu0
  %859 = vdwg.mxu0
  %v860 = vld [vmem:[%s11] sm:$0x1]
  %v861 = vld [vmem:[%s12] sm:$0x1]
  %v862 = vrot.slane %v852, 4
  %v863 = vadd.f32 %v852, %v862
  %v864 = vrot.slane %v863, 2
  %v865 = vadd.f32 %v863, %v864
  %v866 = vrot.slane %v865, 1
  %v867 = vadd.f32 %v865, %v866
  %v868 = vmul.f32 %v867, %v607
  %v869 = vmul.f32 %v852, %v852
  %v870 = vrot.slane %v869, 4
  %v871 = vadd.f32 %v869, %v870
  %v872 = vrot.slane %v871, 2
  %v873 = vadd.f32 %v871, %v872
  %v874 = vrot.slane %v873, 1
  %v875 = vadd.f32 %v873, %v874
  %v876 = vmul.f32 %v875, %v607
  %v877 = vmul.f32 %v868, %v868
  %v878 = vsub.f32 %v876, %v877
  %v879 = vmax.f32 %v878, 0.0
  %v880 = vsub.f32 %v852, %v868
  %v881 = vadd.f32 %v879, 1e-05
  %v882 = vrsqrt.pop %v881
  %v883 = vmul.f32 %v880, %v882
  %v885 = vlaneseq
  %v886 = vshrl.u32 %v885, 7
  %v887 = vsub.s32 0, %v886
  %v888 = vrot.slane %v860, %v887
  %v890 = vmul.f32 %v883, %v888
  %v892 = vlaneseq
  %v893 = vshrl.u32 %v892, 7
  %v894 = vsub.s32 0, %v893
  %v895 = vrot.slane %v861, %v894
  %v897 = vadd.f32 %v890, %v895
  %v898 = vmax.f32 %v897, 0.0
  %v899 = vrot.slane %v857, 4
  %v900 = vadd.f32 %v857, %v899
  %v901 = vrot.slane %v900, 2
  %v902 = vadd.f32 %v900, %v901
  %v903 = vrot.slane %v902, 1
  %v904 = vadd.f32 %v902, %v903
  %v905 = vmul.f32 %v904, %v607
  %v906 = vmul.f32 %v857, %v857
  %v907 = vrot.slane %v906, 4
  %v908 = vadd.f32 %v906, %v907
  %v909 = vrot.slane %v908, 2
  %v910 = vadd.f32 %v908, %v909
  %v911 = vrot.slane %v910, 1
  %v912 = vadd.f32 %v910, %v911
  %v913 = vmul.f32 %v912, %v607
  %v914 = vmul.f32 %v905, %v905
  %v915 = vsub.f32 %v913, %v914
  %v916 = vmax.f32 %v915, 0.0
  %v917 = vsub.f32 %v857, %v905
  %v918 = vadd.f32 %v916, 1e-05
  %v919 = vrsqrt.pop %v918
  %v920 = vmul.f32 %v917, %v919
  %v921 = vmul.f32 %v920, %v888
  %v922 = vadd.f32 %v921, %v895
  %v923 = vmax.f32 %v922, 0.0
  %v924 = vld [vmem:[%s13] sm:$0xff]
  %v925 = vld [vmem:[%s13 + $0x8] sm:$0xff]
  %v926 = vld [vmem:[%s13 + $0x10] sm:$0xff]
  %v927 = vld [vmem:[%s13 + $0x18] sm:$0xff]
  %v928 = vld [vmem:[%s13 + $0x20] sm:$0xff]
  %v929 = vld [vmem:[%s13 + $0x28] sm:$0xff]
  %v930 = vld [vmem:[%s13 + $0x30] sm:$0xff]
  %v931 = vld [vmem:[%s13 + $0x38] sm:$0xff]
  %v932 = vld [vmem:[%s13 + $0x40] sm:$0xff]
  %v933 = vld [vmem:[%s13 + $0x48] sm:$0xff]
  %v934 = vld [vmem:[%s13 + $0x50] sm:$0xff]
  %v935 = vld [vmem:[%s13 + $0x58] sm:$0xff]
  %v936 = vld [vmem:[%s13 + $0x60] sm:$0xff]
  %v937 = vld [vmem:[%s13 + $0x68] sm:$0xff]
  %v938 = vld [vmem:[%s13 + $0x70] sm:$0xff]
  %v939 = vld [vmem:[%s13 + $0x78] sm:$0xff]
  %v940 = vld [vmem:[%s14] sm:$0x1]
  %v942 = vlaneseq
  %v943 = vshrl.u32 %v942, 7
  %v944 = vsub.s32 0, %v943
  %v945 = vrot.slane %v940, %v944
  %947 = vmatprep.subr.mxu0 0.0
  %948 = vmatpush1.msra.mxu0 %v939
  %949 = vmatprep.subr.mxu0 0.0
  %950 = vmatpush1.msra.mxu0 %v938
  %951 = vmatprep.subr.mxu0 0.0
  %952 = vmatpush1.msra.mxu0 %v937
  %953 = vmatprep.subr.mxu0 0.0
  %954 = vmatpush1.msra.mxu0 %v936
  %955 = vmatprep.subr.mxu0 0.0
  %956 = vmatpush1.msra.mxu0 %v935
  %957 = vmatprep.subr.mxu0 0.0
  %958 = vmatpush1.msra.mxu0 %v934
  %959 = vmatprep.subr.mxu0 0.0
  %960 = vmatpush1.msra.mxu0 %v933
  %961 = vmatprep.subr.mxu0 0.0
  %962 = vmatpush1.msra.mxu0 %v932
  %963 = vmatprep.subr.mxu0 0.0
  %964 = vmatpush1.msra.mxu0 %v931
  %965 = vmatprep.subr.mxu0 0.0
  %966 = vmatpush1.msra.mxu0 %v930
  %967 = vmatprep.subr.mxu0 0.0
  %968 = vmatpush1.msra.mxu0 %v929
  %969 = vmatprep.subr.mxu0 0.0
  %970 = vmatpush1.msra.mxu0 %v928
  %971 = vmatprep.subr.mxu0 0.0
  %972 = vmatpush1.msra.mxu0 %v927
  %973 = vmatprep.subr.mxu0 0.0
  %974 = vmatpush1.msra.mxu0 %v926
  %975 = vmatprep.subr.mxu0 0.0
  %976 = vmatpush1.msra.mxu0 %v925
  %977 = vmatprep.subr.mxu0 0.0
  %978 = vmatpush1.msra.mxu0 %v924
  %979 = vmatprep.subr.mxu0 0.0
  %980 = vmatpush2.msra.mxu0 0.0
  %981 = vmatprep.subr.mxu0 0.0
  %982 = vmatpush2.msra.mxu0 0.0
  %983 = vmatprep.subr.mxu0 0.0
  %984 = vmatpush2.msra.mxu0 0.0
  %985 = vmatprep.subr.mxu0 0.0
  %986 = vmatpush2.msra.mxu0 0.0
  %987 = vmatprep.subr.mxu0 0.0
  %988 = vmatpush2.msra.mxu0 0.0
  %989 = vmatprep.subr.mxu0 0.0
  %990 = vmatpush2.msra.mxu0 0.0
  %991 = vmatprep.subr.mxu0 0.0
  %992 = vmatpush2.msra.mxu0 0.0
  %993 = vmatprep.subr.mxu0 0.0
  %994 = vmatpush2.msra.mxu0 0.0
  %995 = vmatprep.subr.mxu0 0.0
  %996 = vmatpush2.msra.mxu0 0.0
  %997 = vmatprep.subr.mxu0 0.0
  %998 = vmatpush2.msra.mxu0 0.0
  %999 = vmatprep.subr.mxu0 0.0
  %1000 = vmatpush2.msra.mxu0 0.0
  %1001 = vmatprep.subr.mxu0 0.0
  %1002 = vmatpush2.msra.mxu0 0.0
  %1003 = vmatprep.subr.mxu0 0.0
  %1004 = vmatpush2.msra.mxu0 0.0
  %1005 = vmatprep.subr.mxu0 0.0
  %1006 = vmatpush2.msra.mxu0 0.0
  %1007 = vmatprep.subr.mxu0 0.0
  %1008 = vmatpush2.msra.mxu0 0.0
  %1009 = vmatprep.subr.mxu0 0.0
  %1010 = vmatpush2.msra.mxu0 0.0
  %1011 = vmatprep.mubr.f32.mxu0 0.0
  %1012 = vmatmul.mubr.f32.gmra.mxu0 %v898
  %v1013 = vpop.f32.mrf.mxu0
  %v1014 = vadd.f32 %v945, %v1013
  %v1015 = vpop.f32.mrf.mxu0
  %1016 = vmatprep.mubr.f32.mxu0 0.0
  %1017 = vmatmul.mubr.f32.gmra.mxu0 %v923
  %v1018 = vpop.f32.mrf.mxu0
  %v1019 = vadd.f32 %v945, %v1018
  %v1020 = vpop.f32.mrf.mxu0
  %1021 = vdwg.mxu0
  %1022 = vst [vmem:[%s15] sm:$0xff] %v1014
  %1023 = vst [vmem:[%s15 + $0x8] sm:$0xff] %v1019
  // Predicated region
  $region62: #{byol_forward.2} parent=0 // pred_check
    _
  $region63: #{byol_forward.2} parent=0 // pred_check_branch
    %1025 = sbr.rel (0) target = $region65
  $region64: #{byol_forward.2} parent=0 // pred_region
    _
  $region65: #{byol_forward.2} parent=0 // pred_fallthru
    _
  // Predicated region
  $region66: #{byol_forward.2} parent=0 // pred_check
    _
  $region67: #{byol_forward.2} parent=0 // pred_check_branch
    %1027 = sbr.rel (0) target = $region69
  $region68: #{byol_forward.2} parent=0 // pred_region
    _
  $region69: #{byol_forward.2} parent=0 // pred_fallthru
    _

// kernel: byol_forward.3
$region0: #{byol_forward.3}
  #allocation0 [shape = 'u32[]', space=smem, size = 0x4, offset = 0x4, fixed_abs, tag = 'smem constant byte address 0x4 - core index']
  #allocation1 [shape = 'u32[144,128]{1,0:T(1,128)}', space=vmem, size = 0x12000, scoped, tag = 'internal scratch']
  %s0 = inlined_call_operand.vmem [shape: f32[16,1024], index: 0, kind: input, shape index: {}]
  %s1 = inlined_call_operand.vmem [shape: f32[1024,128], index: 1, kind: input, shape index: {}]
  %s2 = inlined_call_operand.vmem [shape: f32[1,128], index: 2, kind: input, shape index: {}]
  %s3 = inlined_call_operand.vmem [shape: f32[128,128], index: 3, kind: input, shape index: {}]
  %s4 = inlined_call_operand.vmem [shape: f32[1,128], index: 4, kind: input, shape index: {}]
  %s5 = inlined_call_operand.vmem [shape: f32[1,128], index: 5, kind: input, shape index: {}]
  %s6 = inlined_call_operand.vmem [shape: f32[1,128], index: 6, kind: input, shape index: {}]
  %s7 = inlined_call_operand.vmem [shape: f32[128,128], index: 7, kind: input, shape index: {}]
  %s8 = inlined_call_operand.vmem [shape: f32[1,128], index: 8, kind: input, shape index: {}]
  %s9 = inlined_call_operand.hbm [shape: f32[1024,128], index: 9, kind: input, shape index: {}]
  %s10 = inlined_call_operand.vmem [shape: f32[1,128], index: 10, kind: input, shape index: {}]
  %s11 = inlined_call_operand.vmem [shape: f32[128,128], index: 11, kind: input, shape index: {}]
  %s12 = inlined_call_operand.vmem [shape: f32[1,128], index: 12, kind: input, shape index: {}]
  %s13 = inlined_call_operand.vmem [shape: f32[1,128], index: 13, kind: input, shape index: {}]
  %s14 = inlined_call_operand.vmem [shape: f32[1,128], index: 14, kind: input, shape index: {}]
  %s15 = inlined_call_operand.hbm [shape: f32[128,128], index: 15, kind: input, shape index: {}]
  %s16 = inlined_call_operand.vmem [shape: f32[1,128], index: 16, kind: input, shape index: {}]
  %s17 = inlined_call_operand.vmem [shape: f32[16,128], index: 17, kind: output, shape index: {0}]
  %s18 = inlined_call_operand.hbm [shape: f32[1024,128], index: 18, kind: output, shape index: {1}]
  %s19 = inlined_call_operand.hbm [shape: f32[1,128], index: 19, kind: output, shape index: {2}]
  %s20 = inlined_call_operand.hbm [shape: f32[128,128], index: 20, kind: output, shape index: {3}]
  %s21 = inlined_call_operand.hbm [shape: f32[1,128], index: 21, kind: output, shape index: {4}]
  %s22 = inlined_call_operand.hbm [shape: f32[1,128], index: 22, kind: output, shape index: {5}]
  %s23 = inlined_call_operand.hbm [shape: f32[1,128], index: 23, kind: output, shape index: {6}]
  %s24 = inlined_call_operand.hbm [shape: f32[128,128], index: 24, kind: output, shape index: {7}]
  %s25 = inlined_call_operand.hbm [shape: f32[1,128], index: 25, kind: output, shape index: {8}]
  %26 = xla_tuple %s17, %s18, %s19, %s20, %s21, %s22, %s23, %s24, %s25
  %s27 = sld [smem:[#allocation0]]
  $region150: #{byol_forward.3} parent=0
    _
  %s29 = ssub.s32 1, %s27
  %s30 = scalar_select 0, %s29, %s27
  $region1: #{byol_forward.3} parent=0
    #allocation2 [shape = 'u8[524288]{0}', space=vmem, size = 0x80000, scoped, tag = 'input window, operand 9, single buffered']
    #allocation3 [shape = 's32[1]{0}', space=sflag, size = 0x4, scoped, tag = 'scoped memory for byol_forward.3']
    #allocation4 [shape = 's32[1]{0}', space=sflag, size = 0x4, scoped, tag = 'scoped memory for byol_forward.3']
    #allocation5 [shape = 'u8[65536]{0}', space=vmem, size = 0x10000, scoped, tag = 'input window, operand 15, single buffered']
    #allocation6 [shape = 's32[1]{0}', space=sflag, size = 0x4, scoped, tag = 'scoped memory for byol_forward.3']
    #allocation7 [shape = 'u8[524288]{0}', space=vmem, size = 0x80000, scoped, tag = 'output window, operand 1, single buffered']
    #allocation8 [shape = 'u8[512]{0}', space=vmem, size = 0x400, scoped, tag = 'output window, operand 2, single buffered']
    #allocation9 [shape = 's32[1]{0}', space=sflag, size = 0x4, scoped, tag = 'scoped memory for byol_forward.3']
    #allocation10 [shape = 'u8[65536]{0}', space=vmem, size = 0x10000, scoped, tag = 'output window, operand 3, single buffered']
    #allocation11 [shape = 'u8[512]{0}', space=vmem, size = 0x400, scoped, tag = 'output window, operand 4, single buffered']
    #allocation12 [shape = 's32[1]{0}', space=sflag, size = 0x4, scoped, tag = 'scoped memory for byol_forward.3']
    #allocation13 [shape = 'u8[512]{0}', space=vmem, size = 0x400, scoped, tag = 'output window, operand 5, single buffered']
    #allocation14 [shape = 'u8[512]{0}', space=vmem, size = 0x400, scoped, tag = 'output window, operand 6, single buffered']
    #allocation15 [shape = 's32[1]{0}', space=sflag, size = 0x4, scoped, tag = 'scoped memory for byol_forward.3']
    #allocation16 [shape = 'u8[65536]{0}', space=vmem, size = 0x10000, scoped, tag = 'output window, operand 7, single buffered']
    #allocation17 [shape = 'u8[512]{0}', space=vmem, size = 0x400, scoped, tag = 'output window, operand 8, single buffered']
    #allocation18 [shape = 's32[1]{0}', space=sflag, size = 0x4, scoped, tag = 'scoped memory for byol_forward.3']
    %31 = vsyncpa [#allocation3], 0
    %32 = vsyncpa [#allocation6], 0
    %33 = vsyncpa [#allocation4], 0
    %34 = vsyncpa [#allocation9], 0
    %35 = vsyncpa [#allocation12], 0
    %36 = vsyncpa [#allocation15], 0
    %37 = vsyncpa [#allocation18], 0
    // Predicated region
    $region2: #{byol_forward.3} parent=1 // pred_check
      _
    $region3: #{byol_forward.3} parent=1 // pred_check_branch
      %39 = sbr.rel (0) target = $region5
    $region4: #{byol_forward.3} parent=1 // pred_region
      _
    $region5: #{byol_forward.3} parent=1 // pred_fallthru
      _
    // Predicated region
    $region6: #{byol_forward.3} parent=1 // pred_check
      _
    $region7: #{byol_forward.3} parent=1 // pred_check_branch
      %41 = sbr.rel (0) target = $region9
    $region8: #{byol_forward.3} parent=1 // pred_region
      _
    $region9: #{byol_forward.3} parent=1 // pred_fallthru
      _
    // Predicated region
    $region10: #{byol_forward.3} parent=1 // pred_check
      _
    $region11: #{byol_forward.3} parent=1 // pred_check_branch
      %43 = sbr.rel (0) target = $region13
    $region12: #{byol_forward.3} parent=1 // pred_region
      _
    $region13: #{byol_forward.3} parent=1 // pred_fallthru
      _
    // Predicated region
    $region14: #{byol_forward.3} parent=1 // pred_check
      _
    $region15: #{byol_forward.3} parent=1 // pred_check_branch
      %45 = sbr.rel (0) target = $region17
    $region16: #{byol_forward.3} parent=1 // pred_region
      _
    $region17: #{byol_forward.3} parent=1 // pred_fallthru
      _
    // Predicated region
    $region18: #{byol_forward.3} parent=1 // pred_check
      _
    $region19: #{byol_forward.3} parent=1 // pred_check_branch
      %47 = sbr.rel (0) target = $region21
    $region20: #{byol_forward.3} parent=1 // pred_region
      _
    $region21: #{byol_forward.3} parent=1 // pred_fallthru
      _
    // Predicated region
    $region22: #{byol_forward.3} parent=1 // pred_check
      _
    $region23: #{byol_forward.3} parent=1 // pred_check_branch
      %49 = sbr.rel (0) target = $region25
    $region24: #{byol_forward.3} parent=1 // pred_region
      _
    $region25: #{byol_forward.3} parent=1 // pred_fallthru
      _
    // Predicated region
    $region26: #{byol_forward.3} parent=1 // pred_check
      _
    $region27: #{byol_forward.3} parent=1 // pred_check_branch
      %51 = sbr.rel (0) target = $region29
    $region28: #{byol_forward.3} parent=1 // pred_region
      _
    $region29: #{byol_forward.3} parent=1 // pred_fallthru
      _
    // Predicated region
    $region30: #{byol_forward.3} parent=1 // pred_check
      _
    $region31: #{byol_forward.3} parent=1 // pred_check_branch
      %53 = sbr.rel (0) target = $region33
    $region32: #{byol_forward.3} parent=1 // pred_region
      _
    $region33: #{byol_forward.3} parent=1 // pred_fallthru
      _
    // Predicated region
    $region34: #{byol_forward.3} parent=1 // pred_check
      _
    $region35: #{byol_forward.3} parent=1 // pred_check_branch
      %55 = sbr.rel (0) target = $region37
    $region36: #{byol_forward.3} parent=1 // pred_region
      _
    $region37: #{byol_forward.3} parent=1 // pred_fallthru
      _
    // Predicated region
    $region38: #{byol_forward.3} parent=1 // pred_check
      _
    $region39: #{byol_forward.3} parent=1 // pred_check_branch
      %57 = sbr.rel (0) target = $region41
    $region40: #{byol_forward.3} parent=1 // pred_region
      %s59 = ssub.s32 16384, 16384
      %60 = vsyncadd [#allocation3], %s59
      %s61 = sshll.u32 [#allocation2], 4
      %s62 = int_to_ptr.vmem [resolvable:$true] %s61
      %67 = dma.hbm_to_vmem [thread:$0]  %s9, 16384, %s62, [#allocation3], 128, 128, 8
    $region41: #{byol_forward.3} parent=1 // pred_fallthru
      _
    // Predicated region
    $region42: #{byol_forward.3} parent=1 // pred_check
      _
    $region43: #{byol_forward.3} parent=1 // pred_check_branch
      %69 = sbr.rel (0) target = $region45
    $region44: #{byol_forward.3} parent=1 // pred_region
      _
    $region45: #{byol_forward.3} parent=1 // pred_fallthru
      _
    // Predicated region
    $region46: #{byol_forward.3} parent=1 // pred_check
      _
    $region47: #{byol_forward.3} parent=1 // pred_check_branch
      %71 = sbr.rel (0) target = $region49
    $region48: #{byol_forward.3} parent=1 // pred_region
      _
    $region49: #{byol_forward.3} parent=1 // pred_fallthru
      _
    // Predicated region
    $region50: #{byol_forward.3} parent=1 // pred_check
      _
    $region51: #{byol_forward.3} parent=1 // pred_check_branch
      %73 = sbr.rel (0) target = $region53
    $region52: #{byol_forward.3} parent=1 // pred_region
      _
    $region53: #{byol_forward.3} parent=1 // pred_fallthru
      _
    // Predicated region
    $region54: #{byol_forward.3} parent=1 // pred_check
      _
    $region55: #{byol_forward.3} parent=1 // pred_check_branch
      %75 = sbr.rel (0) target = $region57
    $region56: #{byol_forward.3} parent=1 // pred_region
      _
    $region57: #{byol_forward.3} parent=1 // pred_fallthru
      _
    // Predicated region
    $region58: #{byol_forward.3} parent=1 // pred_check
      _
    $region59: #{byol_forward.3} parent=1 // pred_check_branch
      %77 = sbr.rel (0) target = $region61
    $region60: #{byol_forward.3} parent=1 // pred_region
      _
    $region61: #{byol_forward.3} parent=1 // pred_fallthru
      _
    // Predicated region
    $region62: #{byol_forward.3} parent=1 // pred_check
      _
    $region63: #{byol_forward.3} parent=1 // pred_check_branch
      %79 = sbr.rel (0) target = $region65
    $region64: #{byol_forward.3} parent=1 // pred_region
      %s81 = ssub.s32 2048, 2048
      %82 = vsyncadd [#allocation6], %s81
      %s83 = sshll.u32 [#allocation5], 4
      %s84 = int_to_ptr.vmem [resolvable:$true] %s83
      %89 = dma.hbm_to_vmem [thread:$0]  %s15, 2048, %s84, [#allocation6], 128, 128, 8
    $region65: #{byol_forward.3} parent=1 // pred_fallthru
      _
    // Predicated region
    $region66: #{byol_forward.3} parent=1 // pred_check
      _
    $region67: #{byol_forward.3} parent=1 // pred_check_branch
      %91 = sbr.rel (0) target = $region69
    $region68: #{byol_forward.3} parent=1 // pred_region
      _
    $region69: #{byol_forward.3} parent=1 // pred_fallthru
      _
    // Predicated region
    $region70: #{byol_forward.3} parent=1 // pred_check
      _
    $region71: #{byol_forward.3} parent=1 // pred_check_branch
      %93 = sbr.rel (0) target = $region73
    $region72: #{byol_forward.3} parent=1 // pred_region
      %94 = dma.done [#allocation3], 16384
    $region73: #{byol_forward.3} parent=1 // pred_fallthru
      _
    // Predicated region
    $region74: #{byol_forward.3} parent=1 // pred_check
      _
    $region75: #{byol_forward.3} parent=1 // pred_check_branch
      %96 = sbr.rel (0) target = $region77
    $region76: #{byol_forward.3} parent=1 // pred_region
      %97 = dma.done [#allocation6], 2048
    $region77: #{byol_forward.3} parent=1 // pred_fallthru
      _
    %v98 = vld [vmem:[#allocation2] sm:$0xff]
    %v99 = vld [vmem:[#allocation2 + $0x8] sm:$0xff]
    %v100 = vld [vmem:[#allocation2 + $0x10] sm:$0xff]
    %v101 = vld [vmem:[#allocation2 + $0x18] sm:$0xff]
    %v102 = vld [vmem:[#allocation2 + $0x20] sm:$0xff]
    %v103 = vld [vmem:[#allocation2 + $0x28] sm:$0xff]
    %v104 = vld [vmem:[#allocation2 + $0x30] sm:$0xff]
    %v105 = vld [vmem:[#allocation2 + $0x38] sm:$0xff]
    %v106 = vld [vmem:[#allocation2 + $0x40] sm:$0xff]
    %v107 = vld [vmem:[#allocation2 + $0x48] sm:$0xff]
    %v108 = vld [vmem:[#allocation2 + $0x50] sm:$0xff]
    %v109 = vld [vmem:[#allocation2 + $0x58] sm:$0xff]
    %v110 = vld [vmem:[#allocation2 + $0x60] sm:$0xff]
    %v111 = vld [vmem:[#allocation2 + $0x68] sm:$0xff]
    %v112 = vld [vmem:[#allocation2 + $0x70] sm:$0xff]
    %v113 = vld [vmem:[#allocation2 + $0x78] sm:$0xff]
    %v114 = vld [vmem:[#allocation2 + $0x80] sm:$0xff]
    %v115 = vld [vmem:[#allocation2 + $0x88] sm:$0xff]
    %v116 = vld [vmem:[#allocation2 + $0x90] sm:$0xff]
    %v117 = vld [vmem:[#allocation2 + $0x98] sm:$0xff]
    %v118 = vld [vmem:[#allocation2 + $0xa0] sm:$0xff]
    %v119 = vld [vmem:[#allocation2 + $0xa8] sm:$0xff]
    %v120 = vld [vmem:[#allocation2 + $0xb0] sm:$0xff]
    %v121 = vld [vmem:[#allocation2 + $0xb8] sm:$0xff]
    %v122 = vld [vmem:[#allocation2 + $0xc0] sm:$0xff]
    %v123 = vld [vmem:[#allocation2 + $0xc8] sm:$0xff]
    %v124 = vld [vmem:[#allocation2 + $0xd0] sm:$0xff]
    %v125 = vld [vmem:[#allocation2 + $0xd8] sm:$0xff]
    %v126 = vld [vmem:[#allocation2 + $0xe0] sm:$0xff]
    %v127 = vld [vmem:[#allocation2 + $0xe8] sm:$0xff]
    %v128 = vld [vmem:[#allocation2 + $0xf0] sm:$0xff]
    %v129 = vld [vmem:[#allocation2 + $0xf8] sm:$0xff]
    %v130 = vld [vmem:[#allocation2 + $0x100] sm:$0xff]
    %v131 = vld [vmem:[#allocation2 + $0x108] sm:$0xff]
    %v132 = vld [vmem:[#allocation2 + $0x110] sm:$0xff]
    %v133 = vld [vmem:[#allocation2 + $0x118] sm:$0xff]
    %v134 = vld [vmem:[#allocation2 + $0x120] sm:$0xff]
    %v135 = vld [vmem:[#allocation2 + $0x128] sm:$0xff]
    %v136 = vld [vmem:[#allocation2 + $0x130] sm:$0xff]
    %v137 = vld [vmem:[#allocation2 + $0x138] sm:$0xff]
    %v138 = vld [vmem:[#allocation2 + $0x140] sm:$0xff]
    %v139 = vld [vmem:[#allocation2 + $0x148] sm:$0xff]
    %v140 = vld [vmem:[#allocation2 + $0x150] sm:$0xff]
    %v141 = vld [vmem:[#allocation2 + $0x158] sm:$0xff]
    %v142 = vld [vmem:[#allocation2 + $0x160] sm:$0xff]
    %v143 = vld [vmem:[#allocation2 + $0x168] sm:$0xff]
    %v144 = vld [vmem:[#allocation2 + $0x170] sm:$0xff]
    %v145 = vld [vmem:[#allocation2 + $0x178] sm:$0xff]
    %v146 = vld [vmem:[#allocation2 + $0x180] sm:$0xff]
    %v147 = vld [vmem:[#allocation2 + $0x188] sm:$0xff]
    %v148 = vld [vmem:[#allocation2 + $0x190] sm:$0xff]
    %v149 = vld [vmem:[#allocation2 + $0x198] sm:$0xff]
    %v150 = vld [vmem:[#allocation2 + $0x1a0] sm:$0xff]
    %v151 = vld [vmem:[#allocation2 + $0x1a8] sm:$0xff]
    %v152 = vld [vmem:[#allocation2 + $0x1b0] sm:$0xff]
    %v153 = vld [vmem:[#allocation2 + $0x1b8] sm:$0xff]
    %v154 = vld [vmem:[#allocation2 + $0x1c0] sm:$0xff]
    %v155 = vld [vmem:[#allocation2 + $0x1c8] sm:$0xff]
    %v156 = vld [vmem:[#allocation2 + $0x1d0] sm:$0xff]
    %v157 = vld [vmem:[#allocation2 + $0x1d8] sm:$0xff]
    %v158 = vld [vmem:[#allocation2 + $0x1e0] sm:$0xff]
    %v159 = vld [vmem:[#allocation2 + $0x1e8] sm:$0xff]
    %v160 = vld [vmem:[#allocation2 + $0x1f0] sm:$0xff]
    %v161 = vld [vmem:[#allocation2 + $0x1f8] sm:$0xff]
    %v162 = vld [vmem:[#allocation2 + $0x200] sm:$0xff]
    %v163 = vld [vmem:[#allocation2 + $0x208] sm:$0xff]
    %v164 = vld [vmem:[#allocation2 + $0x210] sm:$0xff]
    %v165 = vld [vmem:[#allocation2 + $0x218] sm:$0xff]
    %v166 = vld [vmem:[#allocation2 + $0x220] sm:$0xff]
    %v167 = vld [vmem:[#allocation2 + $0x228] sm:$0xff]
    %v168 = vld [vmem:[#allocation2 + $0x230] sm:$0xff]
    %v169 = vld [vmem:[#allocation2 + $0x238] sm:$0xff]
    %v170 = vld [vmem:[#allocation2 + $0x240] sm:$0xff]
    %v171 = vld [vmem:[#allocation2 + $0x248] sm:$0xff]
    %v172 = vld [vmem:[#allocation2 + $0x250] sm:$0xff]
    %v173 = vld [vmem:[#allocation2 + $0x258] sm:$0xff]
    %v174 = vld [vmem:[#allocation2 + $0x260] sm:$0xff]
    %v175 = vld [vmem:[#allocation2 + $0x268] sm:$0xff]
    %v176 = vld [vmem:[#allocation2 + $0x270] sm:$0xff]
    %v177 = vld [vmem:[#allocation2 + $0x278] sm:$0xff]
    %v178 = vld [vmem:[#allocation2 + $0x280] sm:$0xff]
    %v179 = vld [vmem:[#allocation2 + $0x288] sm:$0xff]
    %v180 = vld [vmem:[#allocation2 + $0x290] sm:$0xff]
    %v181 = vld [vmem:[#allocation2 + $0x298] sm:$0xff]
    %v182 = vld [vmem:[#allocation2 + $0x2a0] sm:$0xff]
    %v183 = vld [vmem:[#allocation2 + $0x2a8] sm:$0xff]
    %v184 = vld [vmem:[#allocation2 + $0x2b0] sm:$0xff]
    %v185 = vld [vmem:[#allocation2 + $0x2b8] sm:$0xff]
    %v186 = vld [vmem:[#allocation2 + $0x2c0] sm:$0xff]
    %v187 = vld [vmem:[#allocation2 + $0x2c8] sm:$0xff]
    %v188 = vld [vmem:[#allocation2 + $0x2d0] sm:$0xff]
    %v189 = vld [vmem:[#allocation2 + $0x2d8] sm:$0xff]
    %v190 = vld [vmem:[#allocation2 + $0x2e0] sm:$0xff]
    %v191 = vld [vmem:[#allocation2 + $0x2e8] sm:$0xff]
    %v192 = vld [vmem:[#allocation2 + $0x2f0] sm:$0xff]
    %v193 = vld [vmem:[#allocation2 + $0x2f8] sm:$0xff]
    %v194 = vld [vmem:[#allocation2 + $0x300] sm:$0xff]
    %v195 = vld [vmem:[#allocation2 + $0x308] sm:$0xff]
    %v196 = vld [vmem:[#allocation2 + $0x310] sm:$0xff]
    %v197 = vld [vmem:[#allocation2 + $0x318] sm:$0xff]
    %v198 = vld [vmem:[#allocation2 + $0x320] sm:$0xff]
    %v199 = vld [vmem:[#allocation2 + $0x328] sm:$0xff]
    %v200 = vld [vmem:[#allocation2 + $0x330] sm:$0xff]
    %v201 = vld [vmem:[#allocation2 + $0x338] sm:$0xff]
    %v202 = vld [vmem:[#allocation2 + $0x340] sm:$0xff]
    %v203 = vld [vmem:[#allocation2 + $0x348] sm:$0xff]
    %v204 = vld [vmem:[#allocation2 + $0x350] sm:$0xff]
    %v205 = vld [vmem:[#allocation2 + $0x358] sm:$0xff]
    %v206 = vld [vmem:[#allocation2 + $0x360] sm:$0xff]
    %v207 = vld [vmem:[#allocation2 + $0x368] sm:$0xff]
    %v208 = vld [vmem:[#allocation2 + $0x370] sm:$0xff]
    %v209 = vld [vmem:[#allocation2 + $0x378] sm:$0xff]
    %v210 = vld [vmem:[#allocation2 + $0x380] sm:$0xff]
    %v211 = vld [vmem:[#allocation2 + $0x388] sm:$0xff]
    %v212 = vld [vmem:[#allocation2 + $0x390] sm:$0xff]
    %v213 = vld [vmem:[#allocation2 + $0x398] sm:$0xff]
    %v214 = vld [vmem:[#allocation2 + $0x3a0] sm:$0xff]
    %v215 = vld [vmem:[#allocation2 + $0x3a8] sm:$0xff]
    %v216 = vld [vmem:[#allocation2 + $0x3b0] sm:$0xff]
    %v217 = vld [vmem:[#allocation2 + $0x3b8] sm:$0xff]
    %v218 = vld [vmem:[#allocation2 + $0x3c0] sm:$0xff]
    %v219 = vld [vmem:[#allocation2 + $0x3c8] sm:$0xff]
    %v220 = vld [vmem:[#allocation2 + $0x3d0] sm:$0xff]
    %v221 = vld [vmem:[#allocation2 + $0x3d8] sm:$0xff]
    %v222 = vld [vmem:[#allocation2 + $0x3e0] sm:$0xff]
    %v223 = vld [vmem:[#allocation2 + $0x3e8] sm:$0xff]
    %v224 = vld [vmem:[#allocation2 + $0x3f0] sm:$0xff]
    %v225 = vld [vmem:[#allocation2 + $0x3f8] sm:$0xff]
    %v226 = vmul.f32 %v98, 0.99
    %v227 = vmul.f32 %v99, 0.99
    %v228 = vmul.f32 %v100, 0.99
    %v229 = vmul.f32 %v101, 0.99
    %v230 = vmul.f32 %v102, 0.99
    %v231 = vmul.f32 %v103, 0.99
    %v232 = vmul.f32 %v104, 0.99
    %v233 = vmul.f32 %v105, 0.99
    %v234 = vmul.f32 %v106, 0.99
    %v235 = vmul.f32 %v107, 0.99
    %v236 = vmul.f32 %v108, 0.99
    %v237 = vmul.f32 %v109, 0.99
    %v238 = vmul.f32 %v110, 0.99
    %v239 = vmul.f32 %v111, 0.99
    %v240 = vmul.f32 %v112, 0.99
    %v241 = vmul.f32 %v113, 0.99
    %v242 = vmul.f32 %v114, 0.99
    %v243 = vmul.f32 %v115, 0.99
    %v244 = vmul.f32 %v116, 0.99
    %v245 = vmul.f32 %v117, 0.99
    %v246 = vmul.f32 %v118, 0.99
    %v247 = vmul.f32 %v119, 0.99
    %v248 = vmul.f32 %v120, 0.99
    %v249 = vmul.f32 %v121, 0.99
    %v250 = vmul.f32 %v122, 0.99
    %v251 = vmul.f32 %v123, 0.99
    %v252 = vmul.f32 %v124, 0.99
    %v253 = vmul.f32 %v125, 0.99
    %v254 = vmul.f32 %v126, 0.99
    %v255 = vmul.f32 %v127, 0.99
    %v256 = vmul.f32 %v128, 0.99
    %v257 = vmul.f32 %v129, 0.99
    %v258 = vmul.f32 %v130, 0.99
    %v259 = vmul.f32 %v131, 0.99
    %v260 = vmul.f32 %v132, 0.99
    %v261 = vmul.f32 %v133, 0.99
    %v262 = vmul.f32 %v134, 0.99
    %v263 = vmul.f32 %v135, 0.99
    %v264 = vmul.f32 %v136, 0.99
    %v265 = vmul.f32 %v137, 0.99
    %v266 = vmul.f32 %v138, 0.99
    %v267 = vmul.f32 %v139, 0.99
    %v268 = vmul.f32 %v140, 0.99
    %v269 = vmul.f32 %v141, 0.99
    %v270 = vmul.f32 %v142, 0.99
    %v271 = vmul.f32 %v143, 0.99
    %v272 = vmul.f32 %v144, 0.99
    %v273 = vmul.f32 %v145, 0.99
    %v274 = vmul.f32 %v146, 0.99
    %v275 = vmul.f32 %v147, 0.99
    %v276 = vmul.f32 %v148, 0.99
    %v277 = vmul.f32 %v149, 0.99
    %v278 = vmul.f32 %v150, 0.99
    %v279 = vmul.f32 %v151, 0.99
    %v280 = vmul.f32 %v152, 0.99
    %v281 = vmul.f32 %v153, 0.99
    %v282 = vmul.f32 %v154, 0.99
    %v283 = vmul.f32 %v155, 0.99
    %v284 = vmul.f32 %v156, 0.99
    %v285 = vmul.f32 %v157, 0.99
    %v286 = vmul.f32 %v158, 0.99
    %v287 = vmul.f32 %v159, 0.99
    %v288 = vmul.f32 %v160, 0.99
    %v289 = vmul.f32 %v161, 0.99
    %v290 = vmul.f32 %v162, 0.99
    %v291 = vmul.f32 %v163, 0.99
    %v292 = vmul.f32 %v164, 0.99
    %v293 = vmul.f32 %v165, 0.99
    %v294 = vmul.f32 %v166, 0.99
    %v295 = vmul.f32 %v167, 0.99
    %v296 = vmul.f32 %v168, 0.99
    %v297 = vmul.f32 %v169, 0.99
    %v298 = vmul.f32 %v170, 0.99
    %v299 = vmul.f32 %v171, 0.99
    %v300 = vmul.f32 %v172, 0.99
    %v301 = vmul.f32 %v173, 0.99
    %v302 = vmul.f32 %v174, 0.99
    %v303 = vmul.f32 %v175, 0.99
    %v304 = vmul.f32 %v176, 0.99
    %v305 = vmul.f32 %v177, 0.99
    %v306 = vmul.f32 %v178, 0.99
    %v307 = vmul.f32 %v179, 0.99
    %v308 = vmul.f32 %v180, 0.99
    %v309 = vmul.f32 %v181, 0.99
    %v310 = vmul.f32 %v182, 0.99
    %v311 = vmul.f32 %v183, 0.99
    %v312 = vmul.f32 %v184, 0.99
    %v313 = vmul.f32 %v185, 0.99
    %v314 = vmul.f32 %v186, 0.99
    %v315 = vmul.f32 %v187, 0.99
    %v316 = vmul.f32 %v188, 0.99
    %v317 = vmul.f32 %v189, 0.99
    %v318 = vmul.f32 %v190, 0.99
    %v319 = vmul.f32 %v191, 0.99
    %v320 = vmul.f32 %v192, 0.99
    %v321 = vmul.f32 %v193, 0.99
    %v322 = vmul.f32 %v194, 0.99
    %v323 = vmul.f32 %v195, 0.99
    %v324 = vmul.f32 %v196, 0.99
    %v325 = vmul.f32 %v197, 0.99
    %v326 = vmul.f32 %v198, 0.99
    %v327 = vmul.f32 %v199, 0.99
    %v328 = vmul.f32 %v200, 0.99
    %v329 = vmul.f32 %v201, 0.99
    %v330 = vmul.f32 %v202, 0.99
    %v331 = vmul.f32 %v203, 0.99
    %v332 = vmul.f32 %v204, 0.99
    %v333 = vmul.f32 %v205, 0.99
    %v334 = vmul.f32 %v206, 0.99
    %v335 = vmul.f32 %v207, 0.99
    %v336 = vmul.f32 %v208, 0.99
    %v337 = vmul.f32 %v209, 0.99
    %v338 = vmul.f32 %v210, 0.99
    %v339 = vmul.f32 %v211, 0.99
    %v340 = vmul.f32 %v212, 0.99
    %v341 = vmul.f32 %v213, 0.99
    %v342 = vmul.f32 %v214, 0.99
    %v343 = vmul.f32 %v215, 0.99
    %v344 = vmul.f32 %v216, 0.99
    %v345 = vmul.f32 %v217, 0.99
    %v346 = vmul.f32 %v218, 0.99
    %v347 = vmul.f32 %v219, 0.99
    %v348 = vmul.f32 %v220, 0.99
    %v349 = vmul.f32 %v221, 0.99
    %v350 = vmul.f32 %v222, 0.99
    %v351 = vmul.f32 %v223, 0.99
    %v352 = vmul.f32 %v224, 0.99
    %v353 = vmul.f32 %v225, 0.99
    %v354 = vld [vmem:[%s1] sm:$0xff]
    %v355 = vld [vmem:[%s1 + $0x8] sm:$0xff]
    %v356 = vld [vmem:[%s1 + $0x10] sm:$0xff]
    %v357 = vld [vmem:[%s1 + $0x18] sm:$0xff]
    %v358 = vld [vmem:[%s1 + $0x20] sm:$0xff]
    %v359 = vld [vmem:[%s1 + $0x28] sm:$0xff]
    %v360 = vld [vmem:[%s1 + $0x30] sm:$0xff]
    %v361 = vld [vmem:[%s1 + $0x38] sm:$0xff]
    %v362 = vld [vmem:[%s1 + $0x40] sm:$0xff]
    %v363 = vld [vmem:[%s1 + $0x48] sm:$0xff]
    %v364 = vld [vmem:[%s1 + $0x50] sm:$0xff]
    %v365 = vld [vmem:[%s1 + $0x58] sm:$0xff]
    %v366 = vld [vmem:[%s1 + $0x60] sm:$0xff]
    %v367 = vld [vmem:[%s1 + $0x68] sm:$0xff]
    %v368 = vld [vmem:[%s1 + $0x70] sm:$0xff]
    %v369 = vld [vmem:[%s1 + $0x78] sm:$0xff]
    %v370 = vld [vmem:[%s1 + $0x80] sm:$0xff]
    %v371 = vld [vmem:[%s1 + $0x88] sm:$0xff]
    %v372 = vld [vmem:[%s1 + $0x90] sm:$0xff]
    %v373 = vld [vmem:[%s1 + $0x98] sm:$0xff]
    %v374 = vld [vmem:[%s1 + $0xa0] sm:$0xff]
    %v375 = vld [vmem:[%s1 + $0xa8] sm:$0xff]
    %v376 = vld [vmem:[%s1 + $0xb0] sm:$0xff]
    %v377 = vld [vmem:[%s1 + $0xb8] sm:$0xff]
    %v378 = vld [vmem:[%s1 + $0xc0] sm:$0xff]
    %v379 = vld [vmem:[%s1 + $0xc8] sm:$0xff]
    %v380 = vld [vmem:[%s1 + $0xd0] sm:$0xff]
    %v381 = vld [vmem:[%s1 + $0xd8] sm:$0xff]
    %v382 = vld [vmem:[%s1 + $0xe0] sm:$0xff]
    %v383 = vld [vmem:[%s1 + $0xe8] sm:$0xff]
    %v384 = vld [vmem:[%s1 + $0xf0] sm:$0xff]
    %v385 = vld [vmem:[%s1 + $0xf8] sm:$0xff]
    %v386 = vld [vmem:[%s1 + $0x100] sm:$0xff]
    %v387 = vld [vmem:[%s1 + $0x108] sm:$0xff]
    %v388 = vld [vmem:[%s1 + $0x110] sm:$0xff]
    %v389 = vld [vmem:[%s1 + $0x118] sm:$0xff]
    %v390 = vld [vmem:[%s1 + $0x120] sm:$0xff]
    %v391 = vld [vmem:[%s1 + $0x128] sm:$0xff]
    %v392 = vld [vmem:[%s1 + $0x130] sm:$0xff]
    %v393 = vld [vmem:[%s1 + $0x138] sm:$0xff]
    %v394 = vld [vmem:[%s1 + $0x140] sm:$0xff]
    %v395 = vld [vmem:[%s1 + $0x148] sm:$0xff]
    %v396 = vld [vmem:[%s1 + $0x150] sm:$0xff]
    %v397 = vld [vmem:[%s1 + $0x158] sm:$0xff]
    %v398 = vld [vmem:[%s1 + $0x160] sm:$0xff]
    %v399 = vld [vmem:[%s1 + $0x168] sm:$0xff]
    %v400 = vld [vmem:[%s1 + $0x170] sm:$0xff]
    %v401 = vld [vmem:[%s1 + $0x178] sm:$0xff]
    %v402 = vld [vmem:[%s1 + $0x180] sm:$0xff]
    %v403 = vld [vmem:[%s1 + $0x188] sm:$0xff]
    %v404 = vld [vmem:[%s1 + $0x190] sm:$0xff]
    %v405 = vld [vmem:[%s1 + $0x198] sm:$0xff]
    %v406 = vld [vmem:[%s1 + $0x1a0] sm:$0xff]
    %v407 = vld [vmem:[%s1 + $0x1a8] sm:$0xff]
    %v408 = vld [vmem:[%s1 + $0x1b0] sm:$0xff]
    %v409 = vld [vmem:[%s1 + $0x1b8] sm:$0xff]
    %v410 = vld [vmem:[%s1 + $0x1c0] sm:$0xff]
    %v411 = vld [vmem:[%s1 + $0x1c8] sm:$0xff]
    %v412 = vld [vmem:[%s1 + $0x1d0] sm:$0xff]
    %v413 = vld [vmem:[%s1 + $0x1d8] sm:$0xff]
    %v414 = vld [vmem:[%s1 + $0x1e0] sm:$0xff]
    %v415 = vld [vmem:[%s1 + $0x1e8] sm:$0xff]
    %v416 = vld [vmem:[%s1 + $0x1f0] sm:$0xff]
    %v417 = vld [vmem:[%s1 + $0x1f8] sm:$0xff]
    %v418 = vld [vmem:[%s1 + $0x200] sm:$0xff]
    %v419 = vld [vmem:[%s1 + $0x208] sm:$0xff]
    %v420 = vld [vmem:[%s1 + $0x210] sm:$0xff]
    %v421 = vld [vmem:[%s1 + $0x218] sm:$0xff]
    %v422 = vld [vmem:[%s1 + $0x220] sm:$0xff]
    %v423 = vld [vmem:[%s1 + $0x228] sm:$0xff]
    %v424 = vld [vmem:[%s1 + $0x230] sm:$0xff]
    %v425 = vld [vmem:[%s1 + $0x238] sm:$0xff]
    %v426 = vld [vmem:[%s1 + $0x240] sm:$0xff]
    %v427 = vld [vmem:[%s1 + $0x248] sm:$0xff]
    %v428 = vld [vmem:[%s1 + $0x250] sm:$0xff]
    %v429 = vld [vmem:[%s1 + $0x258] sm:$0xff]
    %v430 = vld [vmem:[%s1 + $0x260] sm:$0xff]
    %v431 = vld [vmem:[%s1 + $0x268] sm:$0xff]
    %v432 = vld [vmem:[%s1 + $0x270] sm:$0xff]
    %v433 = vld [vmem:[%s1 + $0x278] sm:$0xff]
    %v434 = vld [vmem:[%s1 + $0x280] sm:$0xff]
    %v435 = vld [vmem:[%s1 + $0x288] sm:$0xff]
    %v436 = vld [vmem:[%s1 + $0x290] sm:$0xff]
    %v437 = vld [vmem:[%s1 + $0x298] sm:$0xff]
    %v438 = vld [vmem:[%s1 + $0x2a0] sm:$0xff]
    %v439 = vld [vmem:[%s1 + $0x2a8] sm:$0xff]
    %v440 = vld [vmem:[%s1 + $0x2b0] sm:$0xff]
    %v441 = vld [vmem:[%s1 + $0x2b8] sm:$0xff]
    %v442 = vld [vmem:[%s1 + $0x2c0] sm:$0xff]
    %v443 = vld [vmem:[%s1 + $0x2c8] sm:$0xff]
    %v444 = vld [vmem:[%s1 + $0x2d0] sm:$0xff]
    %v445 = vld [vmem:[%s1 + $0x2d8] sm:$0xff]
    %v446 = vld [vmem:[%s1 + $0x2e0] sm:$0xff]
    %v447 = vld [vmem:[%s1 + $0x2e8] sm:$0xff]
    %v448 = vld [vmem:[%s1 + $0x2f0] sm:$0xff]
    %v449 = vld [vmem:[%s1 + $0x2f8] sm:$0xff]
    %v450 = vld [vmem:[%s1 + $0x300] sm:$0xff]
    %v451 = vld [vmem:[%s1 + $0x308] sm:$0xff]
    %v452 = vld [vmem:[%s1 + $0x310] sm:$0xff]
    %v453 = vld [vmem:[%s1 + $0x318] sm:$0xff]
    %v454 = vld [vmem:[%s1 + $0x320] sm:$0xff]
    %v455 = vld [vmem:[%s1 + $0x328] sm:$0xff]
    %v456 = vld [vmem:[%s1 + $0x330] sm:$0xff]
    %v457 = vld [vmem:[%s1 + $0x338] sm:$0xff]
    %v458 = vld [vmem:[%s1 + $0x340] sm:$0xff]
    %v459 = vld [vmem:[%s1 + $0x348] sm:$0xff]
    %v460 = vld [vmem:[%s1 + $0x350] sm:$0xff]
    %v461 = vld [vmem:[%s1 + $0x358] sm:$0xff]
    %v462 = vld [vmem:[%s1 + $0x360] sm:$0xff]
    %v463 = vld [vmem:[%s1 + $0x368] sm:$0xff]
    %v464 = vld [vmem:[%s1 + $0x370] sm:$0xff]
    %v465 = vld [vmem:[%s1 + $0x378] sm:$0xff]
    %v466 = vld [vmem:[%s1 + $0x380] sm:$0xff]
    %v467 = vld [vmem:[%s1 + $0x388] sm:$0xff]
    %v468 = vld [vmem:[%s1 + $0x390] sm:$0xff]
    %v469 = vld [vmem:[%s1 + $0x398] sm:$0xff]
    %v470 = vld [vmem:[%s1 + $0x3a0] sm:$0xff]
    %v471 = vld [vmem:[%s1 + $0x3a8] sm:$0xff]
    %v472 = vld [vmem:[%s1 + $0x3b0] sm:$0xff]
    %v473 = vld [vmem:[%s1 + $0x3b8] sm:$0xff]
    %v474 = vld [vmem:[%s1 + $0x3c0] sm:$0xff]
    %v475 = vld [vmem:[%s1 + $0x3c8] sm:$0xff]
    %v476 = vld [vmem:[%s1 + $0x3d0] sm:$0xff]
    %v477 = vld [vmem:[%s1 + $0x3d8] sm:$0xff]
    %v478 = vld [vmem:[%s1 + $0x3e0] sm:$0xff]
    %v479 = vld [vmem:[%s1 + $0x3e8] sm:$0xff]
    %v480 = vld [vmem:[%s1 + $0x3f0] sm:$0xff]
    %v481 = vld [vmem:[%s1 + $0x3f8] sm:$0xff]
    %v482 = vmul.f32 %v354, 0.01
    %v483 = vmul.f32 %v355, 0.01
    %v484 = vmul.f32 %v356, 0.01
    %v485 = vmul.f32 %v357, 0.01
    %v486 = vmul.f32 %v358, 0.01
    %v487 = vmul.f32 %v359, 0.01
    %v488 = vmul.f32 %v360, 0.01
    %v489 = vmul.f32 %v361, 0.01
    %v490 = vmul.f32 %v362, 0.01
    %v491 = vmul.f32 %v363, 0.01
    %v492 = vmul.f32 %v364, 0.01
    %v493 = vmul.f32 %v365, 0.01
    %v494 = vmul.f32 %v366, 0.01
    %v495 = vmul.f32 %v367, 0.01
    %v496 = vmul.f32 %v368, 0.01
    %v497 = vmul.f32 %v369, 0.01
    %v498 = vmul.f32 %v370, 0.01
    %v499 = vmul.f32 %v371, 0.01
    %v500 = vmul.f32 %v372, 0.01
    %v501 = vmul.f32 %v373, 0.01
    %v502 = vmul.f32 %v374, 0.01
    %v503 = vmul.f32 %v375, 0.01
    %v504 = vmul.f32 %v376, 0.01
    %v505 = vmul.f32 %v377, 0.01
    %v506 = vmul.f32 %v378, 0.01
    %v507 = vmul.f32 %v379, 0.01
    %v508 = vmul.f32 %v380, 0.01
    %v509 = vmul.f32 %v381, 0.01
    %v510 = vmul.f32 %v382, 0.01
    %v511 = vmul.f32 %v383, 0.01
    %v512 = vmul.f32 %v384, 0.01
    %v513 = vmul.f32 %v385, 0.01
    %v514 = vmul.f32 %v386, 0.01
    %v515 = vmul.f32 %v387, 0.01
    %v516 = vmul.f32 %v388, 0.01
    %v517 = vmul.f32 %v389, 0.01
    %v518 = vmul.f32 %v390, 0.01
    %v519 = vmul.f32 %v391, 0.01
    %v520 = vmul.f32 %v392, 0.01
    %v521 = vmul.f32 %v393, 0.01
    %v522 = vmul.f32 %v394, 0.01
    %v523 = vmul.f32 %v395, 0.01
    %v524 = vmul.f32 %v396, 0.01
    %v525 = vmul.f32 %v397, 0.01
    %v526 = vmul.f32 %v398, 0.01
    %v527 = vmul.f32 %v399, 0.01
    %v528 = vmul.f32 %v400, 0.01
    %v529 = vmul.f32 %v401, 0.01
    %v530 = vmul.f32 %v402, 0.01
    %v531 = vmul.f32 %v403, 0.01
    %v532 = vmul.f32 %v404, 0.01
    %v533 = vmul.f32 %v405, 0.01
    %v534 = vmul.f32 %v406, 0.01
    %v535 = vmul.f32 %v407, 0.01
    %v536 = vmul.f32 %v408, 0.01
    %v537 = vmul.f32 %v409, 0.01
    %v538 = vmul.f32 %v410, 0.01
    %v539 = vmul.f32 %v411, 0.01
    %v540 = vmul.f32 %v412, 0.01
    %v541 = vmul.f32 %v413, 0.01
    %v542 = vmul.f32 %v414, 0.01
    %v543 = vmul.f32 %v415, 0.01
    %v544 = vmul.f32 %v416, 0.01
    %v545 = vmul.f32 %v417, 0.01
    %v546 = vmul.f32 %v418, 0.01
    %v547 = vmul.f32 %v419, 0.01
    %v548 = vmul.f32 %v420, 0.01
    %v549 = vmul.f32 %v421, 0.01
    %v550 = vmul.f32 %v422, 0.01
    %v551 = vmul.f32 %v423, 0.01
    %v552 = vmul.f32 %v424, 0.01
    %v553 = vmul.f32 %v425, 0.01
    %v554 = vmul.f32 %v426, 0.01
    %v555 = vmul.f32 %v427, 0.01
    %v556 = vmul.f32 %v428, 0.01
    %v557 = vmul.f32 %v429, 0.01
    %v558 = vmul.f32 %v430, 0.01
    %v559 = vmul.f32 %v431, 0.01
    %v560 = vmul.f32 %v432, 0.01
    %v561 = vmul.f32 %v433, 0.01
    %v562 = vmul.f32 %v434, 0.01
    %v563 = vmul.f32 %v435, 0.01
    %v564 = vmul.f32 %v436, 0.01
    %v565 = vmul.f32 %v437, 0.01
    %v566 = vmul.f32 %v438, 0.01
    %v567 = vmul.f32 %v439, 0.01
    %v568 = vmul.f32 %v440, 0.01
    %v569 = vmul.f32 %v441, 0.01
    %v570 = vmul.f32 %v442, 0.01
    %v571 = vmul.f32 %v443, 0.01
    %v572 = vmul.f32 %v444, 0.01
    %v573 = vmul.f32 %v445, 0.01
    %v574 = vmul.f32 %v446, 0.01
    %v575 = vmul.f32 %v447, 0.01
    %v576 = vmul.f32 %v448, 0.01
    %v577 = vmul.f32 %v449, 0.01
    %v578 = vmul.f32 %v450, 0.01
    %v579 = vmul.f32 %v451, 0.01
    %v580 = vmul.f32 %v452, 0.01
    %v581 = vmul.f32 %v453, 0.01
    %v582 = vmul.f32 %v454, 0.01
    %v583 = vmul.f32 %v455, 0.01
    %v584 = vmul.f32 %v456, 0.01
    %v585 = vmul.f32 %v457, 0.01
    %v586 = vmul.f32 %v458, 0.01
    %v587 = vmul.f32 %v459, 0.01
    %v588 = vmul.f32 %v460, 0.01
    %v589 = vmul.f32 %v461, 0.01
    %v590 = vmul.f32 %v462, 0.01
    %v591 = vmul.f32 %v463, 0.01
    %v592 = vmul.f32 %v464, 0.01
    %v593 = vmul.f32 %v465, 0.01
    %v594 = vmul.f32 %v466, 0.01
    %v595 = vmul.f32 %v467, 0.01
    %v596 = vmul.f32 %v468, 0.01
    %v597 = vmul.f32 %v469, 0.01
    %v598 = vmul.f32 %v470, 0.01
    %v599 = vmul.f32 %v471, 0.01
    %v600 = vmul.f32 %v472, 0.01
    %v601 = vmul.f32 %v473, 0.01
    %v602 = vmul.f32 %v474, 0.01
    %v603 = vmul.f32 %v475, 0.01
    %v604 = vmul.f32 %v476, 0.01
    %v605 = vmul.f32 %v477, 0.01
    %v606 = vmul.f32 %v478, 0.01
    %v607 = vmul.f32 %v479, 0.01
    %v608 = vmul.f32 %v480, 0.01
    %v609 = vmul.f32 %v481, 0.01
    %v610 = vadd.f32 %v226, %v482
    %v611 = vadd.f32 %v227, %v483
    %v612 = vadd.f32 %v228, %v484
    %v613 = vadd.f32 %v229, %v485
    %v614 = vadd.f32 %v230, %v486
    %v615 = vadd.f32 %v231, %v487
    %v616 = vadd.f32 %v232, %v488
    %v617 = vadd.f32 %v233, %v489
    %v618 = vadd.f32 %v234, %v490
    %v619 = vadd.f32 %v235, %v491
    %v620 = vadd.f32 %v236, %v492
    %v621 = vadd.f32 %v237, %v493
    %v622 = vadd.f32 %v238, %v494
    %v623 = vadd.f32 %v239, %v495
    %v624 = vadd.f32 %v240, %v496
    %v625 = vadd.f32 %v241, %v497
    %v626 = vadd.f32 %v242, %v498
    %v627 = vadd.f32 %v243, %v499
    %v628 = vadd.f32 %v244, %v500
    %v629 = vadd.f32 %v245, %v501
    %v630 = vadd.f32 %v246, %v502
    %v631 = vadd.f32 %v247, %v503
    %v632 = vadd.f32 %v248, %v504
    %v633 = vadd.f32 %v249, %v505
    %v634 = vadd.f32 %v250, %v506
    %v635 = vadd.f32 %v251, %v507
    %v636 = vadd.f32 %v252, %v508
    %v637 = vadd.f32 %v253, %v509
    %v638 = vadd.f32 %v254, %v510
    %v639 = vadd.f32 %v255, %v511
    %v640 = vadd.f32 %v256, %v512
    %v641 = vadd.f32 %v257, %v513
    %v642 = vadd.f32 %v258, %v514
    %v643 = vadd.f32 %v259, %v515
    %v644 = vadd.f32 %v260, %v516
    %v645 = vadd.f32 %v261, %v517
    %v646 = vadd.f32 %v262, %v518
    %v647 = vadd.f32 %v263, %v519
    %v648 = vadd.f32 %v264, %v520
    %v649 = vadd.f32 %v265, %v521
    %v650 = vadd.f32 %v266, %v522
    %v651 = vadd.f32 %v267, %v523
    %v652 = vadd.f32 %v268, %v524
    %v653 = vadd.f32 %v269, %v525
    %v654 = vadd.f32 %v270, %v526
    %v655 = vadd.f32 %v271, %v527
    %v656 = vadd.f32 %v272, %v528
    %v657 = vadd.f32 %v273, %v529
    %v658 = vadd.f32 %v274, %v530
    %v659 = vadd.f32 %v275, %v531
    %v660 = vadd.f32 %v276, %v532
    %v661 = vadd.f32 %v277, %v533
    %v662 = vadd.f32 %v278, %v534
    %v663 = vadd.f32 %v279, %v535
    %v664 = vadd.f32 %v280, %v536
    %v665 = vadd.f32 %v281, %v537
    %v666 = vadd.f32 %v282, %v538
    %v667 = vadd.f32 %v283, %v539
    %v668 = vadd.f32 %v284, %v540
    %v669 = vadd.f32 %v285, %v541
    %v670 = vadd.f32 %v286, %v542
    %v671 = vadd.f32 %v287, %v543
    %v672 = vadd.f32 %v288, %v544
    %v673 = vadd.f32 %v289, %v545
    %v674 = vadd.f32 %v290, %v546
    %v675 = vadd.f32 %v291, %v547
    %v676 = vadd.f32 %v292, %v548
    %v677 = vadd.f32 %v293, %v549
    %v678 = vadd.f32 %v294, %v550
    %v679 = vadd.f32 %v295, %v551
    %v680 = vadd.f32 %v296, %v552
    %v681 = vadd.f32 %v297, %v553
    %v682 = vadd.f32 %v298, %v554
    %v683 = vadd.f32 %v299, %v555
    %v684 = vadd.f32 %v300, %v556
    %v685 = vadd.f32 %v301, %v557
    %v686 = vadd.f32 %v302, %v558
    %v687 = vadd.f32 %v303, %v559
    %v688 = vadd.f32 %v304, %v560
    %v689 = vadd.f32 %v305, %v561
    %v690 = vadd.f32 %v306, %v562
    %v691 = vadd.f32 %v307, %v563
    %v692 = vadd.f32 %v308, %v564
    %v693 = vadd.f32 %v309, %v565
    %v694 = vadd.f32 %v310, %v566
    %v695 = vadd.f32 %v311, %v567
    %v696 = vadd.f32 %v312, %v568
    %v697 = vadd.f32 %v313, %v569
    %v698 = vadd.f32 %v314, %v570
    %v699 = vadd.f32 %v315, %v571
    %v700 = vadd.f32 %v316, %v572
    %v701 = vadd.f32 %v317, %v573
    %v702 = vadd.f32 %v318, %v574
    %v703 = vadd.f32 %v319, %v575
    %v704 = vadd.f32 %v320, %v576
    %v705 = vadd.f32 %v321, %v577
    %v706 = vadd.f32 %v322, %v578
    %v707 = vadd.f32 %v323, %v579
    %v708 = vadd.f32 %v324, %v580
    %v709 = vadd.f32 %v325, %v581
    %v710 = vadd.f32 %v326, %v582
    %v711 = vadd.f32 %v327, %v583
    %v712 = vadd.f32 %v328, %v584
    %v713 = vadd.f32 %v329, %v585
    %v714 = vadd.f32 %v330, %v586
    %v715 = vadd.f32 %v331, %v587
    %v716 = vadd.f32 %v332, %v588
    %v717 = vadd.f32 %v333, %v589
    %v718 = vadd.f32 %v334, %v590
    %v719 = vadd.f32 %v335, %v591
    %v720 = vadd.f32 %v336, %v592
    %v721 = vadd.f32 %v337, %v593
    %v722 = vadd.f32 %v338, %v594
    %v723 = vadd.f32 %v339, %v595
    %v724 = vadd.f32 %v340, %v596
    %v725 = vadd.f32 %v341, %v597
    %v726 = vadd.f32 %v342, %v598
    %v727 = vadd.f32 %v343, %v599
    %v728 = vadd.f32 %v344, %v600
    %v729 = vadd.f32 %v345, %v601
    %v730 = vadd.f32 %v346, %v602
    %v731 = vadd.f32 %v347, %v603
    %v732 = vadd.f32 %v348, %v604
    %v733 = vadd.f32 %v349, %v605
    %v734 = vadd.f32 %v350, %v606
    %v735 = vadd.f32 %v351, %v607
    %v736 = vadd.f32 %v352, %v608
    %v737 = vadd.f32 %v353, %v609
    %738 = vst [vmem:[#allocation7] sm:$0xff] %v610
    %739 = vst [vmem:[#allocation7 + $0x8] sm:$0xff] %v611
    %740 = vst [vmem:[#allocation7 + $0x10] sm:$0xff] %v612
    %741 = vst [vmem:[#allocation7 + $0x18] sm:$0xff] %v613
    %742 = vst [vmem:[#allocation7 + $0x20] sm:$0xff] %v614
    %743 = vst [vmem:[#allocation7 + $0x28] sm:$0xff] %v615
    %744 = vst [vmem:[#allocation7 + $0x30] sm:$0xff] %v616
    %745 = vst [vmem:[#allocation7 + $0x38] sm:$0xff] %v617
    %746 = vst [vmem:[#allocation7 + $0x40] sm:$0xff] %v618
    %747 = vst [vmem:[#allocation7 + $0x48] sm:$0xff] %v619
    %748 = vst [vmem:[#allocation7 + $0x50] sm:$0xff] %v620
    %749 = vst [vmem:[#allocation7 + $0x58] sm:$0xff] %v621
    %750 = vst [vmem:[#allocation7 + $0x60] sm:$0xff] %v622
    %751 = vst [vmem:[#allocation7 + $0x68] sm:$0xff] %v623
    %752 = vst [vmem:[#allocation7 + $0x70] sm:$0xff] %v624
    %753 = vst [vmem:[#allocation7 + $0x78] sm:$0xff] %v625
    %754 = vst [vmem:[#allocation7 + $0x80] sm:$0xff] %v626
    %755 = vst [vmem:[#allocation7 + $0x88] sm:$0xff] %v627
    %756 = vst [vmem:[#allocation7 + $0x90] sm:$0xff] %v628
    %757 = vst [vmem:[#allocation7 + $0x98] sm:$0xff] %v629
    %758 = vst [vmem:[#allocation7 + $0xa0] sm:$0xff] %v630
    %759 = vst [vmem:[#allocation7 + $0xa8] sm:$0xff] %v631
    %760 = vst [vmem:[#allocation7 + $0xb0] sm:$0xff] %v632
    %761 = vst [vmem:[#allocation7 + $0xb8] sm:$0xff] %v633
    %762 = vst [vmem:[#allocation7 + $0xc0] sm:$0xff] %v634
    %763 = vst [vmem:[#allocation7 + $0xc8] sm:$0xff] %v635
    %764 = vst [vmem:[#allocation7 + $0xd0] sm:$0xff] %v636
    %765 = vst [vmem:[#allocation7 + $0xd8] sm:$0xff] %v637
    %766 = vst [vmem:[#allocation7 + $0xe0] sm:$0xff] %v638
    %767 = vst [vmem:[#allocation7 + $0xe8] sm:$0xff] %v639
    %768 = vst [vmem:[#allocation7 + $0xf0] sm:$0xff] %v640
    %769 = vst [vmem:[#allocation7 + $0xf8] sm:$0xff] %v641
    %770 = vst [vmem:[#allocation7 + $0x100] sm:$0xff] %v642
    %771 = vst [vmem:[#allocation7 + $0x108] sm:$0xff] %v643
    %772 = vst [vmem:[#allocation7 + $0x110] sm:$0xff] %v644
    %773 = vst [vmem:[#allocation7 + $0x118] sm:$0xff] %v645
    %774 = vst [vmem:[#allocation7 + $0x120] sm:$0xff] %v646
    %775 = vst [vmem:[#allocation7 + $0x128] sm:$0xff] %v647
    %776 = vst [vmem:[#allocation7 + $0x130] sm:$0xff] %v648
    %777 = vst [vmem:[#allocation7 + $0x138] sm:$0xff] %v649
    %778 = vst [vmem:[#allocation7 + $0x140] sm:$0xff] %v650
    %779 = vst [vmem:[#allocation7 + $0x148] sm:$0xff] %v651
    %780 = vst [vmem:[#allocation7 + $0x150] sm:$0xff] %v652
    %781 = vst [vmem:[#allocation7 + $0x158] sm:$0xff] %v653
    %782 = vst [vmem:[#allocation7 + $0x160] sm:$0xff] %v654
    %783 = vst [vmem:[#allocation7 + $0x168] sm:$0xff] %v655
    %784 = vst [vmem:[#allocation7 + $0x170] sm:$0xff] %v656
    %785 = vst [vmem:[#allocation7 + $0x178] sm:$0xff] %v657
    %786 = vst [vmem:[#allocation7 + $0x180] sm:$0xff] %v658
    %787 = vst [vmem:[#allocation7 + $0x188] sm:$0xff] %v659
    %788 = vst [vmem:[#allocation7 + $0x190] sm:$0xff] %v660
    %789 = vst [vmem:[#allocation7 + $0x198] sm:$0xff] %v661
    %790 = vst [vmem:[#allocation7 + $0x1a0] sm:$0xff] %v662
    %791 = vst [vmem:[#allocation7 + $0x1a8] sm:$0xff] %v663
    %792 = vst [vmem:[#allocation7 + $0x1b0] sm:$0xff] %v664
    %793 = vst [vmem:[#allocation7 + $0x1b8] sm:$0xff] %v665
    %794 = vst [vmem:[#allocation7 + $0x1c0] sm:$0xff] %v666
    %795 = vst [vmem:[#allocation7 + $0x1c8] sm:$0xff] %v667
    %796 = vst [vmem:[#allocation7 + $0x1d0] sm:$0xff] %v668
    %797 = vst [vmem:[#allocation7 + $0x1d8] sm:$0xff] %v669
    %798 = vst [vmem:[#allocation7 + $0x1e0] sm:$0xff] %v670
    %799 = vst [vmem:[#allocation7 + $0x1e8] sm:$0xff] %v671
    %800 = vst [vmem:[#allocation7 + $0x1f0] sm:$0xff] %v672
    %801 = vst [vmem:[#allocation7 + $0x1f8] sm:$0xff] %v673
    %802 = vst [vmem:[#allocation7 + $0x200] sm:$0xff] %v674
    %803 = vst [vmem:[#allocation7 + $0x208] sm:$0xff] %v675
    %804 = vst [vmem:[#allocation7 + $0x210] sm:$0xff] %v676
    %805 = vst [vmem:[#allocation7 + $0x218] sm:$0xff] %v677
    %806 = vst [vmem:[#allocation7 + $0x220] sm:$0xff] %v678
    %807 = vst [vmem:[#allocation7 + $0x228] sm:$0xff] %v679
    %808 = vst [vmem:[#allocation7 + $0x230] sm:$0xff] %v680
    %809 = vst [vmem:[#allocation7 + $0x238] sm:$0xff] %v681
    %810 = vst [vmem:[#allocation7 + $0x240] sm:$0xff] %v682
    %811 = vst [vmem:[#allocation7 + $0x248] sm:$0xff] %v683
    %812 = vst [vmem:[#allocation7 + $0x250] sm:$0xff] %v684
    %813 = vst [vmem:[#allocation7 + $0x258] sm:$0xff] %v685
    %814 = vst [vmem:[#allocation7 + $0x260] sm:$0xff] %v686
    %815 = vst [vmem:[#allocation7 + $0x268] sm:$0xff] %v687
    %816 = vst [vmem:[#allocation7 + $0x270] sm:$0xff] %v688
    %817 = vst [vmem:[#allocation7 + $0x278] sm:$0xff] %v689
    %818 = vst [vmem:[#allocation7 + $0x280] sm:$0xff] %v690
    %819 = vst [vmem:[#allocation7 + $0x288] sm:$0xff] %v691
    %820 = vst [vmem:[#allocation7 + $0x290] sm:$0xff] %v692
    %821 = vst [vmem:[#allocation7 + $0x298] sm:$0xff] %v693
    %822 = vst [vmem:[#allocation7 + $0x2a0] sm:$0xff] %v694
    %823 = vst [vmem:[#allocation7 + $0x2a8] sm:$0xff] %v695
    %824 = vst [vmem:[#allocation7 + $0x2b0] sm:$0xff] %v696
    %825 = vst [vmem:[#allocation7 + $0x2b8] sm:$0xff] %v697
    %826 = vst [vmem:[#allocation7 + $0x2c0] sm:$0xff] %v698
    %827 = vst [vmem:[#allocation7 + $0x2c8] sm:$0xff] %v699
    %828 = vst [vmem:[#allocation7 + $0x2d0] sm:$0xff] %v700
    %829 = vst [vmem:[#allocation7 + $0x2d8] sm:$0xff] %v701
    %830 = vst [vmem:[#allocation7 + $0x2e0] sm:$0xff] %v702
    %831 = vst [vmem:[#allocation7 + $0x2e8] sm:$0xff] %v703
    %832 = vst [vmem:[#allocation7 + $0x2f0] sm:$0xff] %v704
    %833 = vst [vmem:[#allocation7 + $0x2f8] sm:$0xff] %v705
    %834 = vst [vmem:[#allocation7 + $0x300] sm:$0xff] %v706
    %835 = vst [vmem:[#allocation7 + $0x308] sm:$0xff] %v707
    %836 = vst [vmem:[#allocation7 + $0x310] sm:$0xff] %v708
    %837 = vst [vmem:[#allocation7 + $0x318] sm:$0xff] %v709
    %838 = vst [vmem:[#allocation7 + $0x320] sm:$0xff] %v710
    %839 = vst [vmem:[#allocation7 + $0x328] sm:$0xff] %v711
    %840 = vst [vmem:[#allocation7 + $0x330] sm:$0xff] %v712
    %841 = vst [vmem:[#allocation7 + $0x338] sm:$0xff] %v713
    %842 = vst [vmem:[#allocation7 + $0x340] sm:$0xff] %v714
    %843 = vst [vmem:[#allocation7 + $0x348] sm:$0xff] %v715
    %844 = vst [vmem:[#allocation7 + $0x350] sm:$0xff] %v716
    %845 = vst [vmem:[#allocation7 + $0x358] sm:$0xff] %v717
    %846 = vst [vmem:[#allocation7 + $0x360] sm:$0xff] %v718
    %847 = vst [vmem:[#allocation7 + $0x368] sm:$0xff] %v719
    %848 = vst [vmem:[#allocation7 + $0x370] sm:$0xff] %v720
    %849 = vst [vmem:[#allocation7 + $0x378] sm:$0xff] %v721
    %850 = vst [vmem:[#allocation7 + $0x380] sm:$0xff] %v722
    %851 = vst [vmem:[#allocation7 + $0x388] sm:$0xff] %v723
    %852 = vst [vmem:[#allocation7 + $0x390] sm:$0xff] %v724
    %853 = vst [vmem:[#allocation7 + $0x398] sm:$0xff] %v725
    %854 = vst [vmem:[#allocation7 + $0x3a0] sm:$0xff] %v726
    %855 = vst [vmem:[#allocation7 + $0x3a8] sm:$0xff] %v727
    %856 = vst [vmem:[#allocation7 + $0x3b0] sm:$0xff] %v728
    %857 = vst [vmem:[#allocation7 + $0x3b8] sm:$0xff] %v729
    %858 = vst [vmem:[#allocation7 + $0x3c0] sm:$0xff] %v730
    %859 = vst [vmem:[#allocation7 + $0x3c8] sm:$0xff] %v731
    %860 = vst [vmem:[#allocation7 + $0x3d0] sm:$0xff] %v732
    %861 = vst [vmem:[#allocation7 + $0x3d8] sm:$0xff] %v733
    %862 = vst [vmem:[#allocation7 + $0x3e0] sm:$0xff] %v734
    %863 = vst [vmem:[#allocation7 + $0x3e8] sm:$0xff] %v735
    %864 = vst [vmem:[#allocation7 + $0x3f0] sm:$0xff] %v736
    %865 = vst [vmem:[#allocation7 + $0x3f8] sm:$0xff] %v737
    %v866 = vld [vmem:[%s10] sm:$0x1]
    %v867 = vmul.f32 %v866, 0.99
    %v868 = vld [vmem:[%s2] sm:$0x1]
    %v869 = vmul.f32 %v868, 0.01
    %v870 = vadd.f32 %v867, %v869
    %871 = vst [vmem:[#allocation8] sm:$0x1] %v870
    %v872 = vld [vmem:[%s11] sm:$0xff]
    %v873 = vld [vmem:[%s11 + $0x8] sm:$0xff]
    %v874 = vld [vmem:[%s11 + $0x10] sm:$0xff]
    %v875 = vld [vmem:[%s11 + $0x18] sm:$0xff]
    %v876 = vld [vmem:[%s11 + $0x20] sm:$0xff]
    %v877 = vld [vmem:[%s11 + $0x28] sm:$0xff]
    %v878 = vld [vmem:[%s11 + $0x30] sm:$0xff]
    %v879 = vld [vmem:[%s11 + $0x38] sm:$0xff]
    %v880 = vld [vmem:[%s11 + $0x40] sm:$0xff]
    %v881 = vld [vmem:[%s11 + $0x48] sm:$0xff]
    %v882 = vld [vmem:[%s11 + $0x50] sm:$0xff]
    %v883 = vld [vmem:[%s11 + $0x58] sm:$0xff]
    %v884 = vld [vmem:[%s11 + $0x60] sm:$0xff]
    %v885 = vld [vmem:[%s11 + $0x68] sm:$0xff]
    %v886 = vld [vmem:[%s11 + $0x70] sm:$0xff]
    %v887 = vld [vmem:[%s11 + $0x78] sm:$0xff]
    %v888 = vmul.f32 %v872, 0.99
    %v889 = vmul.f32 %v873, 0.99
    %v890 = vmul.f32 %v874, 0.99
    %v891 = vmul.f32 %v875, 0.99
    %v892 = vmul.f32 %v876, 0.99
    %v893 = vmul.f32 %v877, 0.99
    %v894 = vmul.f32 %v878, 0.99
    %v895 = vmul.f32 %v879, 0.99
    %v896 = vmul.f32 %v880, 0.99
    %v897 = vmul.f32 %v881, 0.99
    %v898 = vmul.f32 %v882, 0.99
    %v899 = vmul.f32 %v883, 0.99
    %v900 = vmul.f32 %v884, 0.99
    %v901 = vmul.f32 %v885, 0.99
    %v902 = vmul.f32 %v886, 0.99
    %v903 = vmul.f32 %v887, 0.99
    %v904 = vld [vmem:[%s3] sm:$0xff]
    %v905 = vld [vmem:[%s3 + $0x8] sm:$0xff]
    %v906 = vld [vmem:[%s3 + $0x10] sm:$0xff]
    %v907 = vld [vmem:[%s3 + $0x18] sm:$0xff]
    %v908 = vld [vmem:[%s3 + $0x20] sm:$0xff]
    %v909 = vld [vmem:[%s3 + $0x28] sm:$0xff]
    %v910 = vld [vmem:[%s3 + $0x30] sm:$0xff]
    %v911 = vld [vmem:[%s3 + $0x38] sm:$0xff]
    %v912 = vld [vmem:[%s3 + $0x40] sm:$0xff]
    %v913 = vld [vmem:[%s3 + $0x48] sm:$0xff]
    %v914 = vld [vmem:[%s3 + $0x50] sm:$0xff]
    %v915 = vld [vmem:[%s3 + $0x58] sm:$0xff]
    %v916 = vld [vmem:[%s3 + $0x60] sm:$0xff]
    %v917 = vld [vmem:[%s3 + $0x68] sm:$0xff]
    %v918 = vld [vmem:[%s3 + $0x70] sm:$0xff]
    %v919 = vld [vmem:[%s3 + $0x78] sm:$0xff]
    %v920 = vmul.f32 %v904, 0.01
    %v921 = vmul.f32 %v905, 0.01
    %v922 = vmul.f32 %v906, 0.01
    %v923 = vmul.f32 %v907, 0.01
    %v924 = vmul.f32 %v908, 0.01
    %v925 = vmul.f32 %v909, 0.01
    %v926 = vmul.f32 %v910, 0.01
    %v927 = vmul.f32 %v911, 0.01
    %v928 = vmul.f32 %v912, 0.01
    %v929 = vmul.f32 %v913, 0.01
    %v930 = vmul.f32 %v914, 0.01
    %v931 = vmul.f32 %v915, 0.01
    %v932 = vmul.f32 %v916, 0.01
    %v933 = vmul.f32 %v917, 0.01
    %v934 = vmul.f32 %v918, 0.01
    %v935 = vmul.f32 %v919, 0.01
    %v936 = vadd.f32 %v888, %v920
    %v937 = vadd.f32 %v889, %v921
    %v938 = vadd.f32 %v890, %v922
    %v939 = vadd.f32 %v891, %v923
    %v940 = vadd.f32 %v892, %v924
    %v941 = vadd.f32 %v893, %v925
    %v942 = vadd.f32 %v894, %v926
    %v943 = vadd.f32 %v895, %v927
    %v944 = vadd.f32 %v896, %v928
    %v945 = vadd.f32 %v897, %v929
    %v946 = vadd.f32 %v898, %v930
    %v947 = vadd.f32 %v899, %v931
    %v948 = vadd.f32 %v900, %v932
    %v949 = vadd.f32 %v901, %v933
    %v950 = vadd.f32 %v902, %v934
    %v951 = vadd.f32 %v903, %v935
    %952 = vst [vmem:[#allocation10] sm:$0xff] %v936
    %953 = vst [vmem:[#allocation10 + $0x8] sm:$0xff] %v937
    %954 = vst [vmem:[#allocation10 + $0x10] sm:$0xff] %v938
    %955 = vst [vmem:[#allocation10 + $0x18] sm:$0xff] %v939
    %956 = vst [vmem:[#allocation10 + $0x20] sm:$0xff] %v940
    %957 = vst [vmem:[#allocation10 + $0x28] sm:$0xff] %v941
    %958 = vst [vmem:[#allocation10 + $0x30] sm:$0xff] %v942
    %959 = vst [vmem:[#allocation10 + $0x38] sm:$0xff] %v943
    %960 = vst [vmem:[#allocation10 + $0x40] sm:$0xff] %v944
    %961 = vst [vmem:[#allocation10 + $0x48] sm:$0xff] %v945
    %962 = vst [vmem:[#allocation10 + $0x50] sm:$0xff] %v946
    %963 = vst [vmem:[#allocation10 + $0x58] sm:$0xff] %v947
    %964 = vst [vmem:[#allocation10 + $0x60] sm:$0xff] %v948
    %965 = vst [vmem:[#allocation10 + $0x68] sm:$0xff] %v949
    %966 = vst [vmem:[#allocation10 + $0x70] sm:$0xff] %v950
    %967 = vst [vmem:[#allocation10 + $0x78] sm:$0xff] %v951
    %v968 = vld [vmem:[%s12] sm:$0x1]
    %v969 = vmul.f32 %v968, 0.99
    %v970 = vld [vmem:[%s4] sm:$0x1]
    %v971 = vmul.f32 %v970, 0.01
    %v972 = vadd.f32 %v969, %v971
    %973 = vst [vmem:[#allocation11] sm:$0x1] %v972
    %v974 = vld [vmem:[%s13] sm:$0x1]
    %v975 = vmul.f32 %v974, 0.99
    %v976 = vld [vmem:[%s5] sm:$0x1]
    %v977 = vmul.f32 %v976, 0.01
    %v978 = vadd.f32 %v975, %v977
    %979 = vst [vmem:[#allocation13] sm:$0x1] %v978
    %v980 = vld [vmem:[%s14] sm:$0x1]
    %v981 = vmul.f32 %v980, 0.99
    %v982 = vld [vmem:[%s6] sm:$0x1]
    %v983 = vmul.f32 %v982, 0.01
    %v984 = vadd.f32 %v981, %v983
    %985 = vst [vmem:[#allocation14] sm:$0x1] %v984
    %v986 = vld [vmem:[#allocation5] sm:$0xff]
    %v987 = vld [vmem:[#allocation5 + $0x8] sm:$0xff]
    %v988 = vld [vmem:[#allocation5 + $0x10] sm:$0xff]
    %v989 = vld [vmem:[#allocation5 + $0x18] sm:$0xff]
    %v990 = vld [vmem:[#allocation5 + $0x20] sm:$0xff]
    %v991 = vld [vmem:[#allocation5 + $0x28] sm:$0xff]
    %v992 = vld [vmem:[#allocation5 + $0x30] sm:$0xff]
    %v993 = vld [vmem:[#allocation5 + $0x38] sm:$0xff]
    %v994 = vld [vmem:[#allocation5 + $0x40] sm:$0xff]
    %v995 = vld [vmem:[#allocation5 + $0x48] sm:$0xff]
    %v996 = vld [vmem:[#allocation5 + $0x50] sm:$0xff]
    %v997 = vld [vmem:[#allocation5 + $0x58] sm:$0xff]
    %v998 = vld [vmem:[#allocation5 + $0x60] sm:$0xff]
    %v999 = vld [vmem:[#allocation5 + $0x68] sm:$0xff]
    %v1000 = vld [vmem:[#allocation5 + $0x70] sm:$0xff]
    %v1001 = vld [vmem:[#allocation5 + $0x78] sm:$0xff]
    %v1002 = vmul.f32 %v986, 0.99
    %v1003 = vmul.f32 %v987, 0.99
    %v1004 = vmul.f32 %v988, 0.99
    %v1005 = vmul.f32 %v989, 0.99
    %v1006 = vmul.f32 %v990, 0.99
    %v1007 = vmul.f32 %v991, 0.99
    %v1008 = vmul.f32 %v992, 0.99
    %v1009 = vmul.f32 %v993, 0.99
    %v1010 = vmul.f32 %v994, 0.99
    %v1011 = vmul.f32 %v995, 0.99
    %v1012 = vmul.f32 %v996, 0.99
    %v1013 = vmul.f32 %v997, 0.99
    %v1014 = vmul.f32 %v998, 0.99
    %v1015 = vmul.f32 %v999, 0.99
    %v1016 = vmul.f32 %v1000, 0.99
    %v1017 = vmul.f32 %v1001, 0.99
    %v1018 = vld [vmem:[%s7] sm:$0xff]
    %v1019 = vld [vmem:[%s7 + $0x8] sm:$0xff]
    %v1020 = vld [vmem:[%s7 + $0x10] sm:$0xff]
    %v1021 = vld [vmem:[%s7 + $0x18] sm:$0xff]
    %v1022 = vld [vmem:[%s7 + $0x20] sm:$0xff]
    %v1023 = vld [vmem:[%s7 + $0x28] sm:$0xff]
    %v1024 = vld [vmem:[%s7 + $0x30] sm:$0xff]
    %v1025 = vld [vmem:[%s7 + $0x38] sm:$0xff]
    %v1026 = vld [vmem:[%s7 + $0x40] sm:$0xff]
    %v1027 = vld [vmem:[%s7 + $0x48] sm:$0xff]
    %v1028 = vld [vmem:[%s7 + $0x50] sm:$0xff]
    %v1029 = vld [vmem:[%s7 + $0x58] sm:$0xff]
    %v1030 = vld [vmem:[%s7 + $0x60] sm:$0xff]
    %v1031 = vld [vmem:[%s7 + $0x68] sm:$0xff]
    %v1032 = vld [vmem:[%s7 + $0x70] sm:$0xff]
    %v1033 = vld [vmem:[%s7 + $0x78] sm:$0xff]
    %v1034 = vmul.f32 %v1018, 0.01
    %v1035 = vmul.f32 %v1019, 0.01
    %v1036 = vmul.f32 %v1020, 0.01
    %v1037 = vmul.f32 %v1021, 0.01
    %v1038 = vmul.f32 %v1022, 0.01
    %v1039 = vmul.f32 %v1023, 0.01
    %v1040 = vmul.f32 %v1024, 0.01
    %v1041 = vmul.f32 %v1025, 0.01
    %v1042 = vmul.f32 %v1026, 0.01
    %v1043 = vmul.f32 %v1027, 0.01
    %v1044 = vmul.f32 %v1028, 0.01
    %v1045 = vmul.f32 %v1029, 0.01
    %v1046 = vmul.f32 %v1030, 0.01
    %v1047 = vmul.f32 %v1031, 0.01
    %v1048 = vmul.f32 %v1032, 0.01
    %v1049 = vmul.f32 %v1033, 0.01
    %v1050 = vadd.f32 %v1002, %v1034
    %v1051 = vadd.f32 %v1003, %v1035
    %v1052 = vadd.f32 %v1004, %v1036
    %v1053 = vadd.f32 %v1005, %v1037
    %v1054 = vadd.f32 %v1006, %v1038
    %v1055 = vadd.f32 %v1007, %v1039
    %v1056 = vadd.f32 %v1008, %v1040
    %v1057 = vadd.f32 %v1009, %v1041
    %v1058 = vadd.f32 %v1010, %v1042
    %v1059 = vadd.f32 %v1011, %v1043
    %v1060 = vadd.f32 %v1012, %v1044
    %v1061 = vadd.f32 %v1013, %v1045
    %v1062 = vadd.f32 %v1014, %v1046
    %v1063 = vadd.f32 %v1015, %v1047
    %v1064 = vadd.f32 %v1016, %v1048
    %v1065 = vadd.f32 %v1017, %v1049
    %1066 = vst [vmem:[#allocation16] sm:$0xff] %v1050
    %1067 = vst [vmem:[#allocation16 + $0x8] sm:$0xff] %v1051
    %1068 = vst [vmem:[#allocation16 + $0x10] sm:$0xff] %v1052
    %1069 = vst [vmem:[#allocation16 + $0x18] sm:$0xff] %v1053
    %1070 = vst [vmem:[#allocation16 + $0x20] sm:$0xff] %v1054
    %1071 = vst [vmem:[#allocation16 + $0x28] sm:$0xff] %v1055
    %1072 = vst [vmem:[#allocation16 + $0x30] sm:$0xff] %v1056
    %1073 = vst [vmem:[#allocation16 + $0x38] sm:$0xff] %v1057
    %1074 = vst [vmem:[#allocation16 + $0x40] sm:$0xff] %v1058
    %1075 = vst [vmem:[#allocation16 + $0x48] sm:$0xff] %v1059
    %1076 = vst [vmem:[#allocation16 + $0x50] sm:$0xff] %v1060
    %1077 = vst [vmem:[#allocation16 + $0x58] sm:$0xff] %v1061
    %1078 = vst [vmem:[#allocation16 + $0x60] sm:$0xff] %v1062
    %1079 = vst [vmem:[#allocation16 + $0x68] sm:$0xff] %v1063
    %1080 = vst [vmem:[#allocation16 + $0x70] sm:$0xff] %v1064
    %1081 = vst [vmem:[#allocation16 + $0x78] sm:$0xff] %v1065
    %v1082 = vld [vmem:[%s16] sm:$0x1]
    %v1083 = vmul.f32 %v1082, 0.99
    %v1084 = vld [vmem:[%s8] sm:$0x1]
    %v1085 = vmul.f32 %v1084, 0.01
    %v1086 = vadd.f32 %v1083, %v1085
    %1087 = vst [vmem:[#allocation17] sm:$0x1] %v1086
    %v1088 = vld [vmem:[%s0] sm:$0xff]
    %v1089 = vld [vmem:[%s0 + $0x8] sm:$0xff]
    %v1090 = vld [vmem:[%s0 + $0x10] sm:$0xff]
    %v1091 = vld [vmem:[%s0 + $0x18] sm:$0xff]
    %v1092 = vld [vmem:[%s0 + $0x20] sm:$0xff]
    %v1093 = vld [vmem:[%s0 + $0x28] sm:$0xff]
    %v1094 = vld [vmem:[%s0 + $0x30] sm:$0xff]
    %v1095 = vld [vmem:[%s0 + $0x38] sm:$0xff]
    %v1096 = vld [vmem:[%s0 + $0x40] sm:$0xff]
    %v1097 = vld [vmem:[%s0 + $0x48] sm:$0xff]
    %v1098 = vld [vmem:[%s0 + $0x50] sm:$0xff]
    %v1099 = vld [vmem:[%s0 + $0x58] sm:$0xff]
    %v1100 = vld [vmem:[%s0 + $0x60] sm:$0xff]
    %v1101 = vld [vmem:[%s0 + $0x68] sm:$0xff]
    %v1102 = vld [vmem:[%s0 + $0x70] sm:$0xff]
    %v1103 = vld [vmem:[%s0 + $0x78] sm:$0xff]
    %v1105 = vlaneseq
    %v1106 = vshrl.u32 %v1105, 7
    %v1107 = vsub.s32 0, %v1106
    %v1108 = vrot.slane %v870, %v1107
    %1110 = vmatprep.subr.mxu0 0.0
    %1111 = vmatpush1.msra.mxu0 %v625
    %1112 = vmatprep.subr.mxu0 0.0
    %1113 = vmatpush1.msra.mxu0 %v624
    %1114 = vmatprep.subr.mxu0 0.0
    %1115 = vmatpush1.msra.mxu0 %v623
    %1116 = vmatprep.subr.mxu0 0.0
    %1117 = vmatpush1.msra.mxu0 %v622
    %1118 = vmatprep.subr.mxu0 0.0
    %1119 = vmatpush1.msra.mxu0 %v621
    %1120 = vmatprep.subr.mxu0 0.0
    %1121 = vmatpush1.msra.mxu0 %v620
    %1122 = vmatprep.subr.mxu0 0.0
    %1123 = vmatpush1.msra.mxu0 %v619
    %1124 = vmatprep.subr.mxu0 0.0
    %1125 = vmatpush1.msra.mxu0 %v618
    %1126 = vmatprep.subr.mxu0 0.0
    %1127 = vmatpush1.msra.mxu0 %v617
    %1128 = vmatprep.subr.mxu0 0.0
    %1129 = vmatpush1.msra.mxu0 %v616
    %1130 = vmatprep.subr.mxu0 0.0
    %1131 = vmatpush1.msra.mxu0 %v615
    %1132 = vmatprep.subr.mxu0 0.0
    %1133 = vmatpush1.msra.mxu0 %v614
    %1134 = vmatprep.subr.mxu0 0.0
    %1135 = vmatpush1.msra.mxu0 %v613
    %1136 = vmatprep.subr.mxu0 0.0
    %1137 = vmatpush1.msra.mxu0 %v612
    %1138 = vmatprep.subr.mxu0 0.0
    %1139 = vmatpush1.msra.mxu0 %v611
    %1140 = vmatprep.subr.mxu0 0.0
    %1141 = vmatpush1.msra.mxu0 %v610
    %1142 = vmatprep.subr.mxu0 0.0
    %1143 = vmatpush2.msra.mxu0 %v641
    %1144 = vmatprep.subr.mxu0 0.0
    %1145 = vmatpush2.msra.mxu0 %v640
    %1146 = vmatprep.subr.mxu0 0.0
    %1147 = vmatpush2.msra.mxu0 %v639
    %1148 = vmatprep.subr.mxu0 0.0
    %1149 = vmatpush2.msra.mxu0 %v638
    %1150 = vmatprep.subr.mxu0 0.0
    %1151 = vmatpush2.msra.mxu0 %v637
    %1152 = vmatprep.subr.mxu0 0.0
    %1153 = vmatpush2.msra.mxu0 %v636
    %1154 = vmatprep.subr.mxu0 0.0
    %1155 = vmatpush2.msra.mxu0 %v635
    %1156 = vmatprep.subr.mxu0 0.0
    %1157 = vmatpush2.msra.mxu0 %v634
    %1158 = vmatprep.subr.mxu0 0.0
    %1159 = vmatpush2.msra.mxu0 %v633
    %1160 = vmatprep.subr.mxu0 0.0
    %1161 = vmatpush2.msra.mxu0 %v632
    %1162 = vmatprep.subr.mxu0 0.0
    %1163 = vmatpush2.msra.mxu0 %v631
    %1164 = vmatprep.subr.mxu0 0.0
    %1165 = vmatpush2.msra.mxu0 %v630
    %1166 = vmatprep.subr.mxu0 0.0
    %1167 = vmatpush2.msra.mxu0 %v629
    %1168 = vmatprep.subr.mxu0 0.0
    %1169 = vmatpush2.msra.mxu0 %v628
    %1170 = vmatprep.subr.mxu0 0.0
    %1171 = vmatpush2.msra.mxu0 %v627
    %1172 = vmatprep.subr.mxu0 0.0
    %1173 = vmatpush2.msra.mxu0 %v626
    %1174 = vmatprep.mubr.f32.mxu0 %v1089
    %1175 = vmatmul.mubr.f32.gmra.mxu0 %v1088
    %v1176 = vpop.f32.mrf.mxu0
    %v1177 = vadd.f32 %v1108, %v1176
    %v1178 = vpop.f32.mrf.mxu0
    %1179 = vmatprep.mubr.f32.mxu0 %v1097
    %1180 = vmatmul.mubr.f32.gmra.mxu0 %v1096
    %v1181 = vpop.f32.mrf.mxu0
    %v1182 = vadd.f32 %v1108, %v1181
    %v1183 = vpop.f32.mrf.mxu0
    %1184 = vdwg.mxu0
    %1185 = vmatprep.subr.mxu0 0.0
    %1186 = vmatpush1.msra.mxu0 %v657
    %1187 = vmatprep.subr.mxu0 0.0
    %1188 = vmatpush1.msra.mxu0 %v656
    %1189 = vmatprep.subr.mxu0 0.0
    %1190 = vmatpush1.msra.mxu0 %v655
    %1191 = vmatprep.subr.mxu0 0.0
    %1192 = vmatpush1.msra.mxu0 %v654
    %1193 = vmatprep.subr.mxu0 0.0
    %1194 = vmatpush1.msra.mxu0 %v653
    %1195 = vmatprep.subr.mxu0 0.0
    %1196 = vmatpush1.msra.mxu0 %v652
    %1197 = vmatprep.subr.mxu0 0.0
    %1198 = vmatpush1.msra.mxu0 %v651
    %1199 = vmatprep.subr.mxu0 0.0
    %1200 = vmatpush1.msra.mxu0 %v650
    %1201 = vmatprep.subr.mxu0 0.0
    %1202 = vmatpush1.msra.mxu0 %v649
    %1203 = vmatprep.subr.mxu0 0.0
    %1204 = vmatpush1.msra.mxu0 %v648
    %1205 = vmatprep.subr.mxu0 0.0
    %1206 = vmatpush1.msra.mxu0 %v647
    %1207 = vmatprep.subr.mxu0 0.0
    %1208 = vmatpush1.msra.mxu0 %v646
    %1209 = vmatprep.subr.mxu0 0.0
    %1210 = vmatpush1.msra.mxu0 %v645
    %1211 = vmatprep.subr.mxu0 0.0
    %1212 = vmatpush1.msra.mxu0 %v644
    %1213 = vmatprep.subr.mxu0 0.0
    %1214 = vmatpush1.msra.mxu0 %v643
    %1215 = vmatprep.subr.mxu0 0.0
    %1216 = vmatpush1.msra.mxu0 %v642
    %1217 = vmatprep.subr.mxu0 0.0
    %1218 = vmatpush2.msra.mxu0 %v673
    %1219 = vmatprep.subr.mxu0 0.0
    %1220 = vmatpush2.msra.mxu0 %v672
    %1221 = vmatprep.subr.mxu0 0.0
    %1222 = vmatpush2.msra.mxu0 %v671
    %1223 = vmatprep.subr.mxu0 0.0
    %1224 = vmatpush2.msra.mxu0 %v670
    %1225 = vmatprep.subr.mxu0 0.0
    %1226 = vmatpush2.msra.mxu0 %v669
    %1227 = vmatprep.subr.mxu0 0.0
    %1228 = vmatpush2.msra.mxu0 %v668
    %1229 = vmatprep.subr.mxu0 0.0
    %1230 = vmatpush2.msra.mxu0 %v667
    %1231 = vmatprep.subr.mxu0 0.0
    %1232 = vmatpush2.msra.mxu0 %v666
    %1233 = vmatprep.subr.mxu0 0.0
    %1234 = vmatpush2.msra.mxu0 %v665
    %1235 = vmatprep.subr.mxu0 0.0
    %1236 = vmatpush2.msra.mxu0 %v664
    %1237 = vmatprep.subr.mxu0 0.0
    %1238 = vmatpush2.msra.mxu0 %v663
    %1239 = vmatprep.subr.mxu0 0.0
    %1240 = vmatpush2.msra.mxu0 %v662
    %1241 = vmatprep.subr.mxu0 0.0
    %1242 = vmatpush2.msra.mxu0 %v661
    %1243 = vmatprep.subr.mxu0 0.0
    %1244 = vmatpush2.msra.mxu0 %v660
    %1245 = vmatprep.subr.mxu0 0.0
    %1246 = vmatpush2.msra.mxu0 %v659
    %1247 = vmatprep.subr.mxu0 0.0
    %1248 = vmatpush2.msra.mxu0 %v658
    %1249 = vmatprep.mubr.f32.mxu0 %v1091
    %1250 = vmatmul.mubr.f32.gmra.mxu0 %v1090
    %v1251 = vpop.f32.mrf.mxu0
    %v1252 = vadd.f32 %v1177, %v1251
    %v1253 = vpop.f32.mrf.mxu0
    %1254 = vmatprep.mubr.f32.mxu0 %v1099
    %1255 = vmatmul.mubr.f32.gmra.mxu0 %v1098
    %v1256 = vpop.f32.mrf.mxu0
    %v1257 = vadd.f32 %v1182, %v1256
    %v1258 = vpop.f32.mrf.mxu0
    %1259 = vdwg.mxu0
    %1260 = vmatprep.subr.mxu0 0.0
    %1261 = vmatpush1.msra.mxu0 %v689
    %1262 = vmatprep.subr.mxu0 0.0
    %1263 = vmatpush1.msra.mxu0 %v688
    %1264 = vmatprep.subr.mxu0 0.0
    %1265 = vmatpush1.msra.mxu0 %v687
    %1266 = vmatprep.subr.mxu0 0.0
    %1267 = vmatpush1.msra.mxu0 %v686
    %1268 = vmatprep.subr.mxu0 0.0
    %1269 = vmatpush1.msra.mxu0 %v685
    %1270 = vmatprep.subr.mxu0 0.0
    %1271 = vmatpush1.msra.mxu0 %v684
    %1272 = vmatprep.subr.mxu0 0.0
    %1273 = vmatpush1.msra.mxu0 %v683
    %1274 = vmatprep.subr.mxu0 0.0
    %1275 = vmatpush1.msra.mxu0 %v682
    %1276 = vmatprep.subr.mxu0 0.0
    %1277 = vmatpush1.msra.mxu0 %v681
    %1278 = vmatprep.subr.mxu0 0.0
    %1279 = vmatpush1.msra.mxu0 %v680
    %1280 = vmatprep.subr.mxu0 0.0
    %1281 = vmatpush1.msra.mxu0 %v679
    %1282 = vmatprep.subr.mxu0 0.0
    %1283 = vmatpush1.msra.mxu0 %v678
    %1284 = vmatprep.subr.mxu0 0.0
    %1285 = vmatpush1.msra.mxu0 %v677
    %1286 = vmatprep.subr.mxu0 0.0
    %1287 = vmatpush1.msra.mxu0 %v676
    %1288 = vmatprep.subr.mxu0 0.0
    %1289 = vmatpush1.msra.mxu0 %v675
    %1290 = vmatprep.subr.mxu0 0.0
    %1291 = vmatpush1.msra.mxu0 %v674
    %1292 = vmatprep.subr.mxu0 0.0
    %1293 = vmatpush2.msra.mxu0 %v705
    %1294 = vmatprep.subr.mxu0 0.0
    %1295 = vmatpush2.msra.mxu0 %v704
    %1296 = vmatprep.subr.mxu0 0.0
    %1297 = vmatpush2.msra.mxu0 %v703
    %1298 = vmatprep.subr.mxu0 0.0
    %1299 = vmatpush2.msra.mxu0 %v702
    %1300 = vmatprep.subr.mxu0 0.0
    %1301 = vmatpush2.msra.mxu0 %v701
    %1302 = vmatprep.subr.mxu0 0.0
    %1303 = vmatpush2.msra.mxu0 %v700
    %1304 = vmatprep.subr.mxu0 0.0
    %1305 = vmatpush2.msra.mxu0 %v699
    %1306 = vmatprep.subr.mxu0 0.0
    %1307 = vmatpush2.msra.mxu0 %v698
    %1308 = vmatprep.subr.mxu0 0.0
    %1309 = vmatpush2.msra.mxu0 %v697
    %1310 = vmatprep.subr.mxu0 0.0
    %1311 = vmatpush2.msra.mxu0 %v696
    %1312 = vmatprep.subr.mxu0 0.0
    %1313 = vmatpush2.msra.mxu0 %v695
    %1314 = vmatprep.subr.mxu0 0.0
    %1315 = vmatpush2.msra.mxu0 %v694
    %1316 = vmatprep.subr.mxu0 0.0
    %1317 = vmatpush2.msra.mxu0 %v693
    %1318 = vmatprep.subr.mxu0 0.0
    %1319 = vmatpush2.msra.mxu0 %v692
    %1320 = vmatprep.subr.mxu0 0.0
    %1321 = vmatpush2.msra.mxu0 %v691
    %1322 = vmatprep.subr.mxu0 0.0
    %1323 = vmatpush2.msra.mxu0 %v690
    %1324 = vmatprep.mubr.f32.mxu0 %v1093
    %1325 = vmatmul.mubr.f32.gmra.mxu0 %v1092
    %v1326 = vpop.f32.mrf.mxu0
    %v1327 = vadd.f32 %v1252, %v1326
    %v1328 = vpop.f32.mrf.mxu0
    %1329 = vmatprep.mubr.f32.mxu0 %v1101
    %1330 = vmatmul.mubr.f32.gmra.mxu0 %v1100
    %v1331 = vpop.f32.mrf.mxu0
    %v1332 = vadd.f32 %v1257, %v1331
    %v1333 = vpop.f32.mrf.mxu0
    %1334 = vdwg.mxu0
    %1335 = vmatprep.subr.mxu0 0.0
    %1336 = vmatpush1.msra.mxu0 %v721
    %1337 = vmatprep.subr.mxu0 0.0
    %1338 = vmatpush1.msra.mxu0 %v720
    %1339 = vmatprep.subr.mxu0 0.0
    %1340 = vmatpush1.msra.mxu0 %v719
    %1341 = vmatprep.subr.mxu0 0.0
    %1342 = vmatpush1.msra.mxu0 %v718
    %1343 = vmatprep.subr.mxu0 0.0
    %1344 = vmatpush1.msra.mxu0 %v717
    %1345 = vmatprep.subr.mxu0 0.0
    %1346 = vmatpush1.msra.mxu0 %v716
    %1347 = vmatprep.subr.mxu0 0.0
    %1348 = vmatpush1.msra.mxu0 %v715
    %1349 = vmatprep.subr.mxu0 0.0
    %1350 = vmatpush1.msra.mxu0 %v714
    %1351 = vmatprep.subr.mxu0 0.0
    %1352 = vmatpush1.msra.mxu0 %v713
    %1353 = vmatprep.subr.mxu0 0.0
    %1354 = vmatpush1.msra.mxu0 %v712
    %1355 = vmatprep.subr.mxu0 0.0
    %1356 = vmatpush1.msra.mxu0 %v711
    %1357 = vmatprep.subr.mxu0 0.0
    %1358 = vmatpush1.msra.mxu0 %v710
    %1359 = vmatprep.subr.mxu0 0.0
    %1360 = vmatpush1.msra.mxu0 %v709
    %1361 = vmatprep.subr.mxu0 0.0
    %1362 = vmatpush1.msra.mxu0 %v708
    %1363 = vmatprep.subr.mxu0 0.0
    %1364 = vmatpush1.msra.mxu0 %v707
    %1365 = vmatprep.subr.mxu0 0.0
    %1366 = vmatpush1.msra.mxu0 %v706
    %1367 = vmatprep.subr.mxu0 0.0
    %1368 = vmatpush2.msra.mxu0 %v737
    %1369 = vmatprep.subr.mxu0 0.0
    %1370 = vmatpush2.msra.mxu0 %v736
    %1371 = vmatprep.subr.mxu0 0.0
    %1372 = vmatpush2.msra.mxu0 %v735
    %1373 = vmatprep.subr.mxu0 0.0
    %1374 = vmatpush2.msra.mxu0 %v734
    %1375 = vmatprep.subr.mxu0 0.0
    %1376 = vmatpush2.msra.mxu0 %v733
    %1377 = vmatprep.subr.mxu0 0.0
    %1378 = vmatpush2.msra.mxu0 %v732
    %1379 = vmatprep.subr.mxu0 0.0
    %1380 = vmatpush2.msra.mxu0 %v731
    %1381 = vmatprep.subr.mxu0 0.0
    %1382 = vmatpush2.msra.mxu0 %v730
    %1383 = vmatprep.subr.mxu0 0.0
    %1384 = vmatpush2.msra.mxu0 %v729
    %1385 = vmatprep.subr.mxu0 0.0
    %1386 = vmatpush2.msra.mxu0 %v728
    %1387 = vmatprep.subr.mxu0 0.0
    %1388 = vmatpush2.msra.mxu0 %v727
    %1389 = vmatprep.subr.mxu0 0.0
    %1390 = vmatpush2.msra.mxu0 %v726
    %1391 = vmatprep.subr.mxu0 0.0
    %1392 = vmatpush2.msra.mxu0 %v725
    %1393 = vmatprep.subr.mxu0 0.0
    %1394 = vmatpush2.msra.mxu0 %v724
    %1395 = vmatprep.subr.mxu0 0.0
    %1396 = vmatpush2.msra.mxu0 %v723
    %1397 = vmatprep.subr.mxu0 0.0
    %1398 = vmatpush2.msra.mxu0 %v722
    %1399 = vmatprep.mubr.f32.mxu0 %v1095
    %1400 = vmatmul.mubr.f32.gmra.mxu0 %v1094
    %v1401 = vpop.f32.mrf.mxu0
    %v1402 = vadd.f32 %v1327, %v1401
    %v1403 = vpop.f32.mrf.mxu0
    %1404 = vmatprep.mubr.f32.mxu0 %v1103
    %1405 = vmatmul.mubr.f32.gmra.mxu0 %v1102
    %v1406 = vpop.f32.mrf.mxu0
    %v1407 = vadd.f32 %v1332, %v1406
    %v1408 = vpop.f32.mrf.mxu0
    %1409 = vdwg.mxu0
    %v1411 = vlaneseq
    %v1412 = vshrl.u32 %v1411, 7
    %v1413 = vsub.s32 0, %v1412
    %v1414 = vrot.slane %v972, %v1413
    %1416 = vmatprep.subr.mxu0 0.0
    %1417 = vmatpush1.msra.mxu0 %v951
    %1418 = vmatprep.subr.mxu0 0.0
    %1419 = vmatpush1.msra.mxu0 %v950
    %1420 = vmatprep.subr.mxu0 0.0
    %1421 = vmatpush1.msra.mxu0 %v949
    %1422 = vmatprep.subr.mxu0 0.0
    %1423 = vmatpush1.msra.mxu0 %v948
    %1424 = vmatprep.subr.mxu0 0.0
    %1425 = vmatpush1.msra.mxu0 %v947
    %1426 = vmatprep.subr.mxu0 0.0
    %1427 = vmatpush1.msra.mxu0 %v946
    %1428 = vmatprep.subr.mxu0 0.0
    %1429 = vmatpush1.msra.mxu0 %v945
    %1430 = vmatprep.subr.mxu0 0.0
    %1431 = vmatpush1.msra.mxu0 %v944
    %1432 = vmatprep.subr.mxu0 0.0
    %1433 = vmatpush1.msra.mxu0 %v943
    %1434 = vmatprep.subr.mxu0 0.0
    %1435 = vmatpush1.msra.mxu0 %v942
    %1436 = vmatprep.subr.mxu0 0.0
    %1437 = vmatpush1.msra.mxu0 %v941
    %1438 = vmatprep.subr.mxu0 0.0
    %1439 = vmatpush1.msra.mxu0 %v940
    %1440 = vmatprep.subr.mxu0 0.0
    %1441 = vmatpush1.msra.mxu0 %v939
    %1442 = vmatprep.subr.mxu0 0.0
    %1443 = vmatpush1.msra.mxu0 %v938
    %1444 = vmatprep.subr.mxu0 0.0
    %1445 = vmatpush1.msra.mxu0 %v937
    %1446 = vmatprep.subr.mxu0 0.0
    %1447 = vmatpush1.msra.mxu0 %v936
    %1448 = vmatprep.subr.mxu0 0.0
    %1449 = vmatpush2.msra.mxu0 0.0
    %1450 = vmatprep.subr.mxu0 0.0
    %1451 = vmatpush2.msra.mxu0 0.0
    %1452 = vmatprep.subr.mxu0 0.0
    %1453 = vmatpush2.msra.mxu0 0.0
    %1454 = vmatprep.subr.mxu0 0.0
    %1455 = vmatpush2.msra.mxu0 0.0
    %1456 = vmatprep.subr.mxu0 0.0
    %1457 = vmatpush2.msra.mxu0 0.0
    %1458 = vmatprep.subr.mxu0 0.0
    %1459 = vmatpush2.msra.mxu0 0.0
    %1460 = vmatprep.subr.mxu0 0.0
    %1461 = vmatpush2.msra.mxu0 0.0
    %1462 = vmatprep.subr.mxu0 0.0
    %1463 = vmatpush2.msra.mxu0 0.0
    %1464 = vmatprep.subr.mxu0 0.0
    %1465 = vmatpush2.msra.mxu0 0.0
    %1466 = vmatprep.subr.mxu0 0.0
    %1467 = vmatpush2.msra.mxu0 0.0
    %1468 = vmatprep.subr.mxu0 0.0
    %1469 = vmatpush2.msra.mxu0 0.0
    %1470 = vmatprep.subr.mxu0 0.0
    %1471 = vmatpush2.msra.mxu0 0.0
    %1472 = vmatprep.subr.mxu0 0.0
    %1473 = vmatpush2.msra.mxu0 0.0
    %1474 = vmatprep.subr.mxu0 0.0
    %1475 = vmatpush2.msra.mxu0 0.0
    %1476 = vmatprep.subr.mxu0 0.0
    %1477 = vmatpush2.msra.mxu0 0.0
    %1478 = vmatprep.subr.mxu0 0.0
    %1479 = vmatpush2.msra.mxu0 0.0
    %1480 = vmatprep.mubr.f32.mxu0 0.0
    %1481 = vmatmul.mubr.f32.gmra.mxu0 %v1402
    %v1482 = vpop.f32.mrf.mxu0
    %v1483 = vadd.f32 %v1414, %v1482
    %v1484 = vpop.f32.mrf.mxu0
    %1485 = vmatprep.mubr.f32.mxu0 0.0
    %1486 = vmatmul.mubr.f32.gmra.mxu0 %v1407
    %v1487 = vpop.f32.mrf.mxu0
    %v1488 = vadd.f32 %v1414, %v1487
    %v1489 = vpop.f32.mrf.mxu0
    %1490 = vdwg.mxu0
    %v1491 = vrot.slane %v1483, 4
    %v1492 = vadd.f32 %v1483, %v1491
    %v1493 = vrot.slane %v1492, 2
    %v1494 = vadd.f32 %v1492, %v1493
    %v1495 = vrot.slane %v1494, 1
    %v1496 = vadd.f32 %v1494, %v1495
    %v1497 = vrcp.pop 8.0
    %v1498 = vmul.f32 %v1496, %v1497
    %v1499 = vmul.f32 %v1483, %v1483
    %v1500 = vrot.slane %v1499, 4
    %v1501 = vadd.f32 %v1499, %v1500
    %v1502 = vrot.slane %v1501, 2
    %v1503 = vadd.f32 %v1501, %v1502
    %v1504 = vrot.slane %v1503, 1
    %v1505 = vadd.f32 %v1503, %v1504
    %v1506 = vmul.f32 %v1505, %v1497
    %v1507 = vmul.f32 %v1498, %v1498
    %v1508 = vsub.f32 %v1506, %v1507
    %v1509 = vmax.f32 %v1508, 0.0
    %v1510 = vsub.f32 %v1483, %v1498
    %v1511 = vadd.f32 %v1509, 1e-05
    %v1512 = vrsqrt.pop %v1511
    %v1513 = vmul.f32 %v1510, %v1512
    %v1515 = vlaneseq
    %v1516 = vshrl.u32 %v1515, 7
    %v1517 = vsub.s32 0, %v1516
    %v1518 = vrot.slane %v978, %v1517
    %v1520 = vmul.f32 %v1513, %v1518
    %v1522 = vlaneseq
    %v1523 = vshrl.u32 %v1522, 7
    %v1524 = vsub.s32 0, %v1523
    %v1525 = vrot.slane %v984, %v1524
    %v1527 = vadd.f32 %v1520, %v1525
    %v1528 = vmax.f32 %v1527, 0.0
    %v1529 = vrot.slane %v1488, 4
    %v1530 = vadd.f32 %v1488, %v1529
    %v1531 = vrot.slane %v1530, 2
    %v1532 = vadd.f32 %v1530, %v1531
    %v1533 = vrot.slane %v1532, 1
    %v1534 = vadd.f32 %v1532, %v1533
    %v1535 = vmul.f32 %v1534, %v1497
    %v1536 = vmul.f32 %v1488, %v1488
    %v1537 = vrot.slane %v1536, 4
    %v1538 = vadd.f32 %v1536, %v1537
    %v1539 = vrot.slane %v1538, 2
    %v1540 = vadd.f32 %v1538, %v1539
    %v1541 = vrot.slane %v1540, 1
    %v1542 = vadd.f32 %v1540, %v1541
    %v1543 = vmul.f32 %v1542, %v1497
    %v1544 = vmul.f32 %v1535, %v1535
    %v1545 = vsub.f32 %v1543, %v1544
    %v1546 = vmax.f32 %v1545, 0.0
    %v1547 = vsub.f32 %v1488, %v1535
    %v1548 = vadd.f32 %v1546, 1e-05
    %v1549 = vrsqrt.pop %v1548
    %v1550 = vmul.f32 %v1547, %v1549
    %v1551 = vmul.f32 %v1550, %v1518
    %v1552 = vadd.f32 %v1551, %v1525
    %v1553 = vmax.f32 %v1552, 0.0
    %v1555 = vlaneseq
    %v1556 = vshrl.u32 %v1555, 7
    %v1557 = vsub.s32 0, %v1556
    %v1558 = vrot.slane %v1086, %v1557
    %1560 = vmatprep.subr.mxu0 0.0
    %1561 = vmatpush1.msra.mxu0 %v1065
    %1562 = vmatprep.subr.mxu0 0.0
    %1563 = vmatpush1.msra.mxu0 %v1064
    %1564 = vmatprep.subr.mxu0 0.0
    %1565 = vmatpush1.msra.mxu0 %v1063
    %1566 = vmatprep.subr.mxu0 0.0
    %1567 = vmatpush1.msra.mxu0 %v1062
    %1568 = vmatprep.subr.mxu0 0.0
    %1569 = vmatpush1.msra.mxu0 %v1061
    %1570 = vmatprep.subr.mxu0 0.0
    %1571 = vmatpush1.msra.mxu0 %v1060
    %1572 = vmatprep.subr.mxu0 0.0
    %1573 = vmatpush1.msra.mxu0 %v1059
    %1574 = vmatprep.subr.mxu0 0.0
    %1575 = vmatpush1.msra.mxu0 %v1058
    %1576 = vmatprep.subr.mxu0 0.0
    %1577 = vmatpush1.msra.mxu0 %v1057
    %1578 = vmatprep.subr.mxu0 0.0
    %1579 = vmatpush1.msra.mxu0 %v1056
    %1580 = vmatprep.subr.mxu0 0.0
    %1581 = vmatpush1.msra.mxu0 %v1055
    %1582 = vmatprep.subr.mxu0 0.0
    %1583 = vmatpush1.msra.mxu0 %v1054
    %1584 = vmatprep.subr.mxu0 0.0
    %1585 = vmatpush1.msra.mxu0 %v1053
    %1586 = vmatprep.subr.mxu0 0.0
    %1587 = vmatpush1.msra.mxu0 %v1052
    %1588 = vmatprep.subr.mxu0 0.0
    %1589 = vmatpush1.msra.mxu0 %v1051
    %1590 = vmatprep.subr.mxu0 0.0
    %1591 = vmatpush1.msra.mxu0 %v1050
    %1592 = vmatprep.subr.mxu0 0.0
    %1593 = vmatpush2.msra.mxu0 0.0
    %1594 = vmatprep.subr.mxu0 0.0
    %1595 = vmatpush2.msra.mxu0 0.0
    %1596 = vmatprep.subr.mxu0 0.0
    %1597 = vmatpush2.msra.mxu0 0.0
    %1598 = vmatprep.subr.mxu0 0.0
    %1599 = vmatpush2.msra.mxu0 0.0
    %1600 = vmatprep.subr.mxu0 0.0
    %1601 = vmatpush2.msra.mxu0 0.0
    %1602 = vmatprep.subr.mxu0 0.0
    %1603 = vmatpush2.msra.mxu0 0.0
    %1604 = vmatprep.subr.mxu0 0.0
    %1605 = vmatpush2.msra.mxu0 0.0
    %1606 = vmatprep.subr.mxu0 0.0
    %1607 = vmatpush2.msra.mxu0 0.0
    %1608 = vmatprep.subr.mxu0 0.0
    %1609 = vmatpush2.msra.mxu0 0.0
    %1610 = vmatprep.subr.mxu0 0.0
    %1611 = vmatpush2.msra.mxu0 0.0
    %1612 = vmatprep.subr.mxu0 0.0
    %1613 = vmatpush2.msra.mxu0 0.0
    %1614 = vmatprep.subr.mxu0 0.0
    %1615 = vmatpush2.msra.mxu0 0.0
    %1616 = vmatprep.subr.mxu0 0.0
    %1617 = vmatpush2.msra.mxu0 0.0
    %1618 = vmatprep.subr.mxu0 0.0
    %1619 = vmatpush2.msra.mxu0 0.0
    %1620 = vmatprep.subr.mxu0 0.0
    %1621 = vmatpush2.msra.mxu0 0.0
    %1622 = vmatprep.subr.mxu0 0.0
    %1623 = vmatpush2.msra.mxu0 0.0
    %1624 = vmatprep.mubr.f32.mxu0 0.0
    %1625 = vmatmul.mubr.f32.gmra.mxu0 %v1528
    %v1626 = vpop.f32.mrf.mxu0
    %v1627 = vadd.f32 %v1558, %v1626
    %v1628 = vpop.f32.mrf.mxu0
    %1629 = vmatprep.mubr.f32.mxu0 0.0
    %1630 = vmatmul.mubr.f32.gmra.mxu0 %v1553
    %v1631 = vpop.f32.mrf.mxu0
    %v1632 = vadd.f32 %v1558, %v1631
    %v1633 = vpop.f32.mrf.mxu0
    %1634 = vdwg.mxu0
    %1635 = vst [vmem:[%s17] sm:$0xff] %v1627
    %1636 = vst [vmem:[%s17 + $0x8] sm:$0xff] %v1632
    // Predicated region
    $region78: #{byol_forward.3} parent=1 // pred_check
      _
    $region79: #{byol_forward.3} parent=1 // pred_check_branch
      %1638 = sbr.rel (0) target = $region81
    $region80: #{byol_forward.3} parent=1 // pred_region
      _
    $region81: #{byol_forward.3} parent=1 // pred_fallthru
      _
    // Predicated region
    $region82: #{byol_forward.3} parent=1 // pred_check
      _
    $region83: #{byol_forward.3} parent=1 // pred_check_branch
      %1640 = sbr.rel (0) target = $region85
    $region84: #{byol_forward.3} parent=1 // pred_region
      %s1642 = ssub.s32 16384, 16384
      %1643 = vsyncadd [#allocation4], %s1642
      %s1644 = sshll.u32 [#allocation7], 4
      %s1645 = int_to_ptr.vmem [resolvable:$true] %s1644
      %1650 = dma.vmem_to_hbm [thread:$0]  %s1645, 16384, %s18, [#allocation4], 128, 128, 8
    $region85: #{byol_forward.3} parent=1 // pred_fallthru
      _
    // Predicated region
    $region86: #{byol_forward.3} parent=1 // pred_check
      _
    $region87: #{byol_forward.3} parent=1 // pred_check_branch
      %1652 = sbr.rel (0) target = $region89
    $region88: #{byol_forward.3} parent=1 // pred_region
      %s1654 = ssub.s32 16, 16
      %1655 = vsyncadd [#allocation9], %s1654
      %s1657 = sshll.u32 [#allocation8], 4
      %s1658 = int_to_ptr.vmem [resolvable:$true] %s1657
      %1660 = dma.vmem_to_hbm [thread:$0]  %s1658, 16, %s19, [#allocation9]
    $region89: #{byol_forward.3} parent=1 // pred_fallthru
      _
    // Predicated region
    $region90: #{byol_forward.3} parent=1 // pred_check
      _
    $region91: #{byol_forward.3} parent=1 // pred_check_branch
      %1662 = sbr.rel (0) target = $region93
    $region92: #{byol_forward.3} parent=1 // pred_region
      %s1664 = ssub.s32 2048, 2048
      %1665 = vsyncadd [#allocation9], %s1664
      %s1666 = sshll.u32 [#allocation10], 4
      %s1667 = int_to_ptr.vmem [resolvable:$true] %s1666
      %1672 = dma.vmem_to_hbm [thread:$0]  %s1667, 2048, %s20, [#allocation9], 128, 128, 8
    $region93: #{byol_forward.3} parent=1 // pred_fallthru
      _
    // Predicated region
    $region94: #{byol_forward.3} parent=1 // pred_check
      _
    $region95: #{byol_forward.3} parent=1 // pred_check_branch
      %1674 = sbr.rel (0) target = $region97
    $region96: #{byol_forward.3} parent=1 // pred_region
      %s1676 = ssub.s32 16, 16
      %1677 = vsyncadd [#allocation12], %s1676
      %s1679 = sshll.u32 [#allocation11], 4
      %s1680 = int_to_ptr.vmem [resolvable:$true] %s1679
      %1682 = dma.vmem_to_hbm [thread:$0]  %s1680, 16, %s21, [#allocation12]
    $region97: #{byol_forward.3} parent=1 // pred_fallthru
      _
    // Predicated region
    $region98: #{byol_forward.3} parent=1 // pred_check
      _
    $region99: #{byol_forward.3} parent=1 // pred_check_branch
      %1684 = sbr.rel (0) target = $region101
    $region100: #{byol_forward.3} parent=1 // pred_region
      %s1686 = ssub.s32 16, 16
      %1687 = vsyncadd [#allocation12], %s1686
      %s1689 = sshll.u32 [#allocation13], 4
      %s1690 = int_to_ptr.vmem [resolvable:$true] %s1689
      %1692 = dma.vmem_to_hbm [thread:$0]  %s1690, 16, %s22, [#allocation12]
    $region101: #{byol_forward.3} parent=1 // pred_fallthru
      _
    // Predicated region
    $region102: #{byol_forward.3} parent=1 // pred_check
      _
    $region103: #{byol_forward.3} parent=1 // pred_check_branch
      %1694 = sbr.rel (0) target = $region105
    $region104: #{byol_forward.3} parent=1 // pred_region
      %s1696 = ssub.s32 16, 16
      %1697 = vsyncadd [#allocation15], %s1696
      %s1699 = sshll.u32 [#allocation14], 4
      %s1700 = int_to_ptr.vmem [resolvable:$true] %s1699
      %1702 = dma.vmem_to_hbm [thread:$0]  %s1700, 16, %s23, [#allocation15]
    $region105: #{byol_forward.3} parent=1 // pred_fallthru
      _
    // Predicated region
    $region106: #{byol_forward.3} parent=1 // pred_check
      _
    $region107: #{byol_forward.3} parent=1 // pred_check_branch
      %1704 = sbr.rel (0) target = $region109
    $region108: #{byol_forward.3} parent=1 // pred_region
      %s1706 = ssub.s32 2048, 2048
      %1707 = vsyncadd [#allocation15], %s1706
      %s1708 = sshll.u32 [#allocation16], 4
      %s1709 = int_to_ptr.vmem [resolvable:$true] %s1708
      %1714 = dma.vmem_to_hbm [thread:$0]  %s1709, 2048, %s24, [#allocation15], 128, 128, 8
    $region109: #{byol_forward.3} parent=1 // pred_fallthru
      _
    // Predicated region
    $region110: #{byol_forward.3} parent=1 // pred_check
      _
    $region111: #{byol_forward.3} parent=1 // pred_check_branch
      %1716 = sbr.rel (0) target = $region113
    $region112: #{byol_forward.3} parent=1 // pred_region
      %s1718 = ssub.s32 16, 16
      %1719 = vsyncadd [#allocation18], %s1718
      %s1721 = sshll.u32 [#allocation17], 4
      %s1722 = int_to_ptr.vmem [resolvable:$true] %s1721
      %1724 = dma.vmem_to_hbm [thread:$0]  %s1722, 16, %s25, [#allocation18]
    $region113: #{byol_forward.3} parent=1 // pred_fallthru
      _
    // Predicated region
    $region114: #{byol_forward.3} parent=1 // pred_check
      _
    $region115: #{byol_forward.3} parent=1 // pred_check_branch
      %1726 = sbr.rel (0) target = $region117
    $region116: #{byol_forward.3} parent=1 // pred_region
      _
    $region117: #{byol_forward.3} parent=1 // pred_fallthru
      _
    // Predicated region
    $region118: #{byol_forward.3} parent=1 // pred_check
      _
    $region119: #{byol_forward.3} parent=1 // pred_check_branch
      %1728 = sbr.rel (0) target = $region121
    $region120: #{byol_forward.3} parent=1 // pred_region
      %1729 = dma.done [#allocation4], 16384
    $region121: #{byol_forward.3} parent=1 // pred_fallthru
      _
    // Predicated region
    $region122: #{byol_forward.3} parent=1 // pred_check
      _
    $region123: #{byol_forward.3} parent=1 // pred_check_branch
      %1731 = sbr.rel (0) target = $region125
    $region124: #{byol_forward.3} parent=1 // pred_region
      %1732 = dma.done [#allocation9], 16
    $region125: #{byol_forward.3} parent=1 // pred_fallthru
      _
    // Predicated region
    $region126: #{byol_forward.3} parent=1 // pred_check
      _
    $region127: #{byol_forward.3} parent=1 // pred_check_branch
      %1734 = sbr.rel (0) target = $region129
    $region128: #{byol_forward.3} parent=1 // pred_region
      %1735 = dma.done [#allocation9], 2048
    $region129: #{byol_forward.3} parent=1 // pred_fallthru
      _
    // Predicated region
    $region130: #{byol_forward.3} parent=1 // pred_check
      _
    $region131: #{byol_forward.3} parent=1 // pred_check_branch
      %1737 = sbr.rel (0) target = $region133
    $region132: #{byol_forward.3} parent=1 // pred_region
      %1738 = dma.done [#allocation12], 16
    $region133: #{byol_forward.3} parent=1 // pred_fallthru
      _
    // Predicated region
    $region134: #{byol_forward.3} parent=1 // pred_check
      _
    $region135: #{byol_forward.3} parent=1 // pred_check_branch
      %1740 = sbr.rel (0) target = $region137
    $region136: #{byol_forward.3} parent=1 // pred_region
      %1741 = dma.done [#allocation12], 16
    $region137: #{byol_forward.3} parent=1 // pred_fallthru
      _
    // Predicated region
    $region138: #{byol_forward.3} parent=1 // pred_check
      _
    $region139: #{byol_forward.3} parent=1 // pred_check_branch
      %1743 = sbr.rel (0) target = $region141
    $region140: #{byol_forward.3} parent=1 // pred_region
      %1744 = dma.done [#allocation15], 16
    $region141: #{byol_forward.3} parent=1 // pred_fallthru
      _
    // Predicated region
    $region142: #{byol_forward.3} parent=1 // pred_check
      _
    $region143: #{byol_forward.3} parent=1 // pred_check_branch
      %1746 = sbr.rel (0) target = $region145
    $region144: #{byol_forward.3} parent=1 // pred_region
      %1747 = dma.done [#allocation15], 2048
    $region145: #{byol_forward.3} parent=1 // pred_fallthru
      _
    // Predicated region
    $region146: #{byol_forward.3} parent=1 // pred_check
      _
    $region147: #{byol_forward.3} parent=1 // pred_check_branch
      %1749 = sbr.rel (0) target = $region149
    $region148: #{byol_forward.3} parent=1 // pred_region
      %1750 = dma.done [#allocation18], 16
    $region149: #{byol_forward.3} parent=1 // pred_fallthru
      _
    %1751 = vsyncpa [#allocation3], 1
    %1752 = vsyncpa [#allocation6], 1
    %1753 = vsyncpa [#allocation4], 1
    %1754 = vsyncpa [#allocation9], 1
    %1755 = vsyncpa [#allocation12], 1
    %1756 = vsyncpa [#allocation15], 1
    %1757 = vsyncpa [#allocation18], 1

</llo_original>
